<compile_context>
chip_gen: v7x
topology: tpu7x:2x2x1
jax: 0.10.0
libtpu: 0.0.40
codegen_flags: <defaults>
</compile_context>

<pallas_src>
import functools
import jax
import jax.numpy as jnp
from jax.experimental import pallas as pl
from jax.experimental.pallas import tpu as pltpu


# ----------------------------- Pallas kernel ------------------------------- #

def _vspec(shape):
    """Full-array VMEM block (single grid step)."""
    n = len(shape)
    return pl.BlockSpec(shape, lambda *_: (0,) * n)


def _layer_norm(h, g, b, eps):
    mu = jnp.mean(h, axis=-1, keepdims=True)
    var = jnp.mean(jnp.square(h - mu), axis=-1, keepdims=True)
    return (h - mu) * jax.lax.rsqrt(var + eps) * g + b


def _fused_bert_kernel(x_ref, mask_ref, wqkv_ref, bqkv_ref, wo_ref, bo_ref,
                       g0_ref, be0_ref, g1_ref, be1_ref,
                       wi_ref, bi_ref, wo2_ref, bo2_ref,
                       g2_ref, be2_ref, wp_ref, bp_ref, wh_ref, bh_ref,
                       out_ref, ctx_ref, *, B, S, nH, dh, eps):
    H = nH * dh
    scale = 1.0 / float(dh) ** 0.5

    # --- embedding LayerNorm (no fake zero residual) ---
    h0 = _layer_norm(x_ref[...], g0_ref[...], be0_ref[...], eps)

    # --- fused Q/K/V projection: one (BS,H)@(H,3H) MXU pass ---
    qkv = jnp.dot(h0, wqkv_ref[...], preferred_element_type=jnp.float32) + bqkv_ref[...]
    q = qkv[:, 0:H]
    k = qkv[:, H:2 * H]
    v = qkv[:, 2 * H:3 * H]

    # additive attention-mask bias computed in-kernel
    neg = (1.0 - mask_ref[...]) * (-10000.0)                  # (B, S)

    # --- self-attention: statically unrolled over (batch, head), all in VMEM ---
    for b in range(B):
        bias_b = neg[b:b + 1, :]                              # (1, S)
        r0 = b * S
        for h in range(nH):
            c0 = h * dh
            qh = q[r0:r0 + S, c0:c0 + dh]                     # (S, dh)
            kh = k[r0:r0 + S, c0:c0 + dh]
            vh = v[r0:r0 + S, c0:c0 + dh]
            s = jax.lax.dot_general(qh, kh, (((1,), (1,)), ((), ())),
                                    preferred_element_type=jnp.float32) * scale
            s = s + bias_b
            s = s - jnp.max(s, axis=-1, keepdims=True)
            e = jnp.exp(s)
            p = e * pl.reciprocal(jnp.sum(e, axis=-1, keepdims=True), approx=True)
            ctx_ref[r0:r0 + S, c0:c0 + dh] = jnp.dot(
                p, vh, preferred_element_type=jnp.float32)

    ctx = ctx_ref[...]                                        # (BS, H)

    # --- attention output projection + add & LayerNorm ---
    attn_out = jnp.dot(ctx, wo_ref[...], preferred_element_type=jnp.float32) + bo_ref[...]
    h1 = _layer_norm(attn_out + h0, g1_ref[...], be1_ref[...], eps)

    # --- feed-forward (exact erf GELU, matching HF BERT) + add & LayerNorm ---
    inter = jnp.dot(h1, wi_ref[...], preferred_element_type=jnp.float32) + bi_ref[...]
    inter = 0.5 * inter * (1.0 + jax.lax.erf(inter * 0.7071067811865476))
    ffn = jnp.dot(inter, wo2_ref[...], preferred_element_type=jnp.float32) + bo2_ref[...]
    h2 = _layer_norm(ffn + h1, g2_ref[...], be2_ref[...], eps)

    # --- pooler (tanh) on all rows (CLS rows selected in the tiny XLA epilogue)
    pooled = jnp.tanh(jnp.dot(h2, wp_ref[...],
                              preferred_element_type=jnp.float32) + bp_ref[...])

    # --- fused, lane-dense 5-head classifier matmul: (BS,H)@(H,128) ---
    out_ref[...] = (jnp.dot(pooled, wh_ref[...],
                            preferred_element_type=jnp.float32)
                    + bh_ref[...]).astype(out_ref.dtype)


# --------------------------- Model (forward pass) --------------------------- #

class Config:
    vocab_size = 128
    max_position = 64
    type_vocab_size = 2
    hidden_size = 96          # divisible by num_attention_heads = 6
    num_attention_heads = 6
    intermediate_size = 384   # 4 * hidden
    layer_norm_eps = 1e-12


def init_params(cfg, key):
    """Deterministic synthetic init (BERT-style: normal(0, 0.02), zero bias)."""
    ks = iter(jax.random.split(key, 64))
    n = lambda shape: (0.02 * jax.random.normal(next(ks), shape)).astype(jnp.float32)
    z = lambda shape: jnp.zeros(shape, jnp.float32)
    o = lambda shape: jnp.ones(shape, jnp.float32)
    H, I = cfg.hidden_size, cfg.intermediate_size
    return {
        "word_emb": n((cfg.vocab_size, H)),
        "pos_emb": n((cfg.max_position, H)),
        "type_emb": n((cfg.type_vocab_size, H)),
        "emb_ln_g": o((H,)), "emb_ln_b": z((H,)),
        "wq": n((H, H)), "bq": z((H,)),
        "wk": n((H, H)), "bk": z((H,)),
        "wv": n((H, H)), "bv": z((H,)),
        "wo": n((H, H)), "bo": z((H,)),
        "attn_ln_g": o((H,)), "attn_ln_b": z((H,)),
        "wi": n((H, I)), "bi": z((I,)),
        "wo2": n((I, H)), "bo2": z((H,)),
        "ffn_ln_g": o((H,)), "ffn_ln_b": z((H,)),
        "wp": n((H, H)), "bp": z((H,)),
        "w_priv": n((H, 4)), "b_priv": z((4,)),
        "w_av": n((H, 2)), "b_av": z((2,)),
        "w_i1": n((H, 5)), "b_i1": z((5,)),
        "w_i2": n((H, 7)), "b_i2": z((7,)),
        "w_i3": n((H, 4)), "b_i3": z((4,)),
    }


HEAD_NAMES = ("privilege_required", "attack_vector", "impact_1", "impact_2", "impact_3")
HEAD_WIDTHS = (4, 2, 5, 7, 4)


def vuln_classifier_light_forward(params, input_ids, attention_mask, cfg):
    B, S = input_ids.shape
    H, nH = cfg.hidden_size, cfg.num_attention_heads
    dh = H // nH
    BS = B * S
    NPAD = 128  # lane-dense padded width for the fused classification heads

    # --- embedding lookup (gather stays in XLA; LN + everything else in-kernel)
    # TODO(synk): embedding gather has no clean tiny-scale Pallas equivalent; kept in XLA.
    x_emb = (jnp.take(params["word_emb"], input_ids, axis=0)
             + params["pos_emb"][:S][None, :, :]
             + params["type_emb"][0][None, None, :]).reshape(BS, H).astype(jnp.float32)

    mask_f = attention_mask.astype(jnp.float32)                                      # (B, S)

    # --- fuse QKV and the 5 classification heads into single lane-dense matmuls
    w_qkv = jnp.concatenate([params["wq"], params["wk"], params["wv"]], axis=1)      # (H, 3H)
    b_qkv = jnp.concatenate([params["bq"], params["bk"], params["bv"]])[None, :]     # (1, 3H)

    w_heads = jnp.concatenate([params["w_priv"], params["w_av"], params["w_i1"],
                               params["w_i2"], params["w_i3"]], axis=1)              # (H, 22)
    b_heads = jnp.concatenate([params["b_priv"], params["b_av"], params["b_i1"],
                               params["b_i2"], params["b_i3"]])                      # (22,)
    tot = sum(HEAD_WIDTHS)
    w_heads = jnp.pad(w_heads, ((0, 0), (0, NPAD - tot)))                            # (H, 128)
    b_heads = jnp.pad(b_heads, (0, NPAD - tot))[None, :]                             # (1, 128)

    args = (
        x_emb, mask_f,
        w_qkv, b_qkv,
        params["wo"], params["bo"][None, :],
        params["emb_ln_g"][None, :], params["emb_ln_b"][None, :],
        params["attn_ln_g"][None, :], params["attn_ln_b"][None, :],
        params["wi"], params["bi"][None, :],
        params["wo2"], params["bo2"][None, :],
        params["ffn_ln_g"][None, :], params["ffn_ln_b"][None, :],
        params["wp"], params["bp"][None, :],
        w_heads, b_heads,
    )

    logits_all = pl.pallas_call(
        functools.partial(_fused_bert_kernel, B=B, S=S, nH=nH, dh=dh,
                          eps=cfg.layer_norm_eps),
        out_shape=jax.ShapeDtypeStruct((BS, NPAD), jnp.float32),
        in_specs=[_vspec(tuple(a.shape)) for a in args],
        out_specs=_vspec((BS, NPAD)),
        scratch_shapes=[pltpu.VMEM((BS, H), jnp.float32)],
    )(*args)

    # --- tiny XLA epilogue: select CLS rows and split the fused head slab ---
    logits_cls = logits_all.reshape(B, S, NPAD)[:, 0, :]                             # (B, 128)
    out, off = {}, 0
    for name, w in zip(HEAD_NAMES, HEAD_WIDTHS):
        out[name] = logits_cls[:, off:off + w]
        off += w
    return out


# ---------------------------------- main ----------------------------------- #

if __name__ == "__main__":
    cfg = Config()
    B, S = 2, 8

    key = jax.random.PRNGKey(0)
    k_param, k_ids = jax.random.split(key)
    params = init_params(cfg, k_param)

    input_ids = jax.random.randint(k_ids, (B, S), 0, cfg.vocab_size, dtype=jnp.int32)
    attention_mask = jnp.array(
        [[1, 1, 1, 1, 1, 1, 1, 1],
         [1, 1, 1, 1, 1, 0, 0, 0]], dtype=jnp.int32)

    fwd = jax.jit(functools.partial(vuln_classifier_light_forward, cfg=cfg))
    out = fwd(params, input_ids, attention_mask)
    out = jax.block_until_ready(out)

    for name, width in zip(HEAD_NAMES, HEAD_WIDTHS):
        assert out[name].shape == (B, width), (name, out[name].shape)
        assert bool(jnp.all(jnp.isfinite(out[name])))

    print("KERNEL_OK")
</pallas_src>

<mosaic_0001>
module attributes {stable_mosaic.version = 11 : i64} {
  func.func @_fused_bert_kernel(%arg0: memref<16x96xf32, #tpu.memory_space<vmem>>, %arg1: memref<2x8xf32, #tpu.memory_space<vmem>>, %arg2: memref<96x288xf32, #tpu.memory_space<vmem>>, %arg3: memref<1x288xf32, #tpu.memory_space<vmem>>, %arg4: memref<96x96xf32, #tpu.memory_space<vmem>>, %arg5: memref<1x96xf32, #tpu.memory_space<vmem>>, %arg6: memref<1x96xf32, #tpu.memory_space<vmem>>, %arg7: memref<1x96xf32, #tpu.memory_space<vmem>>, %arg8: memref<1x96xf32, #tpu.memory_space<vmem>>, %arg9: memref<1x96xf32, #tpu.memory_space<vmem>>, %arg10: memref<96x384xf32, #tpu.memory_space<vmem>>, %arg11: memref<1x384xf32, #tpu.memory_space<vmem>>, %arg12: memref<384x96xf32, #tpu.memory_space<vmem>>, %arg13: memref<1x96xf32, #tpu.memory_space<vmem>>, %arg14: memref<1x96xf32, #tpu.memory_space<vmem>>, %arg15: memref<1x96xf32, #tpu.memory_space<vmem>>, %arg16: memref<96x96xf32, #tpu.memory_space<vmem>>, %arg17: memref<1x96xf32, #tpu.memory_space<vmem>>, %arg18: memref<96x128xf32, #tpu.memory_space<vmem>>, %arg19: memref<1x128xf32, #tpu.memory_space<vmem>>, %arg20: memref<16x128xf32, #tpu.memory_space<vmem>>, %arg21: memref<16x96xf32, #tpu.memory_space<vmem>>) attributes {dimension_semantics = [], scalar_prefetch = 0 : i64, scratch_operands = 1 : i64, tpu.core_type = #tpu.core_type<tc>} {
    %c0 = arith.constant 0 : index
    %c0_0 = arith.constant 0 : index
    %0 = vector.load %arg0[%c0, %c0_0] : memref<16x96xf32, #tpu.memory_space<vmem>>, vector<16x96xf32>
    %c0_1 = arith.constant 0 : index
    %c0_2 = arith.constant 0 : index
    %1 = vector.load %arg6[%c0_1, %c0_2] : memref<1x96xf32, #tpu.memory_space<vmem>>, vector<1x96xf32>
    %c0_3 = arith.constant 0 : index
    %c0_4 = arith.constant 0 : index
    %2 = vector.load %arg7[%c0_3, %c0_4] : memref<1x96xf32, #tpu.memory_space<vmem>>, vector<1x96xf32>
    %cst = arith.constant dense<0.000000e+00> : vector<16xf32>
    %3 = vector.multi_reduction <add>, %0, %cst [1] : vector<16x96xf32> to vector<16xf32>
    %4 = vector.shape_cast %3 : vector<16xf32> to vector<16x1xf32>
    %cst_5 = arith.constant 9.600000e+01 : f32
    %5 = vector.broadcast %cst_5 : f32 to vector<16x1xf32>
    %6 = arith.divf %4, %5 : vector<16x1xf32>
    %7 = vector.broadcast %6 : vector<16x1xf32> to vector<16x96xf32>
    %8 = arith.subf %0, %7 : vector<16x96xf32>
    %9 = arith.mulf %8, %8 : vector<16x96xf32>
    %cst_6 = arith.constant dense<0.000000e+00> : vector<16xf32>
    %10 = vector.multi_reduction <add>, %9, %cst_6 [1] : vector<16x96xf32> to vector<16xf32>
    %11 = vector.shape_cast %10 : vector<16xf32> to vector<16x1xf32>
    %cst_7 = arith.constant 9.600000e+01 : f32
    %12 = vector.broadcast %cst_7 : f32 to vector<16x1xf32>
    %13 = arith.divf %11, %12 : vector<16x1xf32>
    %14 = vector.broadcast %6 : vector<16x1xf32> to vector<16x96xf32>
    %15 = arith.subf %0, %14 : vector<16x96xf32>
    %cst_8 = arith.constant 9.99999996E-13 : f32
    %16 = vector.broadcast %cst_8 : f32 to vector<16x1xf32>
    %17 = arith.addf %13, %16 : vector<16x1xf32>
    %18 = math.rsqrt %17 : vector<16x1xf32>
    %19 = vector.broadcast %18 : vector<16x1xf32> to vector<16x96xf32>
    %20 = arith.mulf %15, %19 : vector<16x96xf32>
    %21 = vector.broadcast %1 : vector<1x96xf32> to vector<16x96xf32>
    %22 = arith.mulf %20, %21 : vector<16x96xf32>
    %23 = vector.broadcast %2 : vector<1x96xf32> to vector<16x96xf32>
    %24 = arith.addf %22, %23 : vector<16x96xf32>
    %c0_9 = arith.constant 0 : index
    %c0_10 = arith.constant 0 : index
    %25 = vector.load %arg2[%c0_9, %c0_10] : memref<96x288xf32, #tpu.memory_space<vmem>>, vector<96x288xf32>
    %cst_11 = arith.constant dense<0.000000e+00> : vector<16x288xf32>
    %26 = tpu.matmul %24, %25, %cst_11 {dimension_numbers = #tpu.dot_dimension_numbers<[1], [0], [0], [1], [0, 0, 1, 1], [], []>} : vector<16x96xf32>, vector<96x288xf32>, vector<16x288xf32> -> vector<16x288xf32>
    %c0_12 = arith.constant 0 : index
    %c0_13 = arith.constant 0 : index
    %27 = vector.load %arg3[%c0_12, %c0_13] : memref<1x288xf32, #tpu.memory_space<vmem>>, vector<1x288xf32>
    %28 = vector.broadcast %27 : vector<1x288xf32> to vector<16x288xf32>
    %29 = arith.addf %26, %28 : vector<16x288xf32>
    %30 = vector.extract_strided_slice %29 {offsets = [0, 0], sizes = [16, 96], strides = [1, 1]} : vector<16x288xf32> to vector<16x96xf32>
    %31 = vector.extract_strided_slice %29 {offsets = [0, 96], sizes = [16, 96], strides = [1, 1]} : vector<16x288xf32> to vector<16x96xf32>
    %32 = vector.extract_strided_slice %29 {offsets = [0, 192], sizes = [16, 96], strides = [1, 1]} : vector<16x288xf32> to vector<16x96xf32>
    %c0_14 = arith.constant 0 : index
    %c0_15 = arith.constant 0 : index
    %33 = vector.load %arg1[%c0_14, %c0_15] : memref<2x8xf32, #tpu.memory_space<vmem>>, vector<2x8xf32>
    %cst_16 = arith.constant 1.000000e+00 : f32
    %34 = vector.broadcast %cst_16 : f32 to vector<2x8xf32>
    %35 = arith.subf %34, %33 : vector<2x8xf32>
    %cst_17 = arith.constant -1.000000e+04 : f32
    %36 = vector.broadcast %cst_17 : f32 to vector<2x8xf32>
    %37 = arith.mulf %35, %36 : vector<2x8xf32>
    %38 = vector.extract_strided_slice %37 {offsets = [0, 0], sizes = [1, 8], strides = [1, 1]} : vector<2x8xf32> to vector<1x8xf32>
    %39 = vector.extract_strided_slice %30 {offsets = [0, 0], sizes = [8, 16], strides = [1, 1]} : vector<16x96xf32> to vector<8x16xf32>
    %40 = vector.extract_strided_slice %31 {offsets = [0, 0], sizes = [8, 16], strides = [1, 1]} : vector<16x96xf32> to vector<8x16xf32>
    %41 = vector.extract_strided_slice %32 {offsets = [0, 0], sizes = [8, 16], strides = [1, 1]} : vector<16x96xf32> to vector<8x16xf32>
    %cst_18 = arith.constant dense<0.000000e+00> : vector<8x8xf32>
    %42 = tpu.matmul %39, %40, %cst_18 {dimension_numbers = #tpu.dot_dimension_numbers<[1], [1], [0], [0], [0, 0, 1, 0], [], []>} : vector<8x16xf32>, vector<8x16xf32>, vector<8x8xf32> -> vector<8x8xf32>
    %cst_19 = arith.constant 2.500000e-01 : f32
    %43 = vector.broadcast %cst_19 : f32 to vector<8x8xf32>
    %44 = arith.mulf %42, %43 : vector<8x8xf32>
    %45 = vector.broadcast %38 : vector<1x8xf32> to vector<8x8xf32>
    %46 = arith.addf %44, %45 : vector<8x8xf32>
    %cst_20 = arith.constant dense<0xFF800000> : vector<8xf32>
    %47 = vector.multi_reduction <maximumf>, %46, %cst_20 [1] : vector<8x8xf32> to vector<8xf32>
    %48 = vector.shape_cast %47 : vector<8xf32> to vector<8x1xf32>
    %49 = vector.broadcast %48 : vector<8x1xf32> to vector<8x8xf32>
    %50 = arith.subf %46, %49 : vector<8x8xf32>
    %51 = math.exp %50 : vector<8x8xf32>
    %cst_21 = arith.constant dense<0.000000e+00> : vector<8xf32>
    %52 = vector.multi_reduction <add>, %51, %cst_21 [1] : vector<8x8xf32> to vector<8xf32>
    %53 = vector.shape_cast %52 : vector<8xf32> to vector<8x1xf32>
    %54 = tpu.reciprocal %53 {approx = true} : vector<8x1xf32> -> vector<8x1xf32>
    %55 = vector.broadcast %54 : vector<8x1xf32> to vector<8x8xf32>
    %56 = arith.mulf %51, %55 : vector<8x8xf32>
    %cst_22 = arith.constant dense<0.000000e+00> : vector<8x16xf32>
    %57 = tpu.matmul %56, %41, %cst_22 {dimension_numbers = #tpu.dot_dimension_numbers<[1], [0], [0], [1], [0, 0, 1, 1], [], []>} : vector<8x8xf32>, vector<8x16xf32>, vector<8x16xf32> -> vector<8x16xf32>
    %c0_23 = arith.constant 0 : index
    %c0_24 = arith.constant 0 : index
    %58 = vector.load %arg21[%c0_23, %c0_24] : memref<16x96xf32, #tpu.memory_space<vmem>>, vector<8x16xf32>
    tpu.vector_store %arg21[%c0_23, %c0_24], %57 {strides = array<i32>} : memref<16x96xf32, #tpu.memory_space<vmem>>, vector<8x16xf32>,
    %59 = vector.extract_strided_slice %30 {offsets = [0, 16], sizes = [8, 16], strides = [1, 1]} : vector<16x96xf32> to vector<8x16xf32>
    %60 = vector.extract_strided_slice %31 {offsets = [0, 16], sizes = [8, 16], strides = [1, 1]} : vector<16x96xf32> to vector<8x16xf32>
    %61 = vector.extract_strided_slice %32 {offsets = [0, 16], sizes = [8, 16], strides = [1, 1]} : vector<16x96xf32> to vector<8x16xf32>
    %cst_25 = arith.constant dense<0.000000e+00> : vector<8x8xf32>
    %62 = tpu.matmul %59, %60, %cst_25 {dimension_numbers = #tpu.dot_dimension_numbers<[1], [1], [0], [0], [0, 0, 1, 0], [], []>} : vector<8x16xf32>, vector<8x16xf32>, vector<8x8xf32> -> vector<8x8xf32>
    %cst_26 = arith.constant 2.500000e-01 : f32
    %63 = vector.broadcast %cst_26 : f32 to vector<8x8xf32>
    %64 = arith.mulf %62, %63 : vector<8x8xf32>
    %65 = vector.broadcast %38 : vector<1x8xf32> to vector<8x8xf32>
    %66 = arith.addf %64, %65 : vector<8x8xf32>
    %cst_27 = arith.constant dense<0xFF800000> : vector<8xf32>
    %67 = vector.multi_reduction <maximumf>, %66, %cst_27 [1] : vector<8x8xf32> to vector<8xf32>
    %68 = vector.shape_cast %67 : vector<8xf32> to vector<8x1xf32>
    %69 = vector.broadcast %68 : vector<8x1xf32> to vector<8x8xf32>
    %70 = arith.subf %66, %69 : vector<8x8xf32>
    %71 = math.exp %70 : vector<8x8xf32>
    %cst_28 = arith.constant dense<0.000000e+00> : vector<8xf32>
    %72 = vector.multi_reduction <add>, %71, %cst_28 [1] : vector<8x8xf32> to vector<8xf32>
    %73 = vector.shape_cast %72 : vector<8xf32> to vector<8x1xf32>
    %74 = tpu.reciprocal %73 {approx = true} : vector<8x1xf32> -> vector<8x1xf32>
    %75 = vector.broadcast %74 : vector<8x1xf32> to vector<8x8xf32>
    %76 = arith.mulf %71, %75 : vector<8x8xf32>
    %cst_29 = arith.constant dense<0.000000e+00> : vector<8x16xf32>
    %77 = tpu.matmul %76, %61, %cst_29 {dimension_numbers = #tpu.dot_dimension_numbers<[1], [0], [0], [1], [0, 0, 1, 1], [], []>} : vector<8x8xf32>, vector<8x16xf32>, vector<8x16xf32> -> vector<8x16xf32>
    %c0_30 = arith.constant 0 : index
    %c16 = arith.constant 16 : index
    %78 = vector.load %arg21[%c0_30, %c16] : memref<16x96xf32, #tpu.memory_space<vmem>>, vector<8x16xf32>
    tpu.vector_store %arg21[%c0_30, %c16], %77 {strides = array<i32>} : memref<16x96xf32, #tpu.memory_space<vmem>>, vector<8x16xf32>,
    %79 = vector.extract_strided_slice %30 {offsets = [0, 32], sizes = [8, 16], strides = [1, 1]} : vector<16x96xf32> to vector<8x16xf32>
    %80 = vector.extract_strided_slice %31 {offsets = [0, 32], sizes = [8, 16], strides = [1, 1]} : vector<16x96xf32> to vector<8x16xf32>
    %81 = vector.extract_strided_slice %32 {offsets = [0, 32], sizes = [8, 16], strides = [1, 1]} : vector<16x96xf32> to vector<8x16xf32>
    %cst_31 = arith.constant dense<0.000000e+00> : vector<8x8xf32>
    %82 = tpu.matmul %79, %80, %cst_31 {dimension_numbers = #tpu.dot_dimension_numbers<[1], [1], [0], [0], [0, 0, 1, 0], [], []>} : vector<8x16xf32>, vector<8x16xf32>, vector<8x8xf32> -> vector<8x8xf32>
    %cst_32 = arith.constant 2.500000e-01 : f32
    %83 = vector.broadcast %cst_32 : f32 to vector<8x8xf32>
    %84 = arith.mulf %82, %83 : vector<8x8xf32>
    %85 = vector.broadcast %38 : vector<1x8xf32> to vector<8x8xf32>
    %86 = arith.addf %84, %85 : vector<8x8xf32>
    %cst_33 = arith.constant dense<0xFF800000> : vector<8xf32>
    %87 = vector.multi_reduction <maximumf>, %86, %cst_33 [1] : vector<8x8xf32> to vector<8xf32>
    %88 = vector.shape_cast %87 : vector<8xf32> to vector<8x1xf32>
    %89 = vector.broadcast %88 : vector<8x1xf32> to vector<8x8xf32>
    %90 = arith.subf %86, %89 : vector<8x8xf32>
    %91 = math.exp %90 : vector<8x8xf32>
    %cst_34 = arith.constant dense<0.000000e+00> : vector<8xf32>
    %92 = vector.multi_reduction <add>, %91, %cst_34 [1] : vector<8x8xf32> to vector<8xf32>
    %93 = vector.shape_cast %92 : vector<8xf32> to vector<8x1xf32>
    %94 = tpu.reciprocal %93 {approx = true} : vector<8x1xf32> -> vector<8x1xf32>
    %95 = vector.broadcast %94 : vector<8x1xf32> to vector<8x8xf32>
    %96 = arith.mulf %91, %95 : vector<8x8xf32>
    %cst_35 = arith.constant dense<0.000000e+00> : vector<8x16xf32>
    %97 = tpu.matmul %96, %81, %cst_35 {dimension_numbers = #tpu.dot_dimension_numbers<[1], [0], [0], [1], [0, 0, 1, 1], [], []>} : vector<8x8xf32>, vector<8x16xf32>, vector<8x16xf32> -> vector<8x16xf32>
    %c0_36 = arith.constant 0 : index
    %c32 = arith.constant 32 : index
    %98 = vector.load %arg21[%c0_36, %c32] : memref<16x96xf32, #tpu.memory_space<vmem>>, vector<8x16xf32>
    tpu.vector_store %arg21[%c0_36, %c32], %97 {strides = array<i32>} : memref<16x96xf32, #tpu.memory_space<vmem>>, vector<8x16xf32>,
    %99 = vector.extract_strided_slice %30 {offsets = [0, 48], sizes = [8, 16], strides = [1, 1]} : vector<16x96xf32> to vector<8x16xf32>
    %100 = vector.extract_strided_slice %31 {offsets = [0, 48], sizes = [8, 16], strides = [1, 1]} : vector<16x96xf32> to vector<8x16xf32>
    %101 = vector.extract_strided_slice %32 {offsets = [0, 48], sizes = [8, 16], strides = [1, 1]} : vector<16x96xf32> to vector<8x16xf32>
    %cst_37 = arith.constant dense<0.000000e+00> : vector<8x8xf32>
    %102 = tpu.matmul %99, %100, %cst_37 {dimension_numbers = #tpu.dot_dimension_numbers<[1], [1], [0], [0], [0, 0, 1, 0], [], []>} : vector<8x16xf32>, vector<8x16xf32>, vector<8x8xf32> -> vector<8x8xf32>
    %cst_38 = arith.constant 2.500000e-01 : f32
    %103 = vector.broadcast %cst_38 : f32 to vector<8x8xf32>
    %104 = arith.mulf %102, %103 : vector<8x8xf32>
    %105 = vector.broadcast %38 : vector<1x8xf32> to vector<8x8xf32>
    %106 = arith.addf %104, %105 : vector<8x8xf32>
    %cst_39 = arith.constant dense<0xFF800000> : vector<8xf32>
    %107 = vector.multi_reduction <maximumf>, %106, %cst_39 [1] : vector<8x8xf32> to vector<8xf32>
    %108 = vector.shape_cast %107 : vector<8xf32> to vector<8x1xf32>
    %109 = vector.broadcast %108 : vector<8x1xf32> to vector<8x8xf32>
    %110 = arith.subf %106, %109 : vector<8x8xf32>
    %111 = math.exp %110 : vector<8x8xf32>
    %cst_40 = arith.constant dense<0.000000e+00> : vector<8xf32>
    %112 = vector.multi_reduction <add>, %111, %cst_40 [1] : vector<8x8xf32> to vector<8xf32>
    %113 = vector.shape_cast %112 : vector<8xf32> to vector<8x1xf32>
    %114 = tpu.reciprocal %113 {approx = true} : vector<8x1xf32> -> vector<8x1xf32>
    %115 = vector.broadcast %114 : vector<8x1xf32> to vector<8x8xf32>
    %116 = arith.mulf %111, %115 : vector<8x8xf32>
    %cst_41 = arith.constant dense<0.000000e+00> : vector<8x16xf32>
    %117 = tpu.matmul %116, %101, %cst_41 {dimension_numbers = #tpu.dot_dimension_numbers<[1], [0], [0], [1], [0, 0, 1, 1], [], []>} : vector<8x8xf32>, vector<8x16xf32>, vector<8x16xf32> -> vector<8x16xf32>
    %c0_42 = arith.constant 0 : index
    %c48 = arith.constant 48 : index
    %118 = vector.load %arg21[%c0_42, %c48] : memref<16x96xf32, #tpu.memory_space<vmem>>, vector<8x16xf32>
    tpu.vector_store %arg21[%c0_42, %c48], %117 {strides = array<i32>} : memref<16x96xf32, #tpu.memory_space<vmem>>, vector<8x16xf32>,
    %119 = vector.extract_strided_slice %30 {offsets = [0, 64], sizes = [8, 16], strides = [1, 1]} : vector<16x96xf32> to vector<8x16xf32>
    %120 = vector.extract_strided_slice %31 {offsets = [0, 64], sizes = [8, 16], strides = [1, 1]} : vector<16x96xf32> to vector<8x16xf32>
    %121 = vector.extract_strided_slice %32 {offsets = [0, 64], sizes = [8, 16], strides = [1, 1]} : vector<16x96xf32> to vector<8x16xf32>
    %cst_43 = arith.constant dense<0.000000e+00> : vector<8x8xf32>
    %122 = tpu.matmul %119, %120, %cst_43 {dimension_numbers = #tpu.dot_dimension_numbers<[1], [1], [0], [0], [0, 0, 1, 0], [], []>} : vector<8x16xf32>, vector<8x16xf32>, vector<8x8xf32> -> vector<8x8xf32>
    %cst_44 = arith.constant 2.500000e-01 : f32
    %123 = vector.broadcast %cst_44 : f32 to vector<8x8xf32>
    %124 = arith.mulf %122, %123 : vector<8x8xf32>
    %125 = vector.broadcast %38 : vector<1x8xf32> to vector<8x8xf32>
    %126 = arith.addf %124, %125 : vector<8x8xf32>
    %cst_45 = arith.constant dense<0xFF800000> : vector<8xf32>
    %127 = vector.multi_reduction <maximumf>, %126, %cst_45 [1] : vector<8x8xf32> to vector<8xf32>
    %128 = vector.shape_cast %127 : vector<8xf32> to vector<8x1xf32>
    %129 = vector.broadcast %128 : vector<8x1xf32> to vector<8x8xf32>
    %130 = arith.subf %126, %129 : vector<8x8xf32>
    %131 = math.exp %130 : vector<8x8xf32>
    %cst_46 = arith.constant dense<0.000000e+00> : vector<8xf32>
    %132 = vector.multi_reduction <add>, %131, %cst_46 [1] : vector<8x8xf32> to vector<8xf32>
    %133 = vector.shape_cast %132 : vector<8xf32> to vector<8x1xf32>
    %134 = tpu.reciprocal %133 {approx = true} : vector<8x1xf32> -> vector<8x1xf32>
    %135 = vector.broadcast %134 : vector<8x1xf32> to vector<8x8xf32>
    %136 = arith.mulf %131, %135 : vector<8x8xf32>
    %cst_47 = arith.constant dense<0.000000e+00> : vector<8x16xf32>
    %137 = tpu.matmul %136, %121, %cst_47 {dimension_numbers = #tpu.dot_dimension_numbers<[1], [0], [0], [1], [0, 0, 1, 1], [], []>} : vector<8x8xf32>, vector<8x16xf32>, vector<8x16xf32> -> vector<8x16xf32>
    %c0_48 = arith.constant 0 : index
    %c64 = arith.constant 64 : index
    %138 = vector.load %arg21[%c0_48, %c64] : memref<16x96xf32, #tpu.memory_space<vmem>>, vector<8x16xf32>
    tpu.vector_store %arg21[%c0_48, %c64], %137 {strides = array<i32>} : memref<16x96xf32, #tpu.memory_space<vmem>>, vector<8x16xf32>,
    %139 = vector.extract_strided_slice %30 {offsets = [0, 80], sizes = [8, 16], strides = [1, 1]} : vector<16x96xf32> to vector<8x16xf32>
    %140 = vector.extract_strided_slice %31 {offsets = [0, 80], sizes = [8, 16], strides = [1, 1]} : vector<16x96xf32> to vector<8x16xf32>
    %141 = vector.extract_strided_slice %32 {offsets = [0, 80], sizes = [8, 16], strides = [1, 1]} : vector<16x96xf32> to vector<8x16xf32>
    %cst_49 = arith.constant dense<0.000000e+00> : vector<8x8xf32>
    %142 = tpu.matmul %139, %140, %cst_49 {dimension_numbers = #tpu.dot_dimension_numbers<[1], [1], [0], [0], [0, 0, 1, 0], [], []>} : vector<8x16xf32>, vector<8x16xf32>, vector<8x8xf32> -> vector<8x8xf32>
    %cst_50 = arith.constant 2.500000e-01 : f32
    %143 = vector.broadcast %cst_50 : f32 to vector<8x8xf32>
    %144 = arith.mulf %142, %143 : vector<8x8xf32>
    %145 = vector.broadcast %38 : vector<1x8xf32> to vector<8x8xf32>
    %146 = arith.addf %144, %145 : vector<8x8xf32>
    %cst_51 = arith.constant dense<0xFF800000> : vector<8xf32>
    %147 = vector.multi_reduction <maximumf>, %146, %cst_51 [1] : vector<8x8xf32> to vector<8xf32>
    %148 = vector.shape_cast %147 : vector<8xf32> to vector<8x1xf32>
    %149 = vector.broadcast %148 : vector<8x1xf32> to vector<8x8xf32>
    %150 = arith.subf %146, %149 : vector<8x8xf32>
    %151 = math.exp %150 : vector<8x8xf32>
    %cst_52 = arith.constant dense<0.000000e+00> : vector<8xf32>
    %152 = vector.multi_reduction <add>, %151, %cst_52 [1] : vector<8x8xf32> to vector<8xf32>
    %153 = vector.shape_cast %152 : vector<8xf32> to vector<8x1xf32>
    %154 = tpu.reciprocal %153 {approx = true} : vector<8x1xf32> -> vector<8x1xf32>
    %155 = vector.broadcast %154 : vector<8x1xf32> to vector<8x8xf32>
    %156 = arith.mulf %151, %155 : vector<8x8xf32>
    %cst_53 = arith.constant dense<0.000000e+00> : vector<8x16xf32>
    %157 = tpu.matmul %156, %141, %cst_53 {dimension_numbers = #tpu.dot_dimension_numbers<[1], [0], [0], [1], [0, 0, 1, 1], [], []>} : vector<8x8xf32>, vector<8x16xf32>, vector<8x16xf32> -> vector<8x16xf32>
    %c0_54 = arith.constant 0 : index
    %c80 = arith.constant 80 : index
    %158 = vector.load %arg21[%c0_54, %c80] : memref<16x96xf32, #tpu.memory_space<vmem>>, vector<8x16xf32>
    tpu.vector_store %arg21[%c0_54, %c80], %157 {strides = array<i32>} : memref<16x96xf32, #tpu.memory_space<vmem>>, vector<8x16xf32>,
    %159 = vector.extract_strided_slice %37 {offsets = [1, 0], sizes = [1, 8], strides = [1, 1]} : vector<2x8xf32> to vector<1x8xf32>
    %160 = vector.extract_strided_slice %30 {offsets = [8, 0], sizes = [8, 16], strides = [1, 1]} : vector<16x96xf32> to vector<8x16xf32>
    %161 = vector.extract_strided_slice %31 {offsets = [8, 0], sizes = [8, 16], strides = [1, 1]} : vector<16x96xf32> to vector<8x16xf32>
    %162 = vector.extract_strided_slice %32 {offsets = [8, 0], sizes = [8, 16], strides = [1, 1]} : vector<16x96xf32> to vector<8x16xf32>
    %cst_55 = arith.constant dense<0.000000e+00> : vector<8x8xf32>
    %163 = tpu.matmul %160, %161, %cst_55 {dimension_numbers = #tpu.dot_dimension_numbers<[1], [1], [0], [0], [0, 0, 1, 0], [], []>} : vector<8x16xf32>, vector<8x16xf32>, vector<8x8xf32> -> vector<8x8xf32>
    %cst_56 = arith.constant 2.500000e-01 : f32
    %164 = vector.broadcast %cst_56 : f32 to vector<8x8xf32>
    %165 = arith.mulf %163, %164 : vector<8x8xf32>
    %166 = vector.broadcast %159 : vector<1x8xf32> to vector<8x8xf32>
    %167 = arith.addf %165, %166 : vector<8x8xf32>
    %cst_57 = arith.constant dense<0xFF800000> : vector<8xf32>
    %168 = vector.multi_reduction <maximumf>, %167, %cst_57 [1] : vector<8x8xf32> to vector<8xf32>
    %169 = vector.shape_cast %168 : vector<8xf32> to vector<8x1xf32>
    %170 = vector.broadcast %169 : vector<8x1xf32> to vector<8x8xf32>
    %171 = arith.subf %167, %170 : vector<8x8xf32>
    %172 = math.exp %171 : vector<8x8xf32>
    %cst_58 = arith.constant dense<0.000000e+00> : vector<8xf32>
    %173 = vector.multi_reduction <add>, %172, %cst_58 [1] : vector<8x8xf32> to vector<8xf32>
    %174 = vector.shape_cast %173 : vector<8xf32> to vector<8x1xf32>
    %175 = tpu.reciprocal %174 {approx = true} : vector<8x1xf32> -> vector<8x1xf32>
    %176 = vector.broadcast %175 : vector<8x1xf32> to vector<8x8xf32>
    %177 = arith.mulf %172, %176 : vector<8x8xf32>
    %cst_59 = arith.constant dense<0.000000e+00> : vector<8x16xf32>
    %178 = tpu.matmul %177, %162, %cst_59 {dimension_numbers = #tpu.dot_dimension_numbers<[1], [0], [0], [1], [0, 0, 1, 1], [], []>} : vector<8x8xf32>, vector<8x16xf32>, vector<8x16xf32> -> vector<8x16xf32>
    %c8 = arith.constant 8 : index
    %c0_60 = arith.constant 0 : index
    %179 = vector.load %arg21[%c8, %c0_60] : memref<16x96xf32, #tpu.memory_space<vmem>>, vector<8x16xf32>
    tpu.vector_store %arg21[%c8, %c0_60], %178 {strides = array<i32>} : memref<16x96xf32, #tpu.memory_space<vmem>>, vector<8x16xf32>,
    %180 = vector.extract_strided_slice %30 {offsets = [8, 16], sizes = [8, 16], strides = [1, 1]} : vector<16x96xf32> to vector<8x16xf32>
    %181 = vector.extract_strided_slice %31 {offsets = [8, 16], sizes = [8, 16], strides = [1, 1]} : vector<16x96xf32> to vector<8x16xf32>
    %182 = vector.extract_strided_slice %32 {offsets = [8, 16], sizes = [8, 16], strides = [1, 1]} : vector<16x96xf32> to vector<8x16xf32>
    %cst_61 = arith.constant dense<0.000000e+00> : vector<8x8xf32>
    %183 = tpu.matmul %180, %181, %cst_61 {dimension_numbers = #tpu.dot_dimension_numbers<[1], [1], [0], [0], [0, 0, 1, 0], [], []>} : vector<8x16xf32>, vector<8x16xf32>, vector<8x8xf32> -> vector<8x8xf32>
    %cst_62 = arith.constant 2.500000e-01 : f32
    %184 = vector.broadcast %cst_62 : f32 to vector<8x8xf32>
    %185 = arith.mulf %183, %184 : vector<8x8xf32>
    %186 = vector.broadcast %159 : vector<1x8xf32> to vector<8x8xf32>
    %187 = arith.addf %185, %186 : vector<8x8xf32>
    %cst_63 = arith.constant dense<0xFF800000> : vector<8xf32>
    %188 = vector.multi_reduction <maximumf>, %187, %cst_63 [1] : vector<8x8xf32> to vector<8xf32>
    %189 = vector.shape_cast %188 : vector<8xf32> to vector<8x1xf32>
    %190 = vector.broadcast %189 : vector<8x1xf32> to vector<8x8xf32>
    %191 = arith.subf %187, %190 : vector<8x8xf32>
    %192 = math.exp %191 : vector<8x8xf32>
    %cst_64 = arith.constant dense<0.000000e+00> : vector<8xf32>
    %193 = vector.multi_reduction <add>, %192, %cst_64 [1] : vector<8x8xf32> to vector<8xf32>
    %194 = vector.shape_cast %193 : vector<8xf32> to vector<8x1xf32>
    %195 = tpu.reciprocal %194 {approx = true} : vector<8x1xf32> -> vector<8x1xf32>
    %196 = vector.broadcast %195 : vector<8x1xf32> to vector<8x8xf32>
    %197 = arith.mulf %192, %196 : vector<8x8xf32>
    %cst_65 = arith.constant dense<0.000000e+00> : vector<8x16xf32>
    %198 = tpu.matmul %197, %182, %cst_65 {dimension_numbers = #tpu.dot_dimension_numbers<[1], [0], [0], [1], [0, 0, 1, 1], [], []>} : vector<8x8xf32>, vector<8x16xf32>, vector<8x16xf32> -> vector<8x16xf32>
    %c8_66 = arith.constant 8 : index
    %c16_67 = arith.constant 16 : index
    %199 = vector.load %arg21[%c8_66, %c16_67] : memref<16x96xf32, #tpu.memory_space<vmem>>, vector<8x16xf32>
    tpu.vector_store %arg21[%c8_66, %c16_67], %198 {strides = array<i32>} : memref<16x96xf32, #tpu.memory_space<vmem>>, vector<8x16xf32>,
    %200 = vector.extract_strided_slice %30 {offsets = [8, 32], sizes = [8, 16], strides = [1, 1]} : vector<16x96xf32> to vector<8x16xf32>
    %201 = vector.extract_strided_slice %31 {offsets = [8, 32], sizes = [8, 16], strides = [1, 1]} : vector<16x96xf32> to vector<8x16xf32>
    %202 = vector.extract_strided_slice %32 {offsets = [8, 32], sizes = [8, 16], strides = [1, 1]} : vector<16x96xf32> to vector<8x16xf32>
    %cst_68 = arith.constant dense<0.000000e+00> : vector<8x8xf32>
    %203 = tpu.matmul %200, %201, %cst_68 {dimension_numbers = #tpu.dot_dimension_numbers<[1], [1], [0], [0], [0, 0, 1, 0], [], []>} : vector<8x16xf32>, vector<8x16xf32>, vector<8x8xf32> -> vector<8x8xf32>
    %cst_69 = arith.constant 2.500000e-01 : f32
    %204 = vector.broadcast %cst_69 : f32 to vector<8x8xf32>
    %205 = arith.mulf %203, %204 : vector<8x8xf32>
    %206 = vector.broadcast %159 : vector<1x8xf32> to vector<8x8xf32>
    %207 = arith.addf %205, %206 : vector<8x8xf32>
    %cst_70 = arith.constant dense<0xFF800000> : vector<8xf32>
    %208 = vector.multi_reduction <maximumf>, %207, %cst_70 [1] : vector<8x8xf32> to vector<8xf32>
    %209 = vector.shape_cast %208 : vector<8xf32> to vector<8x1xf32>
    %210 = vector.broadcast %209 : vector<8x1xf32> to vector<8x8xf32>
    %211 = arith.subf %207, %210 : vector<8x8xf32>
    %212 = math.exp %211 : vector<8x8xf32>
    %cst_71 = arith.constant dense<0.000000e+00> : vector<8xf32>
    %213 = vector.multi_reduction <add>, %212, %cst_71 [1] : vector<8x8xf32> to vector<8xf32>
    %214 = vector.shape_cast %213 : vector<8xf32> to vector<8x1xf32>
    %215 = tpu.reciprocal %214 {approx = true} : vector<8x1xf32> -> vector<8x1xf32>
    %216 = vector.broadcast %215 : vector<8x1xf32> to vector<8x8xf32>
    %217 = arith.mulf %212, %216 : vector<8x8xf32>
    %cst_72 = arith.constant dense<0.000000e+00> : vector<8x16xf32>
    %218 = tpu.matmul %217, %202, %cst_72 {dimension_numbers = #tpu.dot_dimension_numbers<[1], [0], [0], [1], [0, 0, 1, 1], [], []>} : vector<8x8xf32>, vector<8x16xf32>, vector<8x16xf32> -> vector<8x16xf32>
    %c8_73 = arith.constant 8 : index
    %c32_74 = arith.constant 32 : index
    %219 = vector.load %arg21[%c8_73, %c32_74] : memref<16x96xf32, #tpu.memory_space<vmem>>, vector<8x16xf32>
    tpu.vector_store %arg21[%c8_73, %c32_74], %218 {strides = array<i32>} : memref<16x96xf32, #tpu.memory_space<vmem>>, vector<8x16xf32>,
    %220 = vector.extract_strided_slice %30 {offsets = [8, 48], sizes = [8, 16], strides = [1, 1]} : vector<16x96xf32> to vector<8x16xf32>
    %221 = vector.extract_strided_slice %31 {offsets = [8, 48], sizes = [8, 16], strides = [1, 1]} : vector<16x96xf32> to vector<8x16xf32>
    %222 = vector.extract_strided_slice %32 {offsets = [8, 48], sizes = [8, 16], strides = [1, 1]} : vector<16x96xf32> to vector<8x16xf32>
    %cst_75 = arith.constant dense<0.000000e+00> : vector<8x8xf32>
    %223 = tpu.matmul %220, %221, %cst_75 {dimension_numbers = #tpu.dot_dimension_numbers<[1], [1], [0], [0], [0, 0, 1, 0], [], []>} : vector<8x16xf32>, vector<8x16xf32>, vector<8x8xf32> -> vector<8x8xf32>
    %cst_76 = arith.constant 2.500000e-01 : f32
    %224 = vector.broadcast %cst_76 : f32 to vector<8x8xf32>
    %225 = arith.mulf %223, %224 : vector<8x8xf32>
    %226 = vector.broadcast %159 : vector<1x8xf32> to vector<8x8xf32>
    %227 = arith.addf %225, %226 : vector<8x8xf32>
    %cst_77 = arith.constant dense<0xFF800000> : vector<8xf32>
    %228 = vector.multi_reduction <maximumf>, %227, %cst_77 [1] : vector<8x8xf32> to vector<8xf32>
    %229 = vector.shape_cast %228 : vector<8xf32> to vector<8x1xf32>
    %230 = vector.broadcast %229 : vector<8x1xf32> to vector<8x8xf32>
    %231 = arith.subf %227, %230 : vector<8x8xf32>
    %232 = math.exp %231 : vector<8x8xf32>
    %cst_78 = arith.constant dense<0.000000e+00> : vector<8xf32>
    %233 = vector.multi_reduction <add>, %232, %cst_78 [1] : vector<8x8xf32> to vector<8xf32>
    %234 = vector.shape_cast %233 : vector<8xf32> to vector<8x1xf32>
    %235 = tpu.reciprocal %234 {approx = true} : vector<8x1xf32> -> vector<8x1xf32>
    %236 = vector.broadcast %235 : vector<8x1xf32> to vector<8x8xf32>
    %237 = arith.mulf %232, %236 : vector<8x8xf32>
    %cst_79 = arith.constant dense<0.000000e+00> : vector<8x16xf32>
    %238 = tpu.matmul %237, %222, %cst_79 {dimension_numbers = #tpu.dot_dimension_numbers<[1], [0], [0], [1], [0, 0, 1, 1], [], []>} : vector<8x8xf32>, vector<8x16xf32>, vector<8x16xf32> -> vector<8x16xf32>
    %c8_80 = arith.constant 8 : index
    %c48_81 = arith.constant 48 : index
    %239 = vector.load %arg21[%c8_80, %c48_81] : memref<16x96xf32, #tpu.memory_space<vmem>>, vector<8x16xf32>
    tpu.vector_store %arg21[%c8_80, %c48_81], %238 {strides = array<i32>} : memref<16x96xf32, #tpu.memory_space<vmem>>, vector<8x16xf32>,
    %240 = vector.extract_strided_slice %30 {offsets = [8, 64], sizes = [8, 16], strides = [1, 1]} : vector<16x96xf32> to vector<8x16xf32>
    %241 = vector.extract_strided_slice %31 {offsets = [8, 64], sizes = [8, 16], strides = [1, 1]} : vector<16x96xf32> to vector<8x16xf32>
    %242 = vector.extract_strided_slice %32 {offsets = [8, 64], sizes = [8, 16], strides = [1, 1]} : vector<16x96xf32> to vector<8x16xf32>
    %cst_82 = arith.constant dense<0.000000e+00> : vector<8x8xf32>
    %243 = tpu.matmul %240, %241, %cst_82 {dimension_numbers = #tpu.dot_dimension_numbers<[1], [1], [0], [0], [0, 0, 1, 0], [], []>} : vector<8x16xf32>, vector<8x16xf32>, vector<8x8xf32> -> vector<8x8xf32>
    %cst_83 = arith.constant 2.500000e-01 : f32
    %244 = vector.broadcast %cst_83 : f32 to vector<8x8xf32>
    %245 = arith.mulf %243, %244 : vector<8x8xf32>
    %246 = vector.broadcast %159 : vector<1x8xf32> to vector<8x8xf32>
    %247 = arith.addf %245, %246 : vector<8x8xf32>
    %cst_84 = arith.constant dense<0xFF800000> : vector<8xf32>
    %248 = vector.multi_reduction <maximumf>, %247, %cst_84 [1] : vector<8x8xf32> to vector<8xf32>
    %249 = vector.shape_cast %248 : vector<8xf32> to vector<8x1xf32>
    %250 = vector.broadcast %249 : vector<8x1xf32> to vector<8x8xf32>
    %251 = arith.subf %247, %250 : vector<8x8xf32>
    %252 = math.exp %251 : vector<8x8xf32>
    %cst_85 = arith.constant dense<0.000000e+00> : vector<8xf32>
    %253 = vector.multi_reduction <add>, %252, %cst_85 [1] : vector<8x8xf32> to vector<8xf32>
    %254 = vector.shape_cast %253 : vector<8xf32> to vector<8x1xf32>
    %255 = tpu.reciprocal %254 {approx = true} : vector<8x1xf32> -> vector<8x1xf32>
    %256 = vector.broadcast %255 : vector<8x1xf32> to vector<8x8xf32>
    %257 = arith.mulf %252, %256 : vector<8x8xf32>
    %cst_86 = arith.constant dense<0.000000e+00> : vector<8x16xf32>
    %258 = tpu.matmul %257, %242, %cst_86 {dimension_numbers = #tpu.dot_dimension_numbers<[1], [0], [0], [1], [0, 0, 1, 1], [], []>} : vector<8x8xf32>, vector<8x16xf32>, vector<8x16xf32> -> vector<8x16xf32>
    %c8_87 = arith.constant 8 : index
    %c64_88 = arith.constant 64 : index
    %259 = vector.load %arg21[%c8_87, %c64_88] : memref<16x96xf32, #tpu.memory_space<vmem>>, vector<8x16xf32>
    tpu.vector_store %arg21[%c8_87, %c64_88], %258 {strides = array<i32>} : memref<16x96xf32, #tpu.memory_space<vmem>>, vector<8x16xf32>,
    %260 = vector.extract_strided_slice %30 {offsets = [8, 80], sizes = [8, 16], strides = [1, 1]} : vector<16x96xf32> to vector<8x16xf32>
    %261 = vector.extract_strided_slice %31 {offsets = [8, 80], sizes = [8, 16], strides = [1, 1]} : vector<16x96xf32> to vector<8x16xf32>
    %262 = vector.extract_strided_slice %32 {offsets = [8, 80], sizes = [8, 16], strides = [1, 1]} : vector<16x96xf32> to vector<8x16xf32>
    %cst_89 = arith.constant dense<0.000000e+00> : vector<8x8xf32>
    %263 = tpu.matmul %260, %261, %cst_89 {dimension_numbers = #tpu.dot_dimension_numbers<[1], [1], [0], [0], [0, 0, 1, 0], [], []>} : vector<8x16xf32>, vector<8x16xf32>, vector<8x8xf32> -> vector<8x8xf32>
    %cst_90 = arith.constant 2.500000e-01 : f32
    %264 = vector.broadcast %cst_90 : f32 to vector<8x8xf32>
    %265 = arith.mulf %263, %264 : vector<8x8xf32>
    %266 = vector.broadcast %159 : vector<1x8xf32> to vector<8x8xf32>
    %267 = arith.addf %265, %266 : vector<8x8xf32>
    %cst_91 = arith.constant dense<0xFF800000> : vector<8xf32>
    %268 = vector.multi_reduction <maximumf>, %267, %cst_91 [1] : vector<8x8xf32> to vector<8xf32>
    %269 = vector.shape_cast %268 : vector<8xf32> to vector<8x1xf32>
    %270 = vector.broadcast %269 : vector<8x1xf32> to vector<8x8xf32>
    %271 = arith.subf %267, %270 : vector<8x8xf32>
    %272 = math.exp %271 : vector<8x8xf32>
    %cst_92 = arith.constant dense<0.000000e+00> : vector<8xf32>
    %273 = vector.multi_reduction <add>, %272, %cst_92 [1] : vector<8x8xf32> to vector<8xf32>
    %274 = vector.shape_cast %273 : vector<8xf32> to vector<8x1xf32>
    %275 = tpu.reciprocal %274 {approx = true} : vector<8x1xf32> -> vector<8x1xf32>
    %276 = vector.broadcast %275 : vector<8x1xf32> to vector<8x8xf32>
    %277 = arith.mulf %272, %276 : vector<8x8xf32>
    %cst_93 = arith.constant dense<0.000000e+00> : vector<8x16xf32>
    %278 = tpu.matmul %277, %262, %cst_93 {dimension_numbers = #tpu.dot_dimension_numbers<[1], [0], [0], [1], [0, 0, 1, 1], [], []>} : vector<8x8xf32>, vector<8x16xf32>, vector<8x16xf32> -> vector<8x16xf32>
    %c8_94 = arith.constant 8 : index
    %c80_95 = arith.constant 80 : index
    %279 = vector.load %arg21[%c8_94, %c80_95] : memref<16x96xf32, #tpu.memory_space<vmem>>, vector<8x16xf32>
    tpu.vector_store %arg21[%c8_94, %c80_95], %278 {strides = array<i32>} : memref<16x96xf32, #tpu.memory_space<vmem>>, vector<8x16xf32>,
    %c0_96 = arith.constant 0 : index
    %c0_97 = arith.constant 0 : index
    %280 = vector.load %arg21[%c0_96, %c0_97] : memref<16x96xf32, #tpu.memory_space<vmem>>, vector<16x96xf32>
    %c0_98 = arith.constant 0 : index
    %c0_99 = arith.constant 0 : index
    %281 = vector.load %arg4[%c0_98, %c0_99] : memref<96x96xf32, #tpu.memory_space<vmem>>, vector<96x96xf32>
    %cst_100 = arith.constant dense<0.000000e+00> : vector<16x96xf32>
    %282 = tpu.matmul %280, %281, %cst_100 {dimension_numbers = #tpu.dot_dimension_numbers<[1], [0], [0], [1], [0, 0, 1, 1], [], []>} : vector<16x96xf32>, vector<96x96xf32>, vector<16x96xf32> -> vector<16x96xf32>
    %c0_101 = arith.constant 0 : index
    %c0_102 = arith.constant 0 : index
    %283 = vector.load %arg5[%c0_101, %c0_102] : memref<1x96xf32, #tpu.memory_space<vmem>>, vector<1x96xf32>
    %284 = vector.broadcast %283 : vector<1x96xf32> to vector<16x96xf32>
    %285 = arith.addf %282, %284 : vector<16x96xf32>
    %286 = arith.addf %285, %24 : vector<16x96xf32>
    %c0_103 = arith.constant 0 : index
    %c0_104 = arith.constant 0 : index
    %287 = vector.load %arg8[%c0_103, %c0_104] : memref<1x96xf32, #tpu.memory_space<vmem>>, vector<1x96xf32>
    %c0_105 = arith.constant 0 : index
    %c0_106 = arith.constant 0 : index
    %288 = vector.load %arg9[%c0_105, %c0_106] : memref<1x96xf32, #tpu.memory_space<vmem>>, vector<1x96xf32>
    %cst_107 = arith.constant dense<0.000000e+00> : vector<16xf32>
    %289 = vector.multi_reduction <add>, %286, %cst_107 [1] : vector<16x96xf32> to vector<16xf32>
    %290 = vector.shape_cast %289 : vector<16xf32> to vector<16x1xf32>
    %cst_108 = arith.constant 9.600000e+01 : f32
    %291 = vector.broadcast %cst_108 : f32 to vector<16x1xf32>
    %292 = arith.divf %290, %291 : vector<16x1xf32>
    %293 = vector.broadcast %292 : vector<16x1xf32> to vector<16x96xf32>
    %294 = arith.subf %286, %293 : vector<16x96xf32>
    %295 = arith.mulf %294, %294 : vector<16x96xf32>
    %cst_109 = arith.constant dense<0.000000e+00> : vector<16xf32>
    %296 = vector.multi_reduction <add>, %295, %cst_109 [1] : vector<16x96xf32> to vector<16xf32>
    %297 = vector.shape_cast %296 : vector<16xf32> to vector<16x1xf32>
    %cst_110 = arith.constant 9.600000e+01 : f32
    %298 = vector.broadcast %cst_110 : f32 to vector<16x1xf32>
    %299 = arith.divf %297, %298 : vector<16x1xf32>
    %300 = vector.broadcast %292 : vector<16x1xf32> to vector<16x96xf32>
    %301 = arith.subf %286, %300 : vector<16x96xf32>
    %cst_111 = arith.constant 9.99999996E-13 : f32
    %302 = vector.broadcast %cst_111 : f32 to vector<16x1xf32>
    %303 = arith.addf %299, %302 : vector<16x1xf32>
    %304 = math.rsqrt %303 : vector<16x1xf32>
    %305 = vector.broadcast %304 : vector<16x1xf32> to vector<16x96xf32>
    %306 = arith.mulf %301, %305 : vector<16x96xf32>
    %307 = vector.broadcast %287 : vector<1x96xf32> to vector<16x96xf32>
    %308 = arith.mulf %306, %307 : vector<16x96xf32>
    %309 = vector.broadcast %288 : vector<1x96xf32> to vector<16x96xf32>
    %310 = arith.addf %308, %309 : vector<16x96xf32>
    %c0_112 = arith.constant 0 : index
    %c0_113 = arith.constant 0 : index
    %311 = vector.load %arg10[%c0_112, %c0_113] : memref<96x384xf32, #tpu.memory_space<vmem>>, vector<96x384xf32>
    %cst_114 = arith.constant dense<0.000000e+00> : vector<16x384xf32>
    %312 = tpu.matmul %310, %311, %cst_114 {dimension_numbers = #tpu.dot_dimension_numbers<[1], [0], [0], [1], [0, 0, 1, 1], [], []>} : vector<16x96xf32>, vector<96x384xf32>, vector<16x384xf32> -> vector<16x384xf32>
    %c0_115 = arith.constant 0 : index
    %c0_116 = arith.constant 0 : index
    %313 = vector.load %arg11[%c0_115, %c0_116] : memref<1x384xf32, #tpu.memory_space<vmem>>, vector<1x384xf32>
    %314 = vector.broadcast %313 : vector<1x384xf32> to vector<16x384xf32>
    %315 = arith.addf %312, %314 : vector<16x384xf32>
    %cst_117 = arith.constant 5.000000e-01 : f32
    %316 = vector.broadcast %cst_117 : f32 to vector<16x384xf32>
    %317 = arith.mulf %316, %315 : vector<16x384xf32>
    %cst_118 = arith.constant 0.707106769 : f32
    %318 = vector.broadcast %cst_118 : f32 to vector<16x384xf32>
    %319 = arith.mulf %315, %318 : vector<16x384xf32>
    %320 = math.erf %319 : vector<16x384xf32>
    %cst_119 = arith.constant 1.000000e+00 : f32
    %321 = vector.broadcast %cst_119 : f32 to vector<16x384xf32>
    %322 = arith.addf %321, %320 : vector<16x384xf32>
    %323 = arith.mulf %317, %322 : vector<16x384xf32>
    %c0_120 = arith.constant 0 : index
    %c0_121 = arith.constant 0 : index
    %324 = vector.load %arg12[%c0_120, %c0_121] : memref<384x96xf32, #tpu.memory_space<vmem>>, vector<384x96xf32>
    %cst_122 = arith.constant dense<0.000000e+00> : vector<16x96xf32>
    %325 = tpu.matmul %323, %324, %cst_122 {dimension_numbers = #tpu.dot_dimension_numbers<[1], [0], [0], [1], [0, 0, 1, 1], [], []>} : vector<16x384xf32>, vector<384x96xf32>, vector<16x96xf32> -> vector<16x96xf32>
    %c0_123 = arith.constant 0 : index
    %c0_124 = arith.constant 0 : index
    %326 = vector.load %arg13[%c0_123, %c0_124] : memref<1x96xf32, #tpu.memory_space<vmem>>, vector<1x96xf32>
    %327 = vector.broadcast %326 : vector<1x96xf32> to vector<16x96xf32>
    %328 = arith.addf %325, %327 : vector<16x96xf32>
    %329 = arith.addf %328, %310 : vector<16x96xf32>
    %c0_125 = arith.constant 0 : index
    %c0_126 = arith.constant 0 : index
    %330 = vector.load %arg14[%c0_125, %c0_126] : memref<1x96xf32, #tpu.memory_space<vmem>>, vector<1x96xf32>
    %c0_127 = arith.constant 0 : index
    %c0_128 = arith.constant 0 : index
    %331 = vector.load %arg15[%c0_127, %c0_128] : memref<1x96xf32, #tpu.memory_space<vmem>>, vector<1x96xf32>
    %cst_129 = arith.constant dense<0.000000e+00> : vector<16xf32>
    %332 = vector.multi_reduction <add>, %329, %cst_129 [1] : vector<16x96xf32> to vector<16xf32>
    %333 = vector.shape_cast %332 : vector<16xf32> to vector<16x1xf32>
    %cst_130 = arith.constant 9.600000e+01 : f32
    %334 = vector.broadcast %cst_130 : f32 to vector<16x1xf32>
    %335 = arith.divf %333, %334 : vector<16x1xf32>
    %336 = vector.broadcast %335 : vector<16x1xf32> to vector<16x96xf32>
    %337 = arith.subf %329, %336 : vector<16x96xf32>
    %338 = arith.mulf %337, %337 : vector<16x96xf32>
    %cst_131 = arith.constant dense<0.000000e+00> : vector<16xf32>
    %339 = vector.multi_reduction <add>, %338, %cst_131 [1] : vector<16x96xf32> to vector<16xf32>
    %340 = vector.shape_cast %339 : vector<16xf32> to vector<16x1xf32>
    %cst_132 = arith.constant 9.600000e+01 : f32
    %341 = vector.broadcast %cst_132 : f32 to vector<16x1xf32>
    %342 = arith.divf %340, %341 : vector<16x1xf32>
    %343 = vector.broadcast %335 : vector<16x1xf32> to vector<16x96xf32>
    %344 = arith.subf %329, %343 : vector<16x96xf32>
    %cst_133 = arith.constant 9.99999996E-13 : f32
    %345 = vector.broadcast %cst_133 : f32 to vector<16x1xf32>
    %346 = arith.addf %342, %345 : vector<16x1xf32>
    %347 = math.rsqrt %346 : vector<16x1xf32>
    %348 = vector.broadcast %347 : vector<16x1xf32> to vector<16x96xf32>
    %349 = arith.mulf %344, %348 : vector<16x96xf32>
    %350 = vector.broadcast %330 : vector<1x96xf32> to vector<16x96xf32>
    %351 = arith.mulf %349, %350 : vector<16x96xf32>
    %352 = vector.broadcast %331 : vector<1x96xf32> to vector<16x96xf32>
    %353 = arith.addf %351, %352 : vector<16x96xf32>
    %c0_134 = arith.constant 0 : index
    %c0_135 = arith.constant 0 : index
    %354 = vector.load %arg16[%c0_134, %c0_135] : memref<96x96xf32, #tpu.memory_space<vmem>>, vector<96x96xf32>
    %cst_136 = arith.constant dense<0.000000e+00> : vector<16x96xf32>
    %355 = tpu.matmul %353, %354, %cst_136 {dimension_numbers = #tpu.dot_dimension_numbers<[1], [0], [0], [1], [0, 0, 1, 1], [], []>} : vector<16x96xf32>, vector<96x96xf32>, vector<16x96xf32> -> vector<16x96xf32>
    %c0_137 = arith.constant 0 : index
    %c0_138 = arith.constant 0 : index
    %356 = vector.load %arg17[%c0_137, %c0_138] : memref<1x96xf32, #tpu.memory_space<vmem>>, vector<1x96xf32>
    %357 = vector.broadcast %356 : vector<1x96xf32> to vector<16x96xf32>
    %358 = arith.addf %355, %357 : vector<16x96xf32>
    %359 = math.tanh %358 : vector<16x96xf32>
    %c0_139 = arith.constant 0 : index
    %c0_140 = arith.constant 0 : index
    %360 = vector.load %arg18[%c0_139, %c0_140] : memref<96x128xf32, #tpu.memory_space<vmem>>, vector<96x128xf32>
    %cst_141 = arith.constant dense<0.000000e+00> : vector<16x128xf32>
    %361 = tpu.matmul %359, %360, %cst_141 {dimension_numbers = #tpu.dot_dimension_numbers<[1], [0], [0], [1], [0, 0, 1, 1], [], []>} : vector<16x96xf32>, vector<96x128xf32>, vector<16x128xf32> -> vector<16x128xf32>
    %c0_142 = arith.constant 0 : index
    %c0_143 = arith.constant 0 : index
    %362 = vector.load %arg19[%c0_142, %c0_143] : memref<1x128xf32, #tpu.memory_space<vmem>>, vector<1x128xf32>
    %363 = vector.broadcast %362 : vector<1x128xf32> to vector<16x128xf32>
    %364 = arith.addf %361, %363 : vector<16x128xf32>
    %c0_144 = arith.constant 0 : index
    %c0_145 = arith.constant 0 : index
    %365 = vector.load %arg20[%c0_144, %c0_145] : memref<16x128xf32, #tpu.memory_space<vmem>>, vector<16x128xf32>
    tpu.vector_store %arg20[%c0_144, %c0_145], %364 {strides = array<i32>} : memref<16x128xf32, #tpu.memory_space<vmem>>, vector<16x128xf32>,
    return
  }
}

</mosaic_0001>

<llo_original>
// kernel: vuln_classifier_light_forward.1
$region0: #{vuln_classifier_light_forward.1}
  #allocation0 [shape = 'u32[]', space=smem, size = 0x4, offset = 0x4, fixed_abs, tag = 'smem constant byte address 0x4 - core index']
  #allocation1 [shape = 'u32[144,128]{1,0:T(1,128)}', space=vmem, size = 0x12000, scoped, tag = 'internal scratch']
  #allocation2 [shape = 'f32[16,96]{1,0:T(8,128)}', space=vmem, size = 0x2000, scoped, tag = 'scratch operand']
  %s0 = inlined_call_operand.vmem [shape: f32[16,96], index: 0, kind: input, shape index: {}]
  %s1 = inlined_call_operand.vmem [shape: f32[2,8], index: 1, kind: input, shape index: {}]
  %s2 = inlined_call_operand.vmem [shape: f32[96,288], index: 2, kind: input, shape index: {}]
  %s3 = inlined_call_operand.vmem [shape: f32[1,288], index: 3, kind: input, shape index: {}]
  %s4 = inlined_call_operand.vmem [shape: f32[96,96], index: 4, kind: input, shape index: {}]
  %s5 = inlined_call_operand.vmem [shape: f32[1,96], index: 5, kind: input, shape index: {}]
  %s6 = inlined_call_operand.vmem [shape: f32[1,96], index: 6, kind: input, shape index: {}]
  %s7 = inlined_call_operand.vmem [shape: f32[1,96], index: 7, kind: input, shape index: {}]
  %s8 = inlined_call_operand.vmem [shape: f32[1,96], index: 8, kind: input, shape index: {}]
  %s9 = inlined_call_operand.vmem [shape: f32[1,96], index: 9, kind: input, shape index: {}]
  %s10 = inlined_call_operand.vmem [shape: f32[96,384], index: 10, kind: input, shape index: {}]
  %s11 = inlined_call_operand.vmem [shape: f32[1,384], index: 11, kind: input, shape index: {}]
  %s12 = inlined_call_operand.vmem [shape: f32[384,96], index: 12, kind: input, shape index: {}]
  %s13 = inlined_call_operand.vmem [shape: f32[1,96], index: 13, kind: input, shape index: {}]
  %s14 = inlined_call_operand.vmem [shape: f32[1,96], index: 14, kind: input, shape index: {}]
  %s15 = inlined_call_operand.vmem [shape: f32[1,96], index: 15, kind: input, shape index: {}]
  %s16 = inlined_call_operand.vmem [shape: f32[96,96], index: 16, kind: input, shape index: {}]
  %s17 = inlined_call_operand.vmem [shape: f32[1,96], index: 17, kind: input, shape index: {}]
  %s18 = inlined_call_operand.vmem [shape: f32[96,128], index: 18, kind: input, shape index: {}]
  %s19 = inlined_call_operand.vmem [shape: f32[1,128], index: 19, kind: input, shape index: {}]
  %s20 = inlined_call_operand.vmem [shape: f32[16,128], index: 20, kind: output, shape index: {}]
  %s21 = sld [smem:[#allocation0]]
  $region90: #{vuln_classifier_light_forward.1} parent=0
    _
  %s23 = ssub.s32 1, %s21
  %s24 = scalar_select 0, %s23, %s21
  // Predicated region
  $region2: #{vuln_classifier_light_forward.1} parent=0 // pred_check
    _
  $region3: #{vuln_classifier_light_forward.1} parent=0 // pred_check_branch
    %26 = sbr.rel (0) target = $region5
  $region4: #{vuln_classifier_light_forward.1} parent=0 // pred_region
    _
  $region5: #{vuln_classifier_light_forward.1} parent=0 // pred_fallthru
    _
  // Predicated region
  $region6: #{vuln_classifier_light_forward.1} parent=0 // pred_check
    _
  $region7: #{vuln_classifier_light_forward.1} parent=0 // pred_check_branch
    %28 = sbr.rel (0) target = $region9
  $region8: #{vuln_classifier_light_forward.1} parent=0 // pred_region
    _
  $region9: #{vuln_classifier_light_forward.1} parent=0 // pred_fallthru
    _
  // Predicated region
  $region10: #{vuln_classifier_light_forward.1} parent=0 // pred_check
    _
  $region11: #{vuln_classifier_light_forward.1} parent=0 // pred_check_branch
    %30 = sbr.rel (0) target = $region13
  $region12: #{vuln_classifier_light_forward.1} parent=0 // pred_region
    _
  $region13: #{vuln_classifier_light_forward.1} parent=0 // pred_fallthru
    _
  // Predicated region
  $region14: #{vuln_classifier_light_forward.1} parent=0 // pred_check
    _
  $region15: #{vuln_classifier_light_forward.1} parent=0 // pred_check_branch
    %32 = sbr.rel (0) target = $region17
  $region16: #{vuln_classifier_light_forward.1} parent=0 // pred_region
    _
  $region17: #{vuln_classifier_light_forward.1} parent=0 // pred_fallthru
    _
  // Predicated region
  $region18: #{vuln_classifier_light_forward.1} parent=0 // pred_check
    _
  $region19: #{vuln_classifier_light_forward.1} parent=0 // pred_check_branch
    %34 = sbr.rel (0) target = $region21
  $region20: #{vuln_classifier_light_forward.1} parent=0 // pred_region
    _
  $region21: #{vuln_classifier_light_forward.1} parent=0 // pred_fallthru
    _
  // Predicated region
  $region22: #{vuln_classifier_light_forward.1} parent=0 // pred_check
    _
  $region23: #{vuln_classifier_light_forward.1} parent=0 // pred_check_branch
    %36 = sbr.rel (0) target = $region25
  $region24: #{vuln_classifier_light_forward.1} parent=0 // pred_region
    _
  $region25: #{vuln_classifier_light_forward.1} parent=0 // pred_fallthru
    _
  // Predicated region
  $region26: #{vuln_classifier_light_forward.1} parent=0 // pred_check
    _
  $region27: #{vuln_classifier_light_forward.1} parent=0 // pred_check_branch
    %38 = sbr.rel (0) target = $region29
  $region28: #{vuln_classifier_light_forward.1} parent=0 // pred_region
    _
  $region29: #{vuln_classifier_light_forward.1} parent=0 // pred_fallthru
    _
  // Predicated region
  $region30: #{vuln_classifier_light_forward.1} parent=0 // pred_check
    _
  $region31: #{vuln_classifier_light_forward.1} parent=0 // pred_check_branch
    %40 = sbr.rel (0) target = $region33
  $region32: #{vuln_classifier_light_forward.1} parent=0 // pred_region
    _
  $region33: #{vuln_classifier_light_forward.1} parent=0 // pred_fallthru
    _
  // Predicated region
  $region34: #{vuln_classifier_light_forward.1} parent=0 // pred_check
    _
  $region35: #{vuln_classifier_light_forward.1} parent=0 // pred_check_branch
    %42 = sbr.rel (0) target = $region37
  $region36: #{vuln_classifier_light_forward.1} parent=0 // pred_region
    _
  $region37: #{vuln_classifier_light_forward.1} parent=0 // pred_fallthru
    _
  // Predicated region
  $region38: #{vuln_classifier_light_forward.1} parent=0 // pred_check
    _
  $region39: #{vuln_classifier_light_forward.1} parent=0 // pred_check_branch
    %44 = sbr.rel (0) target = $region41
  $region40: #{vuln_classifier_light_forward.1} parent=0 // pred_region
    _
  $region41: #{vuln_classifier_light_forward.1} parent=0 // pred_fallthru
    _
  // Predicated region
  $region42: #{vuln_classifier_light_forward.1} parent=0 // pred_check
    _
  $region43: #{vuln_classifier_light_forward.1} parent=0 // pred_check_branch
    %46 = sbr.rel (0) target = $region45
  $region44: #{vuln_classifier_light_forward.1} parent=0 // pred_region
    _
  $region45: #{vuln_classifier_light_forward.1} parent=0 // pred_fallthru
    _
  // Predicated region
  $region46: #{vuln_classifier_light_forward.1} parent=0 // pred_check
    _
  $region47: #{vuln_classifier_light_forward.1} parent=0 // pred_check_branch
    %48 = sbr.rel (0) target = $region49
  $region48: #{vuln_classifier_light_forward.1} parent=0 // pred_region
    _
  $region49: #{vuln_classifier_light_forward.1} parent=0 // pred_fallthru
    _
  // Predicated region
  $region50: #{vuln_classifier_light_forward.1} parent=0 // pred_check
    _
  $region51: #{vuln_classifier_light_forward.1} parent=0 // pred_check_branch
    %50 = sbr.rel (0) target = $region53
  $region52: #{vuln_classifier_light_forward.1} parent=0 // pred_region
    _
  $region53: #{vuln_classifier_light_forward.1} parent=0 // pred_fallthru
    _
  // Predicated region
  $region54: #{vuln_classifier_light_forward.1} parent=0 // pred_check
    _
  $region55: #{vuln_classifier_light_forward.1} parent=0 // pred_check_branch
    %52 = sbr.rel (0) target = $region57
  $region56: #{vuln_classifier_light_forward.1} parent=0 // pred_region
    _
  $region57: #{vuln_classifier_light_forward.1} parent=0 // pred_fallthru
    _
  // Predicated region
  $region58: #{vuln_classifier_light_forward.1} parent=0 // pred_check
    _
  $region59: #{vuln_classifier_light_forward.1} parent=0 // pred_check_branch
    %54 = sbr.rel (0) target = $region61
  $region60: #{vuln_classifier_light_forward.1} parent=0 // pred_region
    _
  $region61: #{vuln_classifier_light_forward.1} parent=0 // pred_fallthru
    _
  // Predicated region
  $region62: #{vuln_classifier_light_forward.1} parent=0 // pred_check
    _
  $region63: #{vuln_classifier_light_forward.1} parent=0 // pred_check_branch
    %56 = sbr.rel (0) target = $region65
  $region64: #{vuln_classifier_light_forward.1} parent=0 // pred_region
    _
  $region65: #{vuln_classifier_light_forward.1} parent=0 // pred_fallthru
    _
  // Predicated region
  $region66: #{vuln_classifier_light_forward.1} parent=0 // pred_check
    _
  $region67: #{vuln_classifier_light_forward.1} parent=0 // pred_check_branch
    %58 = sbr.rel (0) target = $region69
  $region68: #{vuln_classifier_light_forward.1} parent=0 // pred_region
    _
  $region69: #{vuln_classifier_light_forward.1} parent=0 // pred_fallthru
    _
  // Predicated region
  $region70: #{vuln_classifier_light_forward.1} parent=0 // pred_check
    _
  $region71: #{vuln_classifier_light_forward.1} parent=0 // pred_check_branch
    %60 = sbr.rel (0) target = $region73
  $region72: #{vuln_classifier_light_forward.1} parent=0 // pred_region
    _
  $region73: #{vuln_classifier_light_forward.1} parent=0 // pred_fallthru
    _
  // Predicated region
  $region74: #{vuln_classifier_light_forward.1} parent=0 // pred_check
    _
  $region75: #{vuln_classifier_light_forward.1} parent=0 // pred_check_branch
    %62 = sbr.rel (0) target = $region77
  $region76: #{vuln_classifier_light_forward.1} parent=0 // pred_region
    _
  $region77: #{vuln_classifier_light_forward.1} parent=0 // pred_fallthru
    _
  // Predicated region
  $region78: #{vuln_classifier_light_forward.1} parent=0 // pred_check
    _
  $region79: #{vuln_classifier_light_forward.1} parent=0 // pred_check_branch
    %64 = sbr.rel (0) target = $region81
  $region80: #{vuln_classifier_light_forward.1} parent=0 // pred_region
    _
  $region81: #{vuln_classifier_light_forward.1} parent=0 // pred_fallthru
    _
  %v65 = vld [vmem:[%s0] sm:$0xff]
  %v66 = vld [vmem:[%s0 + $0x8] sm:$0xff]
  %v67 = vld [vmem:[%s6] sm:$0x1]
  %v68 = vld [vmem:[%s7] sm:$0x1]
  %vm69 = vcmask 785408
  %v70 = vsel %vm69, %v65, 0.0
  %71 = vadd.xlane.f32.xlu0 %v70
  %v72 = vpop.xlane.xlu0 %71
  %v73 = vsel %vm69, %v66, 0.0
  %74 = vadd.xlane.f32.xlu0 %v73
  %v75 = vpop.xlane.xlu0 %74
  %v76 = vrcp.pop 96.0
  %v77 = vmul.f32 %v72, %v76
  %v78 = vmul.f32 %v75, %v76
  %v79 = vsub.f32 %v65, %v77
  %v80 = vsub.f32 %v66, %v78
  %v81 = vmul.f32 %v79, %v79
  %v82 = vmul.f32 %v80, %v80
  %v83 = vsel %vm69, %v81, 0.0
  %84 = vadd.xlane.f32.xlu0 %v83
  %v85 = vpop.xlane.xlu0 %84
  %v86 = vsel %vm69, %v82, 0.0
  %87 = vadd.xlane.f32.xlu0 %v86
  %v88 = vpop.xlane.xlu0 %87
  %v89 = vmul.f32 %v85, %v76
  %v90 = vmul.f32 %v88, %v76
  %v91 = vadd.f32 %v89, 1e-12
  %v92 = vadd.f32 %v90, 1e-12
  %v93 = vrsqrt.pop %v91
  %v94 = vrsqrt.pop %v92
  %v95 = vmul.f32 %v79, %v93
  %v96 = vmul.f32 %v80, %v94
  %v98 = vlaneseq
  %v99 = vshrl.u32 %v98, 7
  %v100 = vsub.s32 0, %v99
  %v101 = vrot.slane %v67, %v100
  %v103 = vmul.f32 %v95, %v101
  %v104 = vmul.f32 %v96, %v101
  %v106 = vlaneseq
  %v107 = vshrl.u32 %v106, 7
  %v108 = vsub.s32 0, %v107
  %v109 = vrot.slane %v68, %v108
  %v111 = vadd.f32 %v103, %v109
  %v112 = vadd.f32 %v104, %v109
  %v113 = vld [vmem:[%s2] sm:$0xff]
  %v114 = vld [vmem:[%s2 + $0x8] sm:$0xff]
  %v115 = vld [vmem:[%s2 + $0x10] sm:$0xff]
  %v116 = vld [vmem:[%s2 + $0x18] sm:$0xff]
  %v117 = vld [vmem:[%s2 + $0x20] sm:$0xff]
  %v118 = vld [vmem:[%s2 + $0x28] sm:$0xff]
  %v119 = vld [vmem:[%s2 + $0x30] sm:$0xff]
  %v120 = vld [vmem:[%s2 + $0x38] sm:$0xff]
  %v121 = vld [vmem:[%s2 + $0x40] sm:$0xff]
  %v122 = vld [vmem:[%s2 + $0x48] sm:$0xff]
  %v123 = vld [vmem:[%s2 + $0x50] sm:$0xff]
  %v124 = vld [vmem:[%s2 + $0x58] sm:$0xff]
  %v125 = vld [vmem:[%s2 + $0x60] sm:$0xff]
  %v126 = vld [vmem:[%s2 + $0x68] sm:$0xff]
  %v127 = vld [vmem:[%s2 + $0x70] sm:$0xff]
  %v128 = vld [vmem:[%s2 + $0x78] sm:$0xff]
  %v129 = vld [vmem:[%s2 + $0x80] sm:$0xff]
  %v130 = vld [vmem:[%s2 + $0x88] sm:$0xff]
  %v131 = vld [vmem:[%s2 + $0x90] sm:$0xff]
  %v132 = vld [vmem:[%s2 + $0x98] sm:$0xff]
  %v133 = vld [vmem:[%s2 + $0xa0] sm:$0xff]
  %v134 = vld [vmem:[%s2 + $0xa8] sm:$0xff]
  %v135 = vld [vmem:[%s2 + $0xb0] sm:$0xff]
  %v136 = vld [vmem:[%s2 + $0xb8] sm:$0xff]
  %v137 = vld [vmem:[%s2 + $0xc0] sm:$0xff]
  %v138 = vld [vmem:[%s2 + $0xc8] sm:$0xff]
  %v139 = vld [vmem:[%s2 + $0xd0] sm:$0xff]
  %v140 = vld [vmem:[%s2 + $0xd8] sm:$0xff]
  %v141 = vld [vmem:[%s2 + $0xe0] sm:$0xff]
  %v142 = vld [vmem:[%s2 + $0xe8] sm:$0xff]
  %v143 = vld [vmem:[%s2 + $0xf0] sm:$0xff]
  %v144 = vld [vmem:[%s2 + $0xf8] sm:$0xff]
  %v145 = vld [vmem:[%s2 + $0x100] sm:$0xff]
  %v146 = vld [vmem:[%s2 + $0x108] sm:$0xff]
  %v147 = vld [vmem:[%s2 + $0x110] sm:$0xff]
  %v148 = vld [vmem:[%s2 + $0x118] sm:$0xff]
  %v149 = vld [vmem:[%s3] sm:$0x7]
  %v151 = vlaneseq
  %v152 = vshrl.u32 %v151, 7
  %v153 = vsub.s32 0, %v152
  %v154 = vrot.slane %v149, %v153
  %v155 = vlaneseq
  %v156 = vshrl.u32 %v155, 7
  %v157 = vsub.s32 1, %v156
  %v158 = vrot.slane %v149, %v157
  %v159 = vlaneseq
  %v160 = vshrl.u32 %v159, 7
  %v161 = vsub.s32 2, %v160
  %v162 = vrot.slane %v149, %v161
  %v167 = vsel %vm69, %v111, 0
  %v170 = vsel %vm69, %v112, 0
  %172 = vmatprep.subr.mxu0 %v114
  %173 = vmatpush1.msra.mxu0 %v113
  %174 = vmatprep.subr.mxu0 %v117
  %175 = vmatpush1.msra.mxu0 %v116
  %176 = vmatprep.subr.mxu0 %v120
  %177 = vmatpush1.msra.mxu0 %v119
  %178 = vmatprep.subr.mxu0 %v123
  %179 = vmatpush1.msra.mxu0 %v122
  %180 = vmatprep.subr.mxu0 %v126
  %181 = vmatpush1.msra.mxu0 %v125
  %182 = vmatprep.subr.mxu0 %v129
  %183 = vmatpush1.msra.mxu0 %v128
  %184 = vmatprep.subr.mxu0 %v132
  %185 = vmatpush1.msra.mxu0 %v131
  %186 = vmatprep.subr.mxu0 %v135
  %187 = vmatpush1.msra.mxu0 %v134
  %188 = vmatprep.subr.mxu0 %v138
  %189 = vmatpush1.msra.mxu0 %v137
  %190 = vmatprep.subr.mxu0 %v141
  %191 = vmatpush1.msra.mxu0 %v140
  %192 = vmatprep.subr.mxu0 %v144
  %193 = vmatpush1.msra.mxu0 %v143
  %194 = vmatprep.subr.mxu0 %v147
  %195 = vmatpush1.msra.mxu0 %v146
  %196 = vmatprep.subr.mxu0 0.0
  %197 = vmatpush1.msra.mxu0 0.0
  %198 = vmatprep.subr.mxu0 0.0
  %199 = vmatpush1.msra.mxu0 0.0
  %200 = vmatprep.subr.mxu0 0.0
  %201 = vmatpush1.msra.mxu0 0.0
  %202 = vmatprep.subr.mxu0 0.0
  %203 = vmatpush1.msra.mxu0 0.0
  %204 = vmatprep.subr.mxu0 0.0
  %205 = vmatpush1.msra.mxu0 0.0
  %206 = vmatprep.subr.mxu0 0.0
  %207 = vmatpush1.msra.mxu0 0.0
  %208 = vmatprep.subr.mxu0 0.0
  %209 = vmatpush1.msra.mxu0 0.0
  %210 = vmatprep.subr.mxu0 0.0
  %211 = vmatpush1.msra.mxu0 0.0
  %212 = vmatprep.subr.mxu0 0.0
  %213 = vmatpush1.msra.mxu0 0.0
  %214 = vmatprep.subr.mxu0 0.0
  %215 = vmatpush1.msra.mxu0 0.0
  %216 = vmatprep.subr.mxu0 0.0
  %217 = vmatpush1.msra.mxu0 0.0
  %218 = vmatprep.subr.mxu0 0.0
  %219 = vmatpush1.msra.mxu0 0.0
  %220 = vmatprep.subr.mxu0 0.0
  %221 = vmatpush1.msra.mxu0 0.0
  %222 = vmatprep.subr.mxu0 0.0
  %223 = vmatpush1.msra.mxu0 0.0
  %224 = vmatprep.subr.mxu0 0.0
  %225 = vmatpush1.msra.mxu0 0.0
  %226 = vmatprep.subr.mxu0 0.0
  %227 = vmatpush1.msra.mxu0 0.0
  %228 = vmatprep.subr.mxu0 0.0
  %229 = vmatpush1.msra.mxu0 0.0
  %230 = vmatprep.subr.mxu0 0.0
  %231 = vmatpush1.msra.mxu0 0.0
  %232 = vmatprep.subr.mxu0 0.0
  %233 = vmatpush1.msra.mxu0 0.0
  %234 = vmatprep.subr.mxu0 0.0
  %235 = vmatpush1.msra.mxu0 0.0
  %236 = vmatprep.mubr.f32.mxu0 0.0
  %237 = vmatmul.mubr.f32.gmra.mrb[0].mxu0 %v167
  %v238 = vpop.f32.mrb[0].mxu0
  %v239 = vadd.f32 %v154, %v238
  %v240 = vpop.f32.mrb[0].mxu0
  %v241 = vadd.f32 %v158, %v240
  %242 = vmatprep.mubr.f32.mxu0 0.0
  %243 = vmatmul.mubr.f32.gmra.mrb[0].mxu0 %v170
  %v244 = vpop.f32.mrb[0].mxu0
  %v245 = vadd.f32 %v154, %v244
  %v246 = vpop.f32.mrb[0].mxu0
  %v247 = vadd.f32 %v158, %v246
  %248 = vdwg.mxu0
  %249 = vmatprep.subr.mxu0 0.0
  %250 = vmatpush1.msra.mxu0 %v115
  %251 = vmatprep.subr.mxu0 0.0
  %252 = vmatpush1.msra.mxu0 %v118
  %253 = vmatprep.subr.mxu0 0.0
  %254 = vmatpush1.msra.mxu0 %v121
  %255 = vmatprep.subr.mxu0 0.0
  %256 = vmatpush1.msra.mxu0 %v124
  %257 = vmatprep.subr.mxu0 0.0
  %258 = vmatpush1.msra.mxu0 %v127
  %259 = vmatprep.subr.mxu0 0.0
  %260 = vmatpush1.msra.mxu0 %v130
  %261 = vmatprep.subr.mxu0 0.0
  %262 = vmatpush1.msra.mxu0 %v133
  %263 = vmatprep.subr.mxu0 0.0
  %264 = vmatpush1.msra.mxu0 %v136
  %265 = vmatprep.subr.mxu0 0.0
  %266 = vmatpush1.msra.mxu0 %v139
  %267 = vmatprep.subr.mxu0 0.0
  %268 = vmatpush1.msra.mxu0 %v142
  %269 = vmatprep.subr.mxu0 0.0
  %270 = vmatpush1.msra.mxu0 %v145
  %271 = vmatprep.subr.mxu0 0.0
  %272 = vmatpush1.msra.mxu0 %v148
  %273 = vmatprep.subr.mxu0 0.0
  %274 = vmatpush1.msra.mxu0 0.0
  %275 = vmatprep.subr.mxu0 0.0
  %276 = vmatpush1.msra.mxu0 0.0
  %277 = vmatprep.subr.mxu0 0.0
  %278 = vmatpush1.msra.mxu0 0.0
  %279 = vmatprep.subr.mxu0 0.0
  %280 = vmatpush1.msra.mxu0 0.0
  %281 = vmatprep.subr.mxu0 0.0
  %282 = vmatpush1.msra.mxu0 0.0
  %283 = vmatprep.subr.mxu0 0.0
  %284 = vmatpush1.msra.mxu0 0.0
  %285 = vmatprep.subr.mxu0 0.0
  %286 = vmatpush1.msra.mxu0 0.0
  %287 = vmatprep.subr.mxu0 0.0
  %288 = vmatpush1.msra.mxu0 0.0
  %289 = vmatprep.subr.mxu0 0.0
  %290 = vmatpush1.msra.mxu0 0.0
  %291 = vmatprep.subr.mxu0 0.0
  %292 = vmatpush1.msra.mxu0 0.0
  %293 = vmatprep.subr.mxu0 0.0
  %294 = vmatpush1.msra.mxu0 0.0
  %295 = vmatprep.subr.mxu0 0.0
  %296 = vmatpush1.msra.mxu0 0.0
  %297 = vmatprep.subr.mxu0 0.0
  %298 = vmatpush1.msra.mxu0 0.0
  %299 = vmatprep.subr.mxu0 0.0
  %300 = vmatpush1.msra.mxu0 0.0
  %301 = vmatprep.subr.mxu0 0.0
  %302 = vmatpush1.msra.mxu0 0.0
  %303 = vmatprep.subr.mxu0 0.0
  %304 = vmatpush1.msra.mxu0 0.0
  %305 = vmatprep.subr.mxu0 0.0
  %306 = vmatpush1.msra.mxu0 0.0
  %307 = vmatprep.subr.mxu0 0.0
  %308 = vmatpush1.msra.mxu0 0.0
  %309 = vmatprep.subr.mxu0 0.0
  %310 = vmatpush1.msra.mxu0 0.0
  %311 = vmatprep.subr.mxu0 0.0
  %312 = vmatpush1.msra.mxu0 0.0
  %313 = vmatprep.mubr.f32.mxu0 0.0
  %314 = vmatmul.mubr.f32.gmra.mrb[0].mxu0 %v167
  %v315 = vpop.f32.mrb[0].mxu0
  %v316 = vadd.f32 %v162, %v315
  %v317 = vpop.f32.mrb[0].mxu0
  %318 = vmatprep.mubr.f32.mxu0 0.0
  %319 = vmatmul.mubr.f32.gmra.mrb[0].mxu0 %v170
  %v320 = vpop.f32.mrb[0].mxu0
  %v321 = vadd.f32 %v162, %v320
  %v322 = vpop.f32.mrb[0].mxu0
  %323 = vdwg.mxu0
  %v324 = vld [vmem:[%s1] sm:$0x3]
  %v325 = vsub.f32 1.0, %v324
  %v326 = vmul.f32 %v325, -10000.0
  %328 = vrot.lane.b32.xlu0 %v239, 32
  %v329 = vpop.permute.xlu0 %328
  %vm330 = vcmask 130048
  %v331 = vsel %vm330, %v239, 0
  %v333 = vsel %vm330, %v329, 0
  %335 = vmatprep.subr.mxu0 0.0
  %336 = vmatpush1.xpose.msra.mxu0 %v333
  %337 = vmatprep.subr.mxu0 0.0
  %338 = vmatpush1.xpose.msra.mxu0 0.0
  %339 = vmatprep.subr.mxu0 0.0
  %340 = vmatpush1.xpose.msra.mxu0 0.0
  %341 = vmatprep.subr.mxu0 0.0
  %342 = vmatpush1.xpose.msra.mxu0 0.0
  %343 = vmatprep.subr.mxu0 0.0
  %344 = vmatpush1.xpose.msra.mxu0 0.0
  %345 = vmatprep.subr.mxu0 0.0
  %346 = vmatpush1.xpose.msra.mxu0 0.0
  %347 = vmatprep.subr.mxu0 0.0
  %348 = vmatpush1.xpose.msra.mxu0 0.0
  %349 = vmatprep.subr.mxu0 0.0
  %350 = vmatpush1.xpose.msra.mxu0 0.0
  %351 = vmatprep.subr.mxu0 0.0
  %352 = vmatpush1.xpose.msra.mxu0 0.0
  %353 = vmatprep.subr.mxu0 0.0
  %354 = vmatpush1.xpose.msra.mxu0 0.0
  %355 = vmatprep.subr.mxu0 0.0
  %356 = vmatpush1.xpose.msra.mxu0 0.0
  %357 = vmatprep.subr.mxu0 0.0
  %358 = vmatpush1.xpose.msra.mxu0 0.0
  %359 = vmatprep.subr.mxu0 0.0
  %360 = vmatpush1.xpose.msra.mxu0 0.0
  %361 = vmatprep.subr.mxu0 0.0
  %362 = vmatpush1.xpose.msra.mxu0 0.0
  %363 = vmatprep.subr.mxu0 0.0
  %364 = vmatpush1.xpose.msra.mxu0 0.0
  %365 = vmatprep.subr.mxu0 0.0
  %366 = vmatpush1.xpose.msra.mxu0 0.0
  %367 = vmatprep.subr.mxu0 0.0
  %368 = vmatpush1.xpose.msra.mxu0 0.0
  %369 = vmatprep.subr.mxu0 0.0
  %370 = vmatpush1.xpose.msra.mxu0 0.0
  %371 = vmatprep.subr.mxu0 0.0
  %372 = vmatpush1.xpose.msra.mxu0 0.0
  %373 = vmatprep.subr.mxu0 0.0
  %374 = vmatpush1.xpose.msra.mxu0 0.0
  %375 = vmatprep.subr.mxu0 0.0
  %376 = vmatpush1.xpose.msra.mxu0 0.0
  %377 = vmatprep.subr.mxu0 0.0
  %378 = vmatpush1.xpose.msra.mxu0 0.0
  %379 = vmatprep.subr.mxu0 0.0
  %380 = vmatpush1.xpose.msra.mxu0 0.0
  %381 = vmatprep.subr.mxu0 0.0
  %382 = vmatpush1.xpose.msra.mxu0 0.0
  %383 = vmatprep.subr.mxu0 0.0
  %384 = vmatpush1.xpose.msra.mxu0 0.0
  %385 = vmatprep.subr.mxu0 0.0
  %386 = vmatpush1.xpose.msra.mxu0 0.0
  %387 = vmatprep.subr.mxu0 0.0
  %388 = vmatpush1.xpose.msra.mxu0 0.0
  %389 = vmatprep.subr.mxu0 0.0
  %390 = vmatpush1.xpose.msra.mxu0 0.0
  %391 = vmatprep.subr.mxu0 0.0
  %392 = vmatpush1.xpose.msra.mxu0 0.0
  %393 = vmatprep.subr.mxu0 0.0
  %394 = vmatpush1.xpose.msra.mxu0 0.0
  %395 = vmatprep.subr.mxu0 0.0
  %396 = vmatpush1.xpose.msra.mxu0 0.0
  %397 = vmatprep.subr.mxu0 0.0
  %398 = vmatpush1.xpose.msra.mxu0 0.0
  %399 = vmatprep.mubr.f32.mxu0 0.0
  %400 = vmatmul.mubr.f32.gmra.mrb[0].mxu0 %v331
  %v401 = vpop.f32.mrb[0].mxu0
  %v402 = vadd.f32 0.0, %v401
  %v403 = vpop.f32.mrb[0].mxu0
  %404 = vdwg.mxu0
  %v405 = vmul.f32 %v402, 0.25
  %v406 = vlaneseq
  %v407 = vshrl.u32 %v406, 7
  %v408 = vsub.s32 0, %v407
  %v409 = vrot.slane %v326, %v408
  %v410 = vadd.f32 %v405, %v409
  %vm411 = vcmask 64512
  %v412 = vsel %vm411, %v410, -inf
  %413 = vmax.xlane.f32.xlu0 %v412
  %v414 = vpop.xlane.xlu0 %413
  %v415 = vsub.f32 %v410, %v414
  %v416 = vmul.f32 %v415, 1.442695
  %v417 = vpow.pop %v416
  %v418 = vsel %vm411, %v417, 0.0
  %419 = vadd.xlane.f32.xlu0 %v418
  %v420 = vpop.xlane.xlu0 %419
  %v421 = vrcp.pop %v420
  %v422 = vmul.f32 %v417, %v421
  %424 = vrot.lane.b32.xlu0 %v241, 64
  %v425 = vpop.permute.xlu0 %424
  %v428 = vsel %vm411, %v422, 0
  %430 = vmatprep.subr.mxu0 0.0
  %431 = vmatpush1.msra.mxu0 %v425
  %432 = vmatprep.subr.mxu0 0.0
  %433 = vmatpush1.msra.mxu0 0.0
  %434 = vmatprep.subr.mxu0 0.0
  %435 = vmatpush1.msra.mxu0 0.0
  %436 = vmatprep.subr.mxu0 0.0
  %437 = vmatpush1.msra.mxu0 0.0
  %438 = vmatprep.subr.mxu0 0.0
  %439 = vmatpush1.msra.mxu0 0.0
  %440 = vmatprep.subr.mxu0 0.0
  %441 = vmatpush1.msra.mxu0 0.0
  %442 = vmatprep.subr.mxu0 0.0
  %443 = vmatpush1.msra.mxu0 0.0
  %444 = vmatprep.subr.mxu0 0.0
  %445 = vmatpush1.msra.mxu0 0.0
  %446 = vmatprep.subr.mxu0 0.0
  %447 = vmatpush1.msra.mxu0 0.0
  %448 = vmatprep.subr.mxu0 0.0
  %449 = vmatpush1.msra.mxu0 0.0
  %450 = vmatprep.subr.mxu0 0.0
  %451 = vmatpush1.msra.mxu0 0.0
  %452 = vmatprep.subr.mxu0 0.0
  %453 = vmatpush1.msra.mxu0 0.0
  %454 = vmatprep.subr.mxu0 0.0
  %455 = vmatpush1.msra.mxu0 0.0
  %456 = vmatprep.subr.mxu0 0.0
  %457 = vmatpush1.msra.mxu0 0.0
  %458 = vmatprep.subr.mxu0 0.0
  %459 = vmatpush1.msra.mxu0 0.0
  %460 = vmatprep.subr.mxu0 0.0
  %461 = vmatpush1.msra.mxu0 0.0
  %462 = vmatprep.subr.mxu0 0.0
  %463 = vmatpush1.msra.mxu0 0.0
  %464 = vmatprep.subr.mxu0 0.0
  %465 = vmatpush1.msra.mxu0 0.0
  %466 = vmatprep.subr.mxu0 0.0
  %467 = vmatpush1.msra.mxu0 0.0
  %468 = vmatprep.subr.mxu0 0.0
  %469 = vmatpush1.msra.mxu0 0.0
  %470 = vmatprep.subr.mxu0 0.0
  %471 = vmatpush1.msra.mxu0 0.0
  %472 = vmatprep.subr.mxu0 0.0
  %473 = vmatpush1.msra.mxu0 0.0
  %474 = vmatprep.subr.mxu0 0.0
  %475 = vmatpush1.msra.mxu0 0.0
  %476 = vmatprep.subr.mxu0 0.0
  %477 = vmatpush1.msra.mxu0 0.0
  %478 = vmatprep.subr.mxu0 0.0
  %479 = vmatpush1.msra.mxu0 0.0
  %480 = vmatprep.subr.mxu0 0.0
  %481 = vmatpush1.msra.mxu0 0.0
  %482 = vmatprep.subr.mxu0 0.0
  %483 = vmatpush1.msra.mxu0 0.0
  %484 = vmatprep.subr.mxu0 0.0
  %485 = vmatpush1.msra.mxu0 0.0
  %486 = vmatprep.subr.mxu0 0.0
  %487 = vmatpush1.msra.mxu0 0.0
  %488 = vmatprep.subr.mxu0 0.0
  %489 = vmatpush1.msra.mxu0 0.0
  %490 = vmatprep.subr.mxu0 0.0
  %491 = vmatpush1.msra.mxu0 0.0
  %492 = vmatprep.subr.mxu0 0.0
  %493 = vmatpush1.msra.mxu0 0.0
  %494 = vmatprep.mubr.f32.mxu0 0.0
  %495 = vmatmul.mubr.f32.gmra.mrb[0].mxu0 %v428
  %v496 = vpop.f32.mrb[0].mxu0
  %v497 = vadd.f32 0.0, %v496
  %v498 = vpop.f32.mrb[0].mxu0
  %499 = vdwg.mxu0
  %500 = vst.msk [vmem:[#allocation2] sm:$0xff] %vm330, %v497
  %501 = vrot.lane.b32.xlu0 %v239, 112
  %v502 = vpop.permute.xlu0 %501
  %503 = vrot.lane.b32.xlu0 %v239, 16
  %v504 = vpop.permute.xlu0 %503
  %v505 = vsel %vm330, %v502, 0
  %v507 = vsel %vm330, %v504, 0
  %509 = vmatprep.subr.mxu0 0.0
  %510 = vmatpush1.xpose.msra.mxu0 %v507
  %511 = vmatprep.subr.mxu0 0.0
  %512 = vmatpush1.xpose.msra.mxu0 0.0
  %513 = vmatprep.subr.mxu0 0.0
  %514 = vmatpush1.xpose.msra.mxu0 0.0
  %515 = vmatprep.subr.mxu0 0.0
  %516 = vmatpush1.xpose.msra.mxu0 0.0
  %517 = vmatprep.subr.mxu0 0.0
  %518 = vmatpush1.xpose.msra.mxu0 0.0
  %519 = vmatprep.subr.mxu0 0.0
  %520 = vmatpush1.xpose.msra.mxu0 0.0
  %521 = vmatprep.subr.mxu0 0.0
  %522 = vmatpush1.xpose.msra.mxu0 0.0
  %523 = vmatprep.subr.mxu0 0.0
  %524 = vmatpush1.xpose.msra.mxu0 0.0
  %525 = vmatprep.subr.mxu0 0.0
  %526 = vmatpush1.xpose.msra.mxu0 0.0
  %527 = vmatprep.subr.mxu0 0.0
  %528 = vmatpush1.xpose.msra.mxu0 0.0
  %529 = vmatprep.subr.mxu0 0.0
  %530 = vmatpush1.xpose.msra.mxu0 0.0
  %531 = vmatprep.subr.mxu0 0.0
  %532 = vmatpush1.xpose.msra.mxu0 0.0
  %533 = vmatprep.subr.mxu0 0.0
  %534 = vmatpush1.xpose.msra.mxu0 0.0
  %535 = vmatprep.subr.mxu0 0.0
  %536 = vmatpush1.xpose.msra.mxu0 0.0
  %537 = vmatprep.subr.mxu0 0.0
  %538 = vmatpush1.xpose.msra.mxu0 0.0
  %539 = vmatprep.subr.mxu0 0.0
  %540 = vmatpush1.xpose.msra.mxu0 0.0
  %541 = vmatprep.subr.mxu0 0.0
  %542 = vmatpush1.xpose.msra.mxu0 0.0
  %543 = vmatprep.subr.mxu0 0.0
  %544 = vmatpush1.xpose.msra.mxu0 0.0
  %545 = vmatprep.subr.mxu0 0.0
  %546 = vmatpush1.xpose.msra.mxu0 0.0
  %547 = vmatprep.subr.mxu0 0.0
  %548 = vmatpush1.xpose.msra.mxu0 0.0
  %549 = vmatprep.subr.mxu0 0.0
  %550 = vmatpush1.xpose.msra.mxu0 0.0
  %551 = vmatprep.subr.mxu0 0.0
  %552 = vmatpush1.xpose.msra.mxu0 0.0
  %553 = vmatprep.subr.mxu0 0.0
  %554 = vmatpush1.xpose.msra.mxu0 0.0
  %555 = vmatprep.subr.mxu0 0.0
  %556 = vmatpush1.xpose.msra.mxu0 0.0
  %557 = vmatprep.subr.mxu0 0.0
  %558 = vmatpush1.xpose.msra.mxu0 0.0
  %559 = vmatprep.subr.mxu0 0.0
  %560 = vmatpush1.xpose.msra.mxu0 0.0
  %561 = vmatprep.subr.mxu0 0.0
  %562 = vmatpush1.xpose.msra.mxu0 0.0
  %563 = vmatprep.subr.mxu0 0.0
  %564 = vmatpush1.xpose.msra.mxu0 0.0
  %565 = vmatprep.subr.mxu0 0.0
  %566 = vmatpush1.xpose.msra.mxu0 0.0
  %567 = vmatprep.subr.mxu0 0.0
  %568 = vmatpush1.xpose.msra.mxu0 0.0
  %569 = vmatprep.subr.mxu0 0.0
  %570 = vmatpush1.xpose.msra.mxu0 0.0
  %571 = vmatprep.subr.mxu0 0.0
  %572 = vmatpush1.xpose.msra.mxu0 0.0
  %573 = vmatprep.mubr.f32.mxu0 0.0
  %574 = vmatmul.mubr.f32.gmra.mrb[0].mxu0 %v505
  %v575 = vpop.f32.mrb[0].mxu0
  %v576 = vadd.f32 0.0, %v575
  %v577 = vpop.f32.mrb[0].mxu0
  %578 = vdwg.mxu0
  %v579 = vmul.f32 %v576, 0.25
  %v580 = vadd.f32 %v579, %v409
  %v581 = vsel %vm411, %v580, -inf
  %582 = vmax.xlane.f32.xlu0 %v581
  %v583 = vpop.xlane.xlu0 %582
  %v584 = vsub.f32 %v580, %v583
  %v585 = vmul.f32 %v584, 1.442695
  %v586 = vpow.pop %v585
  %v587 = vsel %vm411, %v586, 0.0
  %588 = vadd.xlane.f32.xlu0 %v587
  %v589 = vpop.xlane.xlu0 %588
  %v590 = vrcp.pop %v589
  %v591 = vmul.f32 %v586, %v590
  %592 = vrot.lane.b32.xlu0 %v241, 48
  %v593 = vpop.permute.xlu0 %592
  %v596 = vsel %vm411, %v591, 0
  %598 = vmatprep.subr.mxu0 0.0
  %599 = vmatpush1.msra.mxu0 %v593
  %600 = vmatprep.subr.mxu0 0.0
  %601 = vmatpush1.msra.mxu0 0.0
  %602 = vmatprep.subr.mxu0 0.0
  %603 = vmatpush1.msra.mxu0 0.0
  %604 = vmatprep.subr.mxu0 0.0
  %605 = vmatpush1.msra.mxu0 0.0
  %606 = vmatprep.subr.mxu0 0.0
  %607 = vmatpush1.msra.mxu0 0.0
  %608 = vmatprep.subr.mxu0 0.0
  %609 = vmatpush1.msra.mxu0 0.0
  %610 = vmatprep.subr.mxu0 0.0
  %611 = vmatpush1.msra.mxu0 0.0
  %612 = vmatprep.subr.mxu0 0.0
  %613 = vmatpush1.msra.mxu0 0.0
  %614 = vmatprep.subr.mxu0 0.0
  %615 = vmatpush1.msra.mxu0 0.0
  %616 = vmatprep.subr.mxu0 0.0
  %617 = vmatpush1.msra.mxu0 0.0
  %618 = vmatprep.subr.mxu0 0.0
  %619 = vmatpush1.msra.mxu0 0.0
  %620 = vmatprep.subr.mxu0 0.0
  %621 = vmatpush1.msra.mxu0 0.0
  %622 = vmatprep.subr.mxu0 0.0
  %623 = vmatpush1.msra.mxu0 0.0
  %624 = vmatprep.subr.mxu0 0.0
  %625 = vmatpush1.msra.mxu0 0.0
  %626 = vmatprep.subr.mxu0 0.0
  %627 = vmatpush1.msra.mxu0 0.0
  %628 = vmatprep.subr.mxu0 0.0
  %629 = vmatpush1.msra.mxu0 0.0
  %630 = vmatprep.subr.mxu0 0.0
  %631 = vmatpush1.msra.mxu0 0.0
  %632 = vmatprep.subr.mxu0 0.0
  %633 = vmatpush1.msra.mxu0 0.0
  %634 = vmatprep.subr.mxu0 0.0
  %635 = vmatpush1.msra.mxu0 0.0
  %636 = vmatprep.subr.mxu0 0.0
  %637 = vmatpush1.msra.mxu0 0.0
  %638 = vmatprep.subr.mxu0 0.0
  %639 = vmatpush1.msra.mxu0 0.0
  %640 = vmatprep.subr.mxu0 0.0
  %641 = vmatpush1.msra.mxu0 0.0
  %642 = vmatprep.subr.mxu0 0.0
  %643 = vmatpush1.msra.mxu0 0.0
  %644 = vmatprep.subr.mxu0 0.0
  %645 = vmatpush1.msra.mxu0 0.0
  %646 = vmatprep.subr.mxu0 0.0
  %647 = vmatpush1.msra.mxu0 0.0
  %648 = vmatprep.subr.mxu0 0.0
  %649 = vmatpush1.msra.mxu0 0.0
  %650 = vmatprep.subr.mxu0 0.0
  %651 = vmatpush1.msra.mxu0 0.0
  %652 = vmatprep.subr.mxu0 0.0
  %653 = vmatpush1.msra.mxu0 0.0
  %654 = vmatprep.subr.mxu0 0.0
  %655 = vmatpush1.msra.mxu0 0.0
  %656 = vmatprep.subr.mxu0 0.0
  %657 = vmatpush1.msra.mxu0 0.0
  %658 = vmatprep.subr.mxu0 0.0
  %659 = vmatpush1.msra.mxu0 0.0
  %660 = vmatprep.subr.mxu0 0.0
  %661 = vmatpush1.msra.mxu0 0.0
  %662 = vmatprep.mubr.f32.mxu0 0.0
  %663 = vmatmul.mubr.f32.gmra.mrb[0].mxu0 %v596
  %v664 = vpop.f32.mrb[0].mxu0
  %v665 = vadd.f32 0.0, %v664
  %v666 = vpop.f32.mrb[0].mxu0
  %667 = vdwg.mxu0
  %669 = vrot.lane.b32.xlu0 %v665, 16
  %v670 = vpop.permute.xlu0 %669
  %vm672 = vcmask 261248
  %673 = vst.msk [vmem:[#allocation2] sm:$0xff] %vm672, %v670
  %674 = vrot.lane.b32.xlu0 %v239, 96
  %v675 = vpop.permute.xlu0 %674
  %v676 = vsel %vm330, %v675, 0
  %v678 = vsel %vm330, %v241, 0
  %680 = vmatprep.subr.mxu0 0.0
  %681 = vmatpush1.xpose.msra.mxu0 %v678
  %682 = vmatprep.subr.mxu0 0.0
  %683 = vmatpush1.xpose.msra.mxu0 0.0
  %684 = vmatprep.subr.mxu0 0.0
  %685 = vmatpush1.xpose.msra.mxu0 0.0
  %686 = vmatprep.subr.mxu0 0.0
  %687 = vmatpush1.xpose.msra.mxu0 0.0
  %688 = vmatprep.subr.mxu0 0.0
  %689 = vmatpush1.xpose.msra.mxu0 0.0
  %690 = vmatprep.subr.mxu0 0.0
  %691 = vmatpush1.xpose.msra.mxu0 0.0
  %692 = vmatprep.subr.mxu0 0.0
  %693 = vmatpush1.xpose.msra.mxu0 0.0
  %694 = vmatprep.subr.mxu0 0.0
  %695 = vmatpush1.xpose.msra.mxu0 0.0
  %696 = vmatprep.subr.mxu0 0.0
  %697 = vmatpush1.xpose.msra.mxu0 0.0
  %698 = vmatprep.subr.mxu0 0.0
  %699 = vmatpush1.xpose.msra.mxu0 0.0
  %700 = vmatprep.subr.mxu0 0.0
  %701 = vmatpush1.xpose.msra.mxu0 0.0
  %702 = vmatprep.subr.mxu0 0.0
  %703 = vmatpush1.xpose.msra.mxu0 0.0
  %704 = vmatprep.subr.mxu0 0.0
  %705 = vmatpush1.xpose.msra.mxu0 0.0
  %706 = vmatprep.subr.mxu0 0.0
  %707 = vmatpush1.xpose.msra.mxu0 0.0
  %708 = vmatprep.subr.mxu0 0.0
  %709 = vmatpush1.xpose.msra.mxu0 0.0
  %710 = vmatprep.subr.mxu0 0.0
  %711 = vmatpush1.xpose.msra.mxu0 0.0
  %712 = vmatprep.subr.mxu0 0.0
  %713 = vmatpush1.xpose.msra.mxu0 0.0
  %714 = vmatprep.subr.mxu0 0.0
  %715 = vmatpush1.xpose.msra.mxu0 0.0
  %716 = vmatprep.subr.mxu0 0.0
  %717 = vmatpush1.xpose.msra.mxu0 0.0
  %718 = vmatprep.subr.mxu0 0.0
  %719 = vmatpush1.xpose.msra.mxu0 0.0
  %720 = vmatprep.subr.mxu0 0.0
  %721 = vmatpush1.xpose.msra.mxu0 0.0
  %722 = vmatprep.subr.mxu0 0.0
  %723 = vmatpush1.xpose.msra.mxu0 0.0
  %724 = vmatprep.subr.mxu0 0.0
  %725 = vmatpush1.xpose.msra.mxu0 0.0
  %726 = vmatprep.subr.mxu0 0.0
  %727 = vmatpush1.xpose.msra.mxu0 0.0
  %728 = vmatprep.subr.mxu0 0.0
  %729 = vmatpush1.xpose.msra.mxu0 0.0
  %730 = vmatprep.subr.mxu0 0.0
  %731 = vmatpush1.xpose.msra.mxu0 0.0
  %732 = vmatprep.subr.mxu0 0.0
  %733 = vmatpush1.xpose.msra.mxu0 0.0
  %734 = vmatprep.subr.mxu0 0.0
  %735 = vmatpush1.xpose.msra.mxu0 0.0
  %736 = vmatprep.subr.mxu0 0.0
  %737 = vmatpush1.xpose.msra.mxu0 0.0
  %738 = vmatprep.subr.mxu0 0.0
  %739 = vmatpush1.xpose.msra.mxu0 0.0
  %740 = vmatprep.subr.mxu0 0.0
  %741 = vmatpush1.xpose.msra.mxu0 0.0
  %742 = vmatprep.subr.mxu0 0.0
  %743 = vmatpush1.xpose.msra.mxu0 0.0
  %744 = vmatprep.mubr.f32.mxu0 0.0
  %745 = vmatmul.mubr.f32.gmra.mrb[0].mxu0 %v676
  %v746 = vpop.f32.mrb[0].mxu0
  %v747 = vadd.f32 0.0, %v746
  %v748 = vpop.f32.mrb[0].mxu0
  %749 = vdwg.mxu0
  %v750 = vmul.f32 %v747, 0.25
  %v751 = vadd.f32 %v750, %v409
  %v752 = vsel %vm411, %v751, -inf
  %753 = vmax.xlane.f32.xlu0 %v752
  %v754 = vpop.xlane.xlu0 %753
  %v755 = vsub.f32 %v751, %v754
  %v756 = vmul.f32 %v755, 1.442695
  %v757 = vpow.pop %v756
  %v758 = vsel %vm411, %v757, 0.0
  %759 = vadd.xlane.f32.xlu0 %v758
  %v760 = vpop.xlane.xlu0 %759
  %v761 = vrcp.pop %v760
  %v762 = vmul.f32 %v757, %v761
  %763 = vrot.lane.b32.xlu0 %v241, 32
  %v764 = vpop.permute.xlu0 %763
  %v767 = vsel %vm411, %v762, 0
  %769 = vmatprep.subr.mxu0 0.0
  %770 = vmatpush1.msra.mxu0 %v764
  %771 = vmatprep.subr.mxu0 0.0
  %772 = vmatpush1.msra.mxu0 0.0
  %773 = vmatprep.subr.mxu0 0.0
  %774 = vmatpush1.msra.mxu0 0.0
  %775 = vmatprep.subr.mxu0 0.0
  %776 = vmatpush1.msra.mxu0 0.0
  %777 = vmatprep.subr.mxu0 0.0
  %778 = vmatpush1.msra.mxu0 0.0
  %779 = vmatprep.subr.mxu0 0.0
  %780 = vmatpush1.msra.mxu0 0.0
  %781 = vmatprep.subr.mxu0 0.0
  %782 = vmatpush1.msra.mxu0 0.0
  %783 = vmatprep.subr.mxu0 0.0
  %784 = vmatpush1.msra.mxu0 0.0
  %785 = vmatprep.subr.mxu0 0.0
  %786 = vmatpush1.msra.mxu0 0.0
  %787 = vmatprep.subr.mxu0 0.0
  %788 = vmatpush1.msra.mxu0 0.0
  %789 = vmatprep.subr.mxu0 0.0
  %790 = vmatpush1.msra.mxu0 0.0
  %791 = vmatprep.subr.mxu0 0.0
  %792 = vmatpush1.msra.mxu0 0.0
  %793 = vmatprep.subr.mxu0 0.0
  %794 = vmatpush1.msra.mxu0 0.0
  %795 = vmatprep.subr.mxu0 0.0
  %796 = vmatpush1.msra.mxu0 0.0
  %797 = vmatprep.subr.mxu0 0.0
  %798 = vmatpush1.msra.mxu0 0.0
  %799 = vmatprep.subr.mxu0 0.0
  %800 = vmatpush1.msra.mxu0 0.0
  %801 = vmatprep.subr.mxu0 0.0
  %802 = vmatpush1.msra.mxu0 0.0
  %803 = vmatprep.subr.mxu0 0.0
  %804 = vmatpush1.msra.mxu0 0.0
  %805 = vmatprep.subr.mxu0 0.0
  %806 = vmatpush1.msra.mxu0 0.0
  %807 = vmatprep.subr.mxu0 0.0
  %808 = vmatpush1.msra.mxu0 0.0
  %809 = vmatprep.subr.mxu0 0.0
  %810 = vmatpush1.msra.mxu0 0.0
  %811 = vmatprep.subr.mxu0 0.0
  %812 = vmatpush1.msra.mxu0 0.0
  %813 = vmatprep.subr.mxu0 0.0
  %814 = vmatpush1.msra.mxu0 0.0
  %815 = vmatprep.subr.mxu0 0.0
  %816 = vmatpush1.msra.mxu0 0.0
  %817 = vmatprep.subr.mxu0 0.0
  %818 = vmatpush1.msra.mxu0 0.0
  %819 = vmatprep.subr.mxu0 0.0
  %820 = vmatpush1.msra.mxu0 0.0
  %821 = vmatprep.subr.mxu0 0.0
  %822 = vmatpush1.msra.mxu0 0.0
  %823 = vmatprep.subr.mxu0 0.0
  %824 = vmatpush1.msra.mxu0 0.0
  %825 = vmatprep.subr.mxu0 0.0
  %826 = vmatpush1.msra.mxu0 0.0
  %827 = vmatprep.subr.mxu0 0.0
  %828 = vmatpush1.msra.mxu0 0.0
  %829 = vmatprep.subr.mxu0 0.0
  %830 = vmatpush1.msra.mxu0 0.0
  %831 = vmatprep.subr.mxu0 0.0
  %832 = vmatpush1.msra.mxu0 0.0
  %833 = vmatprep.mubr.f32.mxu0 0.0
  %834 = vmatmul.mubr.f32.gmra.mrb[0].mxu0 %v767
  %v835 = vpop.f32.mrb[0].mxu0
  %v836 = vadd.f32 0.0, %v835
  %v837 = vpop.f32.mrb[0].mxu0
  %838 = vdwg.mxu0
  %840 = vrot.lane.b32.xlu0 %v836, 32
  %v841 = vpop.permute.xlu0 %840
  %vm843 = vcmask 392448
  %844 = vst.msk [vmem:[#allocation2] sm:$0xff] %vm843, %v841
  %845 = vrot.lane.b32.xlu0 %v239, 80
  %v846 = vpop.permute.xlu0 %845
  %847 = vrot.lane.b32.xlu0 %v241, 112
  %v848 = vpop.permute.xlu0 %847
  %v849 = vsel %vm330, %v846, 0
  %v851 = vsel %vm330, %v848, 0
  %853 = vmatprep.subr.mxu0 0.0
  %854 = vmatpush1.xpose.msra.mxu0 %v851
  %855 = vmatprep.subr.mxu0 0.0
  %856 = vmatpush1.xpose.msra.mxu0 0.0
  %857 = vmatprep.subr.mxu0 0.0
  %858 = vmatpush1.xpose.msra.mxu0 0.0
  %859 = vmatprep.subr.mxu0 0.0
  %860 = vmatpush1.xpose.msra.mxu0 0.0
  %861 = vmatprep.subr.mxu0 0.0
  %862 = vmatpush1.xpose.msra.mxu0 0.0
  %863 = vmatprep.subr.mxu0 0.0
  %864 = vmatpush1.xpose.msra.mxu0 0.0
  %865 = vmatprep.subr.mxu0 0.0
  %866 = vmatpush1.xpose.msra.mxu0 0.0
  %867 = vmatprep.subr.mxu0 0.0
  %868 = vmatpush1.xpose.msra.mxu0 0.0
  %869 = vmatprep.subr.mxu0 0.0
  %870 = vmatpush1.xpose.msra.mxu0 0.0
  %871 = vmatprep.subr.mxu0 0.0
  %872 = vmatpush1.xpose.msra.mxu0 0.0
  %873 = vmatprep.subr.mxu0 0.0
  %874 = vmatpush1.xpose.msra.mxu0 0.0
  %875 = vmatprep.subr.mxu0 0.0
  %876 = vmatpush1.xpose.msra.mxu0 0.0
  %877 = vmatprep.subr.mxu0 0.0
  %878 = vmatpush1.xpose.msra.mxu0 0.0
  %879 = vmatprep.subr.mxu0 0.0
  %880 = vmatpush1.xpose.msra.mxu0 0.0
  %881 = vmatprep.subr.mxu0 0.0
  %882 = vmatpush1.xpose.msra.mxu0 0.0
  %883 = vmatprep.subr.mxu0 0.0
  %884 = vmatpush1.xpose.msra.mxu0 0.0
  %885 = vmatprep.subr.mxu0 0.0
  %886 = vmatpush1.xpose.msra.mxu0 0.0
  %887 = vmatprep.subr.mxu0 0.0
  %888 = vmatpush1.xpose.msra.mxu0 0.0
  %889 = vmatprep.subr.mxu0 0.0
  %890 = vmatpush1.xpose.msra.mxu0 0.0
  %891 = vmatprep.subr.mxu0 0.0
  %892 = vmatpush1.xpose.msra.mxu0 0.0
  %893 = vmatprep.subr.mxu0 0.0
  %894 = vmatpush1.xpose.msra.mxu0 0.0
  %895 = vmatprep.subr.mxu0 0.0
  %896 = vmatpush1.xpose.msra.mxu0 0.0
  %897 = vmatprep.subr.mxu0 0.0
  %898 = vmatpush1.xpose.msra.mxu0 0.0
  %899 = vmatprep.subr.mxu0 0.0
  %900 = vmatpush1.xpose.msra.mxu0 0.0
  %901 = vmatprep.subr.mxu0 0.0
  %902 = vmatpush1.xpose.msra.mxu0 0.0
  %903 = vmatprep.subr.mxu0 0.0
  %904 = vmatpush1.xpose.msra.mxu0 0.0
  %905 = vmatprep.subr.mxu0 0.0
  %906 = vmatpush1.xpose.msra.mxu0 0.0
  %907 = vmatprep.subr.mxu0 0.0
  %908 = vmatpush1.xpose.msra.mxu0 0.0
  %909 = vmatprep.subr.mxu0 0.0
  %910 = vmatpush1.xpose.msra.mxu0 0.0
  %911 = vmatprep.subr.mxu0 0.0
  %912 = vmatpush1.xpose.msra.mxu0 0.0
  %913 = vmatprep.subr.mxu0 0.0
  %914 = vmatpush1.xpose.msra.mxu0 0.0
  %915 = vmatprep.subr.mxu0 0.0
  %916 = vmatpush1.xpose.msra.mxu0 0.0
  %917 = vmatprep.mubr.f32.mxu0 0.0
  %918 = vmatmul.mubr.f32.gmra.mrb[0].mxu0 %v849
  %v919 = vpop.f32.mrb[0].mxu0
  %v920 = vadd.f32 0.0, %v919
  %v921 = vpop.f32.mrb[0].mxu0
  %922 = vdwg.mxu0
  %v923 = vmul.f32 %v920, 0.25
  %v924 = vadd.f32 %v923, %v409
  %v925 = vsel %vm411, %v924, -inf
  %926 = vmax.xlane.f32.xlu0 %v925
  %v927 = vpop.xlane.xlu0 %926
  %v928 = vsub.f32 %v924, %v927
  %v929 = vmul.f32 %v928, 1.442695
  %v930 = vpow.pop %v929
  %v931 = vsel %vm411, %v930, 0.0
  %932 = vadd.xlane.f32.xlu0 %v931
  %v933 = vpop.xlane.xlu0 %932
  %v934 = vrcp.pop %v933
  %v935 = vmul.f32 %v930, %v934
  %936 = vrot.lane.b32.xlu0 %v241, 16
  %v937 = vpop.permute.xlu0 %936
  %v940 = vsel %vm411, %v935, 0
  %942 = vmatprep.subr.mxu0 0.0
  %943 = vmatpush1.msra.mxu0 %v937
  %944 = vmatprep.subr.mxu0 0.0
  %945 = vmatpush1.msra.mxu0 0.0
  %946 = vmatprep.subr.mxu0 0.0
  %947 = vmatpush1.msra.mxu0 0.0
  %948 = vmatprep.subr.mxu0 0.0
  %949 = vmatpush1.msra.mxu0 0.0
  %950 = vmatprep.subr.mxu0 0.0
  %951 = vmatpush1.msra.mxu0 0.0
  %952 = vmatprep.subr.mxu0 0.0
  %953 = vmatpush1.msra.mxu0 0.0
  %954 = vmatprep.subr.mxu0 0.0
  %955 = vmatpush1.msra.mxu0 0.0
  %956 = vmatprep.subr.mxu0 0.0
  %957 = vmatpush1.msra.mxu0 0.0
  %958 = vmatprep.subr.mxu0 0.0
  %959 = vmatpush1.msra.mxu0 0.0
  %960 = vmatprep.subr.mxu0 0.0
  %961 = vmatpush1.msra.mxu0 0.0
  %962 = vmatprep.subr.mxu0 0.0
  %963 = vmatpush1.msra.mxu0 0.0
  %964 = vmatprep.subr.mxu0 0.0
  %965 = vmatpush1.msra.mxu0 0.0
  %966 = vmatprep.subr.mxu0 0.0
  %967 = vmatpush1.msra.mxu0 0.0
  %968 = vmatprep.subr.mxu0 0.0
  %969 = vmatpush1.msra.mxu0 0.0
  %970 = vmatprep.subr.mxu0 0.0
  %971 = vmatpush1.msra.mxu0 0.0
  %972 = vmatprep.subr.mxu0 0.0
  %973 = vmatpush1.msra.mxu0 0.0
  %974 = vmatprep.subr.mxu0 0.0
  %975 = vmatpush1.msra.mxu0 0.0
  %976 = vmatprep.subr.mxu0 0.0
  %977 = vmatpush1.msra.mxu0 0.0
  %978 = vmatprep.subr.mxu0 0.0
  %979 = vmatpush1.msra.mxu0 0.0
  %980 = vmatprep.subr.mxu0 0.0
  %981 = vmatpush1.msra.mxu0 0.0
  %982 = vmatprep.subr.mxu0 0.0
  %983 = vmatpush1.msra.mxu0 0.0
  %984 = vmatprep.subr.mxu0 0.0
  %985 = vmatpush1.msra.mxu0 0.0
  %986 = vmatprep.subr.mxu0 0.0
  %987 = vmatpush1.msra.mxu0 0.0
  %988 = vmatprep.subr.mxu0 0.0
  %989 = vmatpush1.msra.mxu0 0.0
  %990 = vmatprep.subr.mxu0 0.0
  %991 = vmatpush1.msra.mxu0 0.0
  %992 = vmatprep.subr.mxu0 0.0
  %993 = vmatpush1.msra.mxu0 0.0
  %994 = vmatprep.subr.mxu0 0.0
  %995 = vmatpush1.msra.mxu0 0.0
  %996 = vmatprep.subr.mxu0 0.0
  %997 = vmatpush1.msra.mxu0 0.0
  %998 = vmatprep.subr.mxu0 0.0
  %999 = vmatpush1.msra.mxu0 0.0
  %1000 = vmatprep.subr.mxu0 0.0
  %1001 = vmatpush1.msra.mxu0 0.0
  %1002 = vmatprep.subr.mxu0 0.0
  %1003 = vmatpush1.msra.mxu0 0.0
  %1004 = vmatprep.subr.mxu0 0.0
  %1005 = vmatpush1.msra.mxu0 0.0
  %1006 = vmatprep.mubr.f32.mxu0 0.0
  %1007 = vmatmul.mubr.f32.gmra.mrb[0].mxu0 %v940
  %v1008 = vpop.f32.mrb[0].mxu0
  %v1009 = vadd.f32 0.0, %v1008
  %v1010 = vpop.f32.mrb[0].mxu0
  %1011 = vdwg.mxu0
  %1013 = vrot.lane.b32.xlu0 %v1009, 48
  %v1014 = vpop.permute.xlu0 %1013
  %vm1016 = vcmask 523648
  %1017 = vst.msk [vmem:[#allocation2] sm:$0xff] %vm1016, %v1014
  %1018 = vrot.lane.b32.xlu0 %v239, 64
  %v1019 = vpop.permute.xlu0 %1018
  %1020 = vrot.lane.b32.xlu0 %v241, 96
  %v1021 = vpop.permute.xlu0 %1020
  %v1022 = vsel %vm330, %v1019, 0
  %v1024 = vsel %vm330, %v1021, 0
  %1026 = vmatprep.subr.mxu0 0.0
  %1027 = vmatpush1.xpose.msra.mxu0 %v1024
  %1028 = vmatprep.subr.mxu0 0.0
  %1029 = vmatpush1.xpose.msra.mxu0 0.0
  %1030 = vmatprep.subr.mxu0 0.0
  %1031 = vmatpush1.xpose.msra.mxu0 0.0
  %1032 = vmatprep.subr.mxu0 0.0
  %1033 = vmatpush1.xpose.msra.mxu0 0.0
  %1034 = vmatprep.subr.mxu0 0.0
  %1035 = vmatpush1.xpose.msra.mxu0 0.0
  %1036 = vmatprep.subr.mxu0 0.0
  %1037 = vmatpush1.xpose.msra.mxu0 0.0
  %1038 = vmatprep.subr.mxu0 0.0
  %1039 = vmatpush1.xpose.msra.mxu0 0.0
  %1040 = vmatprep.subr.mxu0 0.0
  %1041 = vmatpush1.xpose.msra.mxu0 0.0
  %1042 = vmatprep.subr.mxu0 0.0
  %1043 = vmatpush1.xpose.msra.mxu0 0.0
  %1044 = vmatprep.subr.mxu0 0.0
  %1045 = vmatpush1.xpose.msra.mxu0 0.0
  %1046 = vmatprep.subr.mxu0 0.0
  %1047 = vmatpush1.xpose.msra.mxu0 0.0
  %1048 = vmatprep.subr.mxu0 0.0
  %1049 = vmatpush1.xpose.msra.mxu0 0.0
  %1050 = vmatprep.subr.mxu0 0.0
  %1051 = vmatpush1.xpose.msra.mxu0 0.0
  %1052 = vmatprep.subr.mxu0 0.0
  %1053 = vmatpush1.xpose.msra.mxu0 0.0
  %1054 = vmatprep.subr.mxu0 0.0
  %1055 = vmatpush1.xpose.msra.mxu0 0.0
  %1056 = vmatprep.subr.mxu0 0.0
  %1057 = vmatpush1.xpose.msra.mxu0 0.0
  %1058 = vmatprep.subr.mxu0 0.0
  %1059 = vmatpush1.xpose.msra.mxu0 0.0
  %1060 = vmatprep.subr.mxu0 0.0
  %1061 = vmatpush1.xpose.msra.mxu0 0.0
  %1062 = vmatprep.subr.mxu0 0.0
  %1063 = vmatpush1.xpose.msra.mxu0 0.0
  %1064 = vmatprep.subr.mxu0 0.0
  %1065 = vmatpush1.xpose.msra.mxu0 0.0
  %1066 = vmatprep.subr.mxu0 0.0
  %1067 = vmatpush1.xpose.msra.mxu0 0.0
  %1068 = vmatprep.subr.mxu0 0.0
  %1069 = vmatpush1.xpose.msra.mxu0 0.0
  %1070 = vmatprep.subr.mxu0 0.0
  %1071 = vmatpush1.xpose.msra.mxu0 0.0
  %1072 = vmatprep.subr.mxu0 0.0
  %1073 = vmatpush1.xpose.msra.mxu0 0.0
  %1074 = vmatprep.subr.mxu0 0.0
  %1075 = vmatpush1.xpose.msra.mxu0 0.0
  %1076 = vmatprep.subr.mxu0 0.0
  %1077 = vmatpush1.xpose.msra.mxu0 0.0
  %1078 = vmatprep.subr.mxu0 0.0
  %1079 = vmatpush1.xpose.msra.mxu0 0.0
  %1080 = vmatprep.subr.mxu0 0.0
  %1081 = vmatpush1.xpose.msra.mxu0 0.0
  %1082 = vmatprep.subr.mxu0 0.0
  %1083 = vmatpush1.xpose.msra.mxu0 0.0
  %1084 = vmatprep.subr.mxu0 0.0
  %1085 = vmatpush1.xpose.msra.mxu0 0.0
  %1086 = vmatprep.subr.mxu0 0.0
  %1087 = vmatpush1.xpose.msra.mxu0 0.0
  %1088 = vmatprep.subr.mxu0 0.0
  %1089 = vmatpush1.xpose.msra.mxu0 0.0
  %1090 = vmatprep.mubr.f32.mxu0 0.0
  %1091 = vmatmul.mubr.f32.gmra.mrb[0].mxu0 %v1022
  %v1092 = vpop.f32.mrb[0].mxu0
  %v1093 = vadd.f32 0.0, %v1092
  %v1094 = vpop.f32.mrb[0].mxu0
  %1095 = vdwg.mxu0
  %v1096 = vmul.f32 %v1093, 0.25
  %v1097 = vadd.f32 %v1096, %v409
  %v1098 = vsel %vm411, %v1097, -inf
  %1099 = vmax.xlane.f32.xlu0 %v1098
  %v1100 = vpop.xlane.xlu0 %1099
  %v1101 = vsub.f32 %v1097, %v1100
  %v1102 = vmul.f32 %v1101, 1.442695
  %v1103 = vpow.pop %v1102
  %v1104 = vsel %vm411, %v1103, 0.0
  %1105 = vadd.xlane.f32.xlu0 %v1104
  %v1106 = vpop.xlane.xlu0 %1105
  %v1107 = vrcp.pop %v1106
  %v1108 = vmul.f32 %v1103, %v1107
  %v1110 = vsel %vm411, %v1108, 0
  %1112 = vmatprep.subr.mxu0 0.0
  %1113 = vmatpush1.msra.mxu0 %v316
  %1114 = vmatprep.subr.mxu0 0.0
  %1115 = vmatpush1.msra.mxu0 0.0
  %1116 = vmatprep.subr.mxu0 0.0
  %1117 = vmatpush1.msra.mxu0 0.0
  %1118 = vmatprep.subr.mxu0 0.0
  %1119 = vmatpush1.msra.mxu0 0.0
  %1120 = vmatprep.subr.mxu0 0.0
  %1121 = vmatpush1.msra.mxu0 0.0
  %1122 = vmatprep.subr.mxu0 0.0
  %1123 = vmatpush1.msra.mxu0 0.0
  %1124 = vmatprep.subr.mxu0 0.0
  %1125 = vmatpush1.msra.mxu0 0.0
  %1126 = vmatprep.subr.mxu0 0.0
  %1127 = vmatpush1.msra.mxu0 0.0
  %1128 = vmatprep.subr.mxu0 0.0
  %1129 = vmatpush1.msra.mxu0 0.0
  %1130 = vmatprep.subr.mxu0 0.0
  %1131 = vmatpush1.msra.mxu0 0.0
  %1132 = vmatprep.subr.mxu0 0.0
  %1133 = vmatpush1.msra.mxu0 0.0
  %1134 = vmatprep.subr.mxu0 0.0
  %1135 = vmatpush1.msra.mxu0 0.0
  %1136 = vmatprep.subr.mxu0 0.0
  %1137 = vmatpush1.msra.mxu0 0.0
  %1138 = vmatprep.subr.mxu0 0.0
  %1139 = vmatpush1.msra.mxu0 0.0
  %1140 = vmatprep.subr.mxu0 0.0
  %1141 = vmatpush1.msra.mxu0 0.0
  %1142 = vmatprep.subr.mxu0 0.0
  %1143 = vmatpush1.msra.mxu0 0.0
  %1144 = vmatprep.subr.mxu0 0.0
  %1145 = vmatpush1.msra.mxu0 0.0
  %1146 = vmatprep.subr.mxu0 0.0
  %1147 = vmatpush1.msra.mxu0 0.0
  %1148 = vmatprep.subr.mxu0 0.0
  %1149 = vmatpush1.msra.mxu0 0.0
  %1150 = vmatprep.subr.mxu0 0.0
  %1151 = vmatpush1.msra.mxu0 0.0
  %1152 = vmatprep.subr.mxu0 0.0
  %1153 = vmatpush1.msra.mxu0 0.0
  %1154 = vmatprep.subr.mxu0 0.0
  %1155 = vmatpush1.msra.mxu0 0.0
  %1156 = vmatprep.subr.mxu0 0.0
  %1157 = vmatpush1.msra.mxu0 0.0
  %1158 = vmatprep.subr.mxu0 0.0
  %1159 = vmatpush1.msra.mxu0 0.0
  %1160 = vmatprep.subr.mxu0 0.0
  %1161 = vmatpush1.msra.mxu0 0.0
  %1162 = vmatprep.subr.mxu0 0.0
  %1163 = vmatpush1.msra.mxu0 0.0
  %1164 = vmatprep.subr.mxu0 0.0
  %1165 = vmatpush1.msra.mxu0 0.0
  %1166 = vmatprep.subr.mxu0 0.0
  %1167 = vmatpush1.msra.mxu0 0.0
  %1168 = vmatprep.subr.mxu0 0.0
  %1169 = vmatpush1.msra.mxu0 0.0
  %1170 = vmatprep.subr.mxu0 0.0
  %1171 = vmatpush1.msra.mxu0 0.0
  %1172 = vmatprep.subr.mxu0 0.0
  %1173 = vmatpush1.msra.mxu0 0.0
  %1174 = vmatprep.subr.mxu0 0.0
  %1175 = vmatpush1.msra.mxu0 0.0
  %1176 = vmatprep.mubr.f32.mxu0 0.0
  %1177 = vmatmul.mubr.f32.gmra.mrb[0].mxu0 %v1110
  %v1178 = vpop.f32.mrb[0].mxu0
  %v1179 = vadd.f32 0.0, %v1178
  %v1180 = vpop.f32.mrb[0].mxu0
  %1181 = vdwg.mxu0
  %1183 = vrot.lane.b32.xlu0 %v1179, 64
  %v1184 = vpop.permute.xlu0 %1183
  %vm1186 = vcmask 654848
  %1187 = vst.msk [vmem:[#allocation2] sm:$0xff] %vm1186, %v1184
  %1188 = vrot.lane.b32.xlu0 %v239, 48
  %v1189 = vpop.permute.xlu0 %1188
  %1190 = vrot.lane.b32.xlu0 %v241, 80
  %v1191 = vpop.permute.xlu0 %1190
  %v1192 = vsel %vm330, %v1189, 0
  %v1194 = vsel %vm330, %v1191, 0
  %1196 = vmatprep.subr.mxu0 0.0
  %1197 = vmatpush1.xpose.msra.mxu0 %v1194
  %1198 = vmatprep.subr.mxu0 0.0
  %1199 = vmatpush1.xpose.msra.mxu0 0.0
  %1200 = vmatprep.subr.mxu0 0.0
  %1201 = vmatpush1.xpose.msra.mxu0 0.0
  %1202 = vmatprep.subr.mxu0 0.0
  %1203 = vmatpush1.xpose.msra.mxu0 0.0
  %1204 = vmatprep.subr.mxu0 0.0
  %1205 = vmatpush1.xpose.msra.mxu0 0.0
  %1206 = vmatprep.subr.mxu0 0.0
  %1207 = vmatpush1.xpose.msra.mxu0 0.0
  %1208 = vmatprep.subr.mxu0 0.0
  %1209 = vmatpush1.xpose.msra.mxu0 0.0
  %1210 = vmatprep.subr.mxu0 0.0
  %1211 = vmatpush1.xpose.msra.mxu0 0.0
  %1212 = vmatprep.subr.mxu0 0.0
  %1213 = vmatpush1.xpose.msra.mxu0 0.0
  %1214 = vmatprep.subr.mxu0 0.0
  %1215 = vmatpush1.xpose.msra.mxu0 0.0
  %1216 = vmatprep.subr.mxu0 0.0
  %1217 = vmatpush1.xpose.msra.mxu0 0.0
  %1218 = vmatprep.subr.mxu0 0.0
  %1219 = vmatpush1.xpose.msra.mxu0 0.0
  %1220 = vmatprep.subr.mxu0 0.0
  %1221 = vmatpush1.xpose.msra.mxu0 0.0
  %1222 = vmatprep.subr.mxu0 0.0
  %1223 = vmatpush1.xpose.msra.mxu0 0.0
  %1224 = vmatprep.subr.mxu0 0.0
  %1225 = vmatpush1.xpose.msra.mxu0 0.0
  %1226 = vmatprep.subr.mxu0 0.0
  %1227 = vmatpush1.xpose.msra.mxu0 0.0
  %1228 = vmatprep.subr.mxu0 0.0
  %1229 = vmatpush1.xpose.msra.mxu0 0.0
  %1230 = vmatprep.subr.mxu0 0.0
  %1231 = vmatpush1.xpose.msra.mxu0 0.0
  %1232 = vmatprep.subr.mxu0 0.0
  %1233 = vmatpush1.xpose.msra.mxu0 0.0
  %1234 = vmatprep.subr.mxu0 0.0
  %1235 = vmatpush1.xpose.msra.mxu0 0.0
  %1236 = vmatprep.subr.mxu0 0.0
  %1237 = vmatpush1.xpose.msra.mxu0 0.0
  %1238 = vmatprep.subr.mxu0 0.0
  %1239 = vmatpush1.xpose.msra.mxu0 0.0
  %1240 = vmatprep.subr.mxu0 0.0
  %1241 = vmatpush1.xpose.msra.mxu0 0.0
  %1242 = vmatprep.subr.mxu0 0.0
  %1243 = vmatpush1.xpose.msra.mxu0 0.0
  %1244 = vmatprep.subr.mxu0 0.0
  %1245 = vmatpush1.xpose.msra.mxu0 0.0
  %1246 = vmatprep.subr.mxu0 0.0
  %1247 = vmatpush1.xpose.msra.mxu0 0.0
  %1248 = vmatprep.subr.mxu0 0.0
  %1249 = vmatpush1.xpose.msra.mxu0 0.0
  %1250 = vmatprep.subr.mxu0 0.0
  %1251 = vmatpush1.xpose.msra.mxu0 0.0
  %1252 = vmatprep.subr.mxu0 0.0
  %1253 = vmatpush1.xpose.msra.mxu0 0.0
  %1254 = vmatprep.subr.mxu0 0.0
  %1255 = vmatpush1.xpose.msra.mxu0 0.0
  %1256 = vmatprep.subr.mxu0 0.0
  %1257 = vmatpush1.xpose.msra.mxu0 0.0
  %1258 = vmatprep.subr.mxu0 0.0
  %1259 = vmatpush1.xpose.msra.mxu0 0.0
  %1260 = vmatprep.mubr.f32.mxu0 0.0
  %1261 = vmatmul.mubr.f32.gmra.mrb[0].mxu0 %v1192
  %v1262 = vpop.f32.mrb[0].mxu0
  %v1263 = vadd.f32 0.0, %v1262
  %v1264 = vpop.f32.mrb[0].mxu0
  %1265 = vdwg.mxu0
  %v1266 = vmul.f32 %v1263, 0.25
  %v1267 = vadd.f32 %v1266, %v409
  %v1268 = vsel %vm411, %v1267, -inf
  %1269 = vmax.xlane.f32.xlu0 %v1268
  %v1270 = vpop.xlane.xlu0 %1269
  %v1271 = vsub.f32 %v1267, %v1270
  %v1272 = vmul.f32 %v1271, 1.442695
  %v1273 = vpow.pop %v1272
  %v1274 = vsel %vm411, %v1273, 0.0
  %1275 = vadd.xlane.f32.xlu0 %v1274
  %v1276 = vpop.xlane.xlu0 %1275
  %v1277 = vrcp.pop %v1276
  %v1278 = vmul.f32 %v1273, %v1277
  %1280 = vrot.lane.b32.xlu0 %v316, 112
  %v1281 = vpop.permute.xlu0 %1280
  %v1284 = vsel %vm411, %v1278, 0
  %1286 = vmatprep.subr.mxu0 0.0
  %1287 = vmatpush1.msra.mxu0 %v1281
  %1288 = vmatprep.subr.mxu0 0.0
  %1289 = vmatpush1.msra.mxu0 0.0
  %1290 = vmatprep.subr.mxu0 0.0
  %1291 = vmatpush1.msra.mxu0 0.0
  %1292 = vmatprep.subr.mxu0 0.0
  %1293 = vmatpush1.msra.mxu0 0.0
  %1294 = vmatprep.subr.mxu0 0.0
  %1295 = vmatpush1.msra.mxu0 0.0
  %1296 = vmatprep.subr.mxu0 0.0
  %1297 = vmatpush1.msra.mxu0 0.0
  %1298 = vmatprep.subr.mxu0 0.0
  %1299 = vmatpush1.msra.mxu0 0.0
  %1300 = vmatprep.subr.mxu0 0.0
  %1301 = vmatpush1.msra.mxu0 0.0
  %1302 = vmatprep.subr.mxu0 0.0
  %1303 = vmatpush1.msra.mxu0 0.0
  %1304 = vmatprep.subr.mxu0 0.0
  %1305 = vmatpush1.msra.mxu0 0.0
  %1306 = vmatprep.subr.mxu0 0.0
  %1307 = vmatpush1.msra.mxu0 0.0
  %1308 = vmatprep.subr.mxu0 0.0
  %1309 = vmatpush1.msra.mxu0 0.0
  %1310 = vmatprep.subr.mxu0 0.0
  %1311 = vmatpush1.msra.mxu0 0.0
  %1312 = vmatprep.subr.mxu0 0.0
  %1313 = vmatpush1.msra.mxu0 0.0
  %1314 = vmatprep.subr.mxu0 0.0
  %1315 = vmatpush1.msra.mxu0 0.0
  %1316 = vmatprep.subr.mxu0 0.0
  %1317 = vmatpush1.msra.mxu0 0.0
  %1318 = vmatprep.subr.mxu0 0.0
  %1319 = vmatpush1.msra.mxu0 0.0
  %1320 = vmatprep.subr.mxu0 0.0
  %1321 = vmatpush1.msra.mxu0 0.0
  %1322 = vmatprep.subr.mxu0 0.0
  %1323 = vmatpush1.msra.mxu0 0.0
  %1324 = vmatprep.subr.mxu0 0.0
  %1325 = vmatpush1.msra.mxu0 0.0
  %1326 = vmatprep.subr.mxu0 0.0
  %1327 = vmatpush1.msra.mxu0 0.0
  %1328 = vmatprep.subr.mxu0 0.0
  %1329 = vmatpush1.msra.mxu0 0.0
  %1330 = vmatprep.subr.mxu0 0.0
  %1331 = vmatpush1.msra.mxu0 0.0
  %1332 = vmatprep.subr.mxu0 0.0
  %1333 = vmatpush1.msra.mxu0 0.0
  %1334 = vmatprep.subr.mxu0 0.0
  %1335 = vmatpush1.msra.mxu0 0.0
  %1336 = vmatprep.subr.mxu0 0.0
  %1337 = vmatpush1.msra.mxu0 0.0
  %1338 = vmatprep.subr.mxu0 0.0
  %1339 = vmatpush1.msra.mxu0 0.0
  %1340 = vmatprep.subr.mxu0 0.0
  %1341 = vmatpush1.msra.mxu0 0.0
  %1342 = vmatprep.subr.mxu0 0.0
  %1343 = vmatpush1.msra.mxu0 0.0
  %1344 = vmatprep.subr.mxu0 0.0
  %1345 = vmatpush1.msra.mxu0 0.0
  %1346 = vmatprep.subr.mxu0 0.0
  %1347 = vmatpush1.msra.mxu0 0.0
  %1348 = vmatprep.subr.mxu0 0.0
  %1349 = vmatpush1.msra.mxu0 0.0
  %1350 = vmatprep.mubr.f32.mxu0 0.0
  %1351 = vmatmul.mubr.f32.gmra.mrb[0].mxu0 %v1284
  %v1352 = vpop.f32.mrb[0].mxu0
  %v1353 = vadd.f32 0.0, %v1352
  %v1354 = vpop.f32.mrb[0].mxu0
  %1355 = vdwg.mxu0
  %1357 = vrot.lane.b32.xlu0 %v1353, 80
  %v1358 = vpop.permute.xlu0 %1357
  %vm1360 = vcmask 786048
  %1361 = vst.msk [vmem:[#allocation2] sm:$0xff] %vm1360, %v1358
  %1363 = vrot.lane.b32.xlu0 %v245, 32
  %v1364 = vpop.permute.xlu0 %1363
  %v1365 = vsel %vm330, %v245, 0
  %v1367 = vsel %vm330, %v1364, 0
  %1369 = vmatprep.subr.mxu0 0.0
  %1370 = vmatpush1.xpose.msra.mxu0 %v1367
  %1371 = vmatprep.subr.mxu0 0.0
  %1372 = vmatpush1.xpose.msra.mxu0 0.0
  %1373 = vmatprep.subr.mxu0 0.0
  %1374 = vmatpush1.xpose.msra.mxu0 0.0
  %1375 = vmatprep.subr.mxu0 0.0
  %1376 = vmatpush1.xpose.msra.mxu0 0.0
  %1377 = vmatprep.subr.mxu0 0.0
  %1378 = vmatpush1.xpose.msra.mxu0 0.0
  %1379 = vmatprep.subr.mxu0 0.0
  %1380 = vmatpush1.xpose.msra.mxu0 0.0
  %1381 = vmatprep.subr.mxu0 0.0
  %1382 = vmatpush1.xpose.msra.mxu0 0.0
  %1383 = vmatprep.subr.mxu0 0.0
  %1384 = vmatpush1.xpose.msra.mxu0 0.0
  %1385 = vmatprep.subr.mxu0 0.0
  %1386 = vmatpush1.xpose.msra.mxu0 0.0
  %1387 = vmatprep.subr.mxu0 0.0
  %1388 = vmatpush1.xpose.msra.mxu0 0.0
  %1389 = vmatprep.subr.mxu0 0.0
  %1390 = vmatpush1.xpose.msra.mxu0 0.0
  %1391 = vmatprep.subr.mxu0 0.0
  %1392 = vmatpush1.xpose.msra.mxu0 0.0
  %1393 = vmatprep.subr.mxu0 0.0
  %1394 = vmatpush1.xpose.msra.mxu0 0.0
  %1395 = vmatprep.subr.mxu0 0.0
  %1396 = vmatpush1.xpose.msra.mxu0 0.0
  %1397 = vmatprep.subr.mxu0 0.0
  %1398 = vmatpush1.xpose.msra.mxu0 0.0
  %1399 = vmatprep.subr.mxu0 0.0
  %1400 = vmatpush1.xpose.msra.mxu0 0.0
  %1401 = vmatprep.subr.mxu0 0.0
  %1402 = vmatpush1.xpose.msra.mxu0 0.0
  %1403 = vmatprep.subr.mxu0 0.0
  %1404 = vmatpush1.xpose.msra.mxu0 0.0
  %1405 = vmatprep.subr.mxu0 0.0
  %1406 = vmatpush1.xpose.msra.mxu0 0.0
  %1407 = vmatprep.subr.mxu0 0.0
  %1408 = vmatpush1.xpose.msra.mxu0 0.0
  %1409 = vmatprep.subr.mxu0 0.0
  %1410 = vmatpush1.xpose.msra.mxu0 0.0
  %1411 = vmatprep.subr.mxu0 0.0
  %1412 = vmatpush1.xpose.msra.mxu0 0.0
  %1413 = vmatprep.subr.mxu0 0.0
  %1414 = vmatpush1.xpose.msra.mxu0 0.0
  %1415 = vmatprep.subr.mxu0 0.0
  %1416 = vmatpush1.xpose.msra.mxu0 0.0
  %1417 = vmatprep.subr.mxu0 0.0
  %1418 = vmatpush1.xpose.msra.mxu0 0.0
  %1419 = vmatprep.subr.mxu0 0.0
  %1420 = vmatpush1.xpose.msra.mxu0 0.0
  %1421 = vmatprep.subr.mxu0 0.0
  %1422 = vmatpush1.xpose.msra.mxu0 0.0
  %1423 = vmatprep.subr.mxu0 0.0
  %1424 = vmatpush1.xpose.msra.mxu0 0.0
  %1425 = vmatprep.subr.mxu0 0.0
  %1426 = vmatpush1.xpose.msra.mxu0 0.0
  %1427 = vmatprep.subr.mxu0 0.0
  %1428 = vmatpush1.xpose.msra.mxu0 0.0
  %1429 = vmatprep.subr.mxu0 0.0
  %1430 = vmatpush1.xpose.msra.mxu0 0.0
  %1431 = vmatprep.subr.mxu0 0.0
  %1432 = vmatpush1.xpose.msra.mxu0 0.0
  %1433 = vmatprep.mubr.f32.mxu0 0.0
  %1434 = vmatmul.mubr.f32.gmra.mrb[0].mxu0 %v1365
  %v1435 = vpop.f32.mrb[0].mxu0
  %v1436 = vadd.f32 0.0, %v1435
  %v1437 = vpop.f32.mrb[0].mxu0
  %1438 = vdwg.mxu0
  %v1439 = vmul.f32 %v1436, 0.25
  %v1440 = vlaneseq
  %v1441 = vshrl.u32 %v1440, 7
  %v1442 = vsub.s32 1, %v1441
  %v1443 = vrot.slane %v326, %v1442
  %v1444 = vadd.f32 %v1439, %v1443
  %v1445 = vsel %vm411, %v1444, -inf
  %1446 = vmax.xlane.f32.xlu0 %v1445
  %v1447 = vpop.xlane.xlu0 %1446
  %v1448 = vsub.f32 %v1444, %v1447
  %v1449 = vmul.f32 %v1448, 1.442695
  %v1450 = vpow.pop %v1449
  %v1451 = vsel %vm411, %v1450, 0.0
  %1452 = vadd.xlane.f32.xlu0 %v1451
  %v1453 = vpop.xlane.xlu0 %1452
  %v1454 = vrcp.pop %v1453
  %v1455 = vmul.f32 %v1450, %v1454
  %1457 = vrot.lane.b32.xlu0 %v247, 64
  %v1458 = vpop.permute.xlu0 %1457
  %v1461 = vsel %vm411, %v1455, 0
  %1463 = vmatprep.subr.mxu0 0.0
  %1464 = vmatpush1.msra.mxu0 %v1458
  %1465 = vmatprep.subr.mxu0 0.0
  %1466 = vmatpush1.msra.mxu0 0.0
  %1467 = vmatprep.subr.mxu0 0.0
  %1468 = vmatpush1.msra.mxu0 0.0
  %1469 = vmatprep.subr.mxu0 0.0
  %1470 = vmatpush1.msra.mxu0 0.0
  %1471 = vmatprep.subr.mxu0 0.0
  %1472 = vmatpush1.msra.mxu0 0.0
  %1473 = vmatprep.subr.mxu0 0.0
  %1474 = vmatpush1.msra.mxu0 0.0
  %1475 = vmatprep.subr.mxu0 0.0
  %1476 = vmatpush1.msra.mxu0 0.0
  %1477 = vmatprep.subr.mxu0 0.0
  %1478 = vmatpush1.msra.mxu0 0.0
  %1479 = vmatprep.subr.mxu0 0.0
  %1480 = vmatpush1.msra.mxu0 0.0
  %1481 = vmatprep.subr.mxu0 0.0
  %1482 = vmatpush1.msra.mxu0 0.0
  %1483 = vmatprep.subr.mxu0 0.0
  %1484 = vmatpush1.msra.mxu0 0.0
  %1485 = vmatprep.subr.mxu0 0.0
  %1486 = vmatpush1.msra.mxu0 0.0
  %1487 = vmatprep.subr.mxu0 0.0
  %1488 = vmatpush1.msra.mxu0 0.0
  %1489 = vmatprep.subr.mxu0 0.0
  %1490 = vmatpush1.msra.mxu0 0.0
  %1491 = vmatprep.subr.mxu0 0.0
  %1492 = vmatpush1.msra.mxu0 0.0
  %1493 = vmatprep.subr.mxu0 0.0
  %1494 = vmatpush1.msra.mxu0 0.0
  %1495 = vmatprep.subr.mxu0 0.0
  %1496 = vmatpush1.msra.mxu0 0.0
  %1497 = vmatprep.subr.mxu0 0.0
  %1498 = vmatpush1.msra.mxu0 0.0
  %1499 = vmatprep.subr.mxu0 0.0
  %1500 = vmatpush1.msra.mxu0 0.0
  %1501 = vmatprep.subr.mxu0 0.0
  %1502 = vmatpush1.msra.mxu0 0.0
  %1503 = vmatprep.subr.mxu0 0.0
  %1504 = vmatpush1.msra.mxu0 0.0
  %1505 = vmatprep.subr.mxu0 0.0
  %1506 = vmatpush1.msra.mxu0 0.0
  %1507 = vmatprep.subr.mxu0 0.0
  %1508 = vmatpush1.msra.mxu0 0.0
  %1509 = vmatprep.subr.mxu0 0.0
  %1510 = vmatpush1.msra.mxu0 0.0
  %1511 = vmatprep.subr.mxu0 0.0
  %1512 = vmatpush1.msra.mxu0 0.0
  %1513 = vmatprep.subr.mxu0 0.0
  %1514 = vmatpush1.msra.mxu0 0.0
  %1515 = vmatprep.subr.mxu0 0.0
  %1516 = vmatpush1.msra.mxu0 0.0
  %1517 = vmatprep.subr.mxu0 0.0
  %1518 = vmatpush1.msra.mxu0 0.0
  %1519 = vmatprep.subr.mxu0 0.0
  %1520 = vmatpush1.msra.mxu0 0.0
  %1521 = vmatprep.subr.mxu0 0.0
  %1522 = vmatpush1.msra.mxu0 0.0
  %1523 = vmatprep.subr.mxu0 0.0
  %1524 = vmatpush1.msra.mxu0 0.0
  %1525 = vmatprep.subr.mxu0 0.0
  %1526 = vmatpush1.msra.mxu0 0.0
  %1527 = vmatprep.mubr.f32.mxu0 0.0
  %1528 = vmatmul.mubr.f32.gmra.mrb[0].mxu0 %v1461
  %v1529 = vpop.f32.mrb[0].mxu0
  %v1530 = vadd.f32 0.0, %v1529
  %v1531 = vpop.f32.mrb[0].mxu0
  %1532 = vdwg.mxu0
  %1533 = vst.msk [vmem:[#allocation2 + $0x8] sm:$0xff] %vm330, %v1530
  %1534 = vrot.lane.b32.xlu0 %v245, 112
  %v1535 = vpop.permute.xlu0 %1534
  %1536 = vrot.lane.b32.xlu0 %v245, 16
  %v1537 = vpop.permute.xlu0 %1536
  %v1538 = vsel %vm330, %v1535, 0
  %v1540 = vsel %vm330, %v1537, 0
  %1542 = vmatprep.subr.mxu0 0.0
  %1543 = vmatpush1.xpose.msra.mxu0 %v1540
  %1544 = vmatprep.subr.mxu0 0.0
  %1545 = vmatpush1.xpose.msra.mxu0 0.0
  %1546 = vmatprep.subr.mxu0 0.0
  %1547 = vmatpush1.xpose.msra.mxu0 0.0
  %1548 = vmatprep.subr.mxu0 0.0
  %1549 = vmatpush1.xpose.msra.mxu0 0.0
  %1550 = vmatprep.subr.mxu0 0.0
  %1551 = vmatpush1.xpose.msra.mxu0 0.0
  %1552 = vmatprep.subr.mxu0 0.0
  %1553 = vmatpush1.xpose.msra.mxu0 0.0
  %1554 = vmatprep.subr.mxu0 0.0
  %1555 = vmatpush1.xpose.msra.mxu0 0.0
  %1556 = vmatprep.subr.mxu0 0.0
  %1557 = vmatpush1.xpose.msra.mxu0 0.0
  %1558 = vmatprep.subr.mxu0 0.0
  %1559 = vmatpush1.xpose.msra.mxu0 0.0
  %1560 = vmatprep.subr.mxu0 0.0
  %1561 = vmatpush1.xpose.msra.mxu0 0.0
  %1562 = vmatprep.subr.mxu0 0.0
  %1563 = vmatpush1.xpose.msra.mxu0 0.0
  %1564 = vmatprep.subr.mxu0 0.0
  %1565 = vmatpush1.xpose.msra.mxu0 0.0
  %1566 = vmatprep.subr.mxu0 0.0
  %1567 = vmatpush1.xpose.msra.mxu0 0.0
  %1568 = vmatprep.subr.mxu0 0.0
  %1569 = vmatpush1.xpose.msra.mxu0 0.0
  %1570 = vmatprep.subr.mxu0 0.0
  %1571 = vmatpush1.xpose.msra.mxu0 0.0
  %1572 = vmatprep.subr.mxu0 0.0
  %1573 = vmatpush1.xpose.msra.mxu0 0.0
  %1574 = vmatprep.subr.mxu0 0.0
  %1575 = vmatpush1.xpose.msra.mxu0 0.0
  %1576 = vmatprep.subr.mxu0 0.0
  %1577 = vmatpush1.xpose.msra.mxu0 0.0
  %1578 = vmatprep.subr.mxu0 0.0
  %1579 = vmatpush1.xpose.msra.mxu0 0.0
  %1580 = vmatprep.subr.mxu0 0.0
  %1581 = vmatpush1.xpose.msra.mxu0 0.0
  %1582 = vmatprep.subr.mxu0 0.0
  %1583 = vmatpush1.xpose.msra.mxu0 0.0
  %1584 = vmatprep.subr.mxu0 0.0
  %1585 = vmatpush1.xpose.msra.mxu0 0.0
  %1586 = vmatprep.subr.mxu0 0.0
  %1587 = vmatpush1.xpose.msra.mxu0 0.0
  %1588 = vmatprep.subr.mxu0 0.0
  %1589 = vmatpush1.xpose.msra.mxu0 0.0
  %1590 = vmatprep.subr.mxu0 0.0
  %1591 = vmatpush1.xpose.msra.mxu0 0.0
  %1592 = vmatprep.subr.mxu0 0.0
  %1593 = vmatpush1.xpose.msra.mxu0 0.0
  %1594 = vmatprep.subr.mxu0 0.0
  %1595 = vmatpush1.xpose.msra.mxu0 0.0
  %1596 = vmatprep.subr.mxu0 0.0
  %1597 = vmatpush1.xpose.msra.mxu0 0.0
  %1598 = vmatprep.subr.mxu0 0.0
  %1599 = vmatpush1.xpose.msra.mxu0 0.0
  %1600 = vmatprep.subr.mxu0 0.0
  %1601 = vmatpush1.xpose.msra.mxu0 0.0
  %1602 = vmatprep.subr.mxu0 0.0
  %1603 = vmatpush1.xpose.msra.mxu0 0.0
  %1604 = vmatprep.subr.mxu0 0.0
  %1605 = vmatpush1.xpose.msra.mxu0 0.0
  %1606 = vmatprep.mubr.f32.mxu0 0.0
  %1607 = vmatmul.mubr.f32.gmra.mrb[0].mxu0 %v1538
  %v1608 = vpop.f32.mrb[0].mxu0
  %v1609 = vadd.f32 0.0, %v1608
  %v1610 = vpop.f32.mrb[0].mxu0
  %1611 = vdwg.mxu0
  %v1612 = vmul.f32 %v1609, 0.25
  %v1613 = vadd.f32 %v1612, %v1443
  %v1614 = vsel %vm411, %v1613, -inf
  %1615 = vmax.xlane.f32.xlu0 %v1614
  %v1616 = vpop.xlane.xlu0 %1615
  %v1617 = vsub.f32 %v1613, %v1616
  %v1618 = vmul.f32 %v1617, 1.442695
  %v1619 = vpow.pop %v1618
  %v1620 = vsel %vm411, %v1619, 0.0
  %1621 = vadd.xlane.f32.xlu0 %v1620
  %v1622 = vpop.xlane.xlu0 %1621
  %v1623 = vrcp.pop %v1622
  %v1624 = vmul.f32 %v1619, %v1623
  %1625 = vrot.lane.b32.xlu0 %v247, 48
  %v1626 = vpop.permute.xlu0 %1625
  %v1629 = vsel %vm411, %v1624, 0
  %1631 = vmatprep.subr.mxu0 0.0
  %1632 = vmatpush1.msra.mxu0 %v1626
  %1633 = vmatprep.subr.mxu0 0.0
  %1634 = vmatpush1.msra.mxu0 0.0
  %1635 = vmatprep.subr.mxu0 0.0
  %1636 = vmatpush1.msra.mxu0 0.0
  %1637 = vmatprep.subr.mxu0 0.0
  %1638 = vmatpush1.msra.mxu0 0.0
  %1639 = vmatprep.subr.mxu0 0.0
  %1640 = vmatpush1.msra.mxu0 0.0
  %1641 = vmatprep.subr.mxu0 0.0
  %1642 = vmatpush1.msra.mxu0 0.0
  %1643 = vmatprep.subr.mxu0 0.0
  %1644 = vmatpush1.msra.mxu0 0.0
  %1645 = vmatprep.subr.mxu0 0.0
  %1646 = vmatpush1.msra.mxu0 0.0
  %1647 = vmatprep.subr.mxu0 0.0
  %1648 = vmatpush1.msra.mxu0 0.0
  %1649 = vmatprep.subr.mxu0 0.0
  %1650 = vmatpush1.msra.mxu0 0.0
  %1651 = vmatprep.subr.mxu0 0.0
  %1652 = vmatpush1.msra.mxu0 0.0
  %1653 = vmatprep.subr.mxu0 0.0
  %1654 = vmatpush1.msra.mxu0 0.0
  %1655 = vmatprep.subr.mxu0 0.0
  %1656 = vmatpush1.msra.mxu0 0.0
  %1657 = vmatprep.subr.mxu0 0.0
  %1658 = vmatpush1.msra.mxu0 0.0
  %1659 = vmatprep.subr.mxu0 0.0
  %1660 = vmatpush1.msra.mxu0 0.0
  %1661 = vmatprep.subr.mxu0 0.0
  %1662 = vmatpush1.msra.mxu0 0.0
  %1663 = vmatprep.subr.mxu0 0.0
  %1664 = vmatpush1.msra.mxu0 0.0
  %1665 = vmatprep.subr.mxu0 0.0
  %1666 = vmatpush1.msra.mxu0 0.0
  %1667 = vmatprep.subr.mxu0 0.0
  %1668 = vmatpush1.msra.mxu0 0.0
  %1669 = vmatprep.subr.mxu0 0.0
  %1670 = vmatpush1.msra.mxu0 0.0
  %1671 = vmatprep.subr.mxu0 0.0
  %1672 = vmatpush1.msra.mxu0 0.0
  %1673 = vmatprep.subr.mxu0 0.0
  %1674 = vmatpush1.msra.mxu0 0.0
  %1675 = vmatprep.subr.mxu0 0.0
  %1676 = vmatpush1.msra.mxu0 0.0
  %1677 = vmatprep.subr.mxu0 0.0
  %1678 = vmatpush1.msra.mxu0 0.0
  %1679 = vmatprep.subr.mxu0 0.0
  %1680 = vmatpush1.msra.mxu0 0.0
  %1681 = vmatprep.subr.mxu0 0.0
  %1682 = vmatpush1.msra.mxu0 0.0
  %1683 = vmatprep.subr.mxu0 0.0
  %1684 = vmatpush1.msra.mxu0 0.0
  %1685 = vmatprep.subr.mxu0 0.0
  %1686 = vmatpush1.msra.mxu0 0.0
  %1687 = vmatprep.subr.mxu0 0.0
  %1688 = vmatpush1.msra.mxu0 0.0
  %1689 = vmatprep.subr.mxu0 0.0
  %1690 = vmatpush1.msra.mxu0 0.0
  %1691 = vmatprep.subr.mxu0 0.0
  %1692 = vmatpush1.msra.mxu0 0.0
  %1693 = vmatprep.subr.mxu0 0.0
  %1694 = vmatpush1.msra.mxu0 0.0
  %1695 = vmatprep.mubr.f32.mxu0 0.0
  %1696 = vmatmul.mubr.f32.gmra.mrb[0].mxu0 %v1629
  %v1697 = vpop.f32.mrb[0].mxu0
  %v1698 = vadd.f32 0.0, %v1697
  %v1699 = vpop.f32.mrb[0].mxu0
  %1700 = vdwg.mxu0
  %1702 = vrot.lane.b32.xlu0 %v1698, 16
  %v1703 = vpop.permute.xlu0 %1702
  %1705 = vst.msk [vmem:[#allocation2 + $0x8] sm:$0xff] %vm672, %v1703
  %1706 = vrot.lane.b32.xlu0 %v245, 96
  %v1707 = vpop.permute.xlu0 %1706
  %v1708 = vsel %vm330, %v1707, 0
  %v1710 = vsel %vm330, %v247, 0
  %1712 = vmatprep.subr.mxu0 0.0
  %1713 = vmatpush1.xpose.msra.mxu0 %v1710
  %1714 = vmatprep.subr.mxu0 0.0
  %1715 = vmatpush1.xpose.msra.mxu0 0.0
  %1716 = vmatprep.subr.mxu0 0.0
  %1717 = vmatpush1.xpose.msra.mxu0 0.0
  %1718 = vmatprep.subr.mxu0 0.0
  %1719 = vmatpush1.xpose.msra.mxu0 0.0
  %1720 = vmatprep.subr.mxu0 0.0
  %1721 = vmatpush1.xpose.msra.mxu0 0.0
  %1722 = vmatprep.subr.mxu0 0.0
  %1723 = vmatpush1.xpose.msra.mxu0 0.0
  %1724 = vmatprep.subr.mxu0 0.0
  %1725 = vmatpush1.xpose.msra.mxu0 0.0
  %1726 = vmatprep.subr.mxu0 0.0
  %1727 = vmatpush1.xpose.msra.mxu0 0.0
  %1728 = vmatprep.subr.mxu0 0.0
  %1729 = vmatpush1.xpose.msra.mxu0 0.0
  %1730 = vmatprep.subr.mxu0 0.0
  %1731 = vmatpush1.xpose.msra.mxu0 0.0
  %1732 = vmatprep.subr.mxu0 0.0
  %1733 = vmatpush1.xpose.msra.mxu0 0.0
  %1734 = vmatprep.subr.mxu0 0.0
  %1735 = vmatpush1.xpose.msra.mxu0 0.0
  %1736 = vmatprep.subr.mxu0 0.0
  %1737 = vmatpush1.xpose.msra.mxu0 0.0
  %1738 = vmatprep.subr.mxu0 0.0
  %1739 = vmatpush1.xpose.msra.mxu0 0.0
  %1740 = vmatprep.subr.mxu0 0.0
  %1741 = vmatpush1.xpose.msra.mxu0 0.0
  %1742 = vmatprep.subr.mxu0 0.0
  %1743 = vmatpush1.xpose.msra.mxu0 0.0
  %1744 = vmatprep.subr.mxu0 0.0
  %1745 = vmatpush1.xpose.msra.mxu0 0.0
  %1746 = vmatprep.subr.mxu0 0.0
  %1747 = vmatpush1.xpose.msra.mxu0 0.0
  %1748 = vmatprep.subr.mxu0 0.0
  %1749 = vmatpush1.xpose.msra.mxu0 0.0
  %1750 = vmatprep.subr.mxu0 0.0
  %1751 = vmatpush1.xpose.msra.mxu0 0.0
  %1752 = vmatprep.subr.mxu0 0.0
  %1753 = vmatpush1.xpose.msra.mxu0 0.0
  %1754 = vmatprep.subr.mxu0 0.0
  %1755 = vmatpush1.xpose.msra.mxu0 0.0
  %1756 = vmatprep.subr.mxu0 0.0
  %1757 = vmatpush1.xpose.msra.mxu0 0.0
  %1758 = vmatprep.subr.mxu0 0.0
  %1759 = vmatpush1.xpose.msra.mxu0 0.0
  %1760 = vmatprep.subr.mxu0 0.0
  %1761 = vmatpush1.xpose.msra.mxu0 0.0
  %1762 = vmatprep.subr.mxu0 0.0
  %1763 = vmatpush1.xpose.msra.mxu0 0.0
  %1764 = vmatprep.subr.mxu0 0.0
  %1765 = vmatpush1.xpose.msra.mxu0 0.0
  %1766 = vmatprep.subr.mxu0 0.0
  %1767 = vmatpush1.xpose.msra.mxu0 0.0
  %1768 = vmatprep.subr.mxu0 0.0
  %1769 = vmatpush1.xpose.msra.mxu0 0.0
  %1770 = vmatprep.subr.mxu0 0.0
  %1771 = vmatpush1.xpose.msra.mxu0 0.0
  %1772 = vmatprep.subr.mxu0 0.0
  %1773 = vmatpush1.xpose.msra.mxu0 0.0
  %1774 = vmatprep.subr.mxu0 0.0
  %1775 = vmatpush1.xpose.msra.mxu0 0.0
  %1776 = vmatprep.mubr.f32.mxu0 0.0
  %1777 = vmatmul.mubr.f32.gmra.mrb[0].mxu0 %v1708
  %v1778 = vpop.f32.mrb[0].mxu0
  %v1779 = vadd.f32 0.0, %v1778
  %v1780 = vpop.f32.mrb[0].mxu0
  %1781 = vdwg.mxu0
  %v1782 = vmul.f32 %v1779, 0.25
  %v1783 = vadd.f32 %v1782, %v1443
  %v1784 = vsel %vm411, %v1783, -inf
  %1785 = vmax.xlane.f32.xlu0 %v1784
  %v1786 = vpop.xlane.xlu0 %1785
  %v1787 = vsub.f32 %v1783, %v1786
  %v1788 = vmul.f32 %v1787, 1.442695
  %v1789 = vpow.pop %v1788
  %v1790 = vsel %vm411, %v1789, 0.0
  %1791 = vadd.xlane.f32.xlu0 %v1790
  %v1792 = vpop.xlane.xlu0 %1791
  %v1793 = vrcp.pop %v1792
  %v1794 = vmul.f32 %v1789, %v1793
  %1795 = vrot.lane.b32.xlu0 %v247, 32
  %v1796 = vpop.permute.xlu0 %1795
  %v1799 = vsel %vm411, %v1794, 0
  %1801 = vmatprep.subr.mxu0 0.0
  %1802 = vmatpush1.msra.mxu0 %v1796
  %1803 = vmatprep.subr.mxu0 0.0
  %1804 = vmatpush1.msra.mxu0 0.0
  %1805 = vmatprep.subr.mxu0 0.0
  %1806 = vmatpush1.msra.mxu0 0.0
  %1807 = vmatprep.subr.mxu0 0.0
  %1808 = vmatpush1.msra.mxu0 0.0
  %1809 = vmatprep.subr.mxu0 0.0
  %1810 = vmatpush1.msra.mxu0 0.0
  %1811 = vmatprep.subr.mxu0 0.0
  %1812 = vmatpush1.msra.mxu0 0.0
  %1813 = vmatprep.subr.mxu0 0.0
  %1814 = vmatpush1.msra.mxu0 0.0
  %1815 = vmatprep.subr.mxu0 0.0
  %1816 = vmatpush1.msra.mxu0 0.0
  %1817 = vmatprep.subr.mxu0 0.0
  %1818 = vmatpush1.msra.mxu0 0.0
  %1819 = vmatprep.subr.mxu0 0.0
  %1820 = vmatpush1.msra.mxu0 0.0
  %1821 = vmatprep.subr.mxu0 0.0
  %1822 = vmatpush1.msra.mxu0 0.0
  %1823 = vmatprep.subr.mxu0 0.0
  %1824 = vmatpush1.msra.mxu0 0.0
  %1825 = vmatprep.subr.mxu0 0.0
  %1826 = vmatpush1.msra.mxu0 0.0
  %1827 = vmatprep.subr.mxu0 0.0
  %1828 = vmatpush1.msra.mxu0 0.0
  %1829 = vmatprep.subr.mxu0 0.0
  %1830 = vmatpush1.msra.mxu0 0.0
  %1831 = vmatprep.subr.mxu0 0.0
  %1832 = vmatpush1.msra.mxu0 0.0
  %1833 = vmatprep.subr.mxu0 0.0
  %1834 = vmatpush1.msra.mxu0 0.0
  %1835 = vmatprep.subr.mxu0 0.0
  %1836 = vmatpush1.msra.mxu0 0.0
  %1837 = vmatprep.subr.mxu0 0.0
  %1838 = vmatpush1.msra.mxu0 0.0
  %1839 = vmatprep.subr.mxu0 0.0
  %1840 = vmatpush1.msra.mxu0 0.0
  %1841 = vmatprep.subr.mxu0 0.0
  %1842 = vmatpush1.msra.mxu0 0.0
  %1843 = vmatprep.subr.mxu0 0.0
  %1844 = vmatpush1.msra.mxu0 0.0
  %1845 = vmatprep.subr.mxu0 0.0
  %1846 = vmatpush1.msra.mxu0 0.0
  %1847 = vmatprep.subr.mxu0 0.0
  %1848 = vmatpush1.msra.mxu0 0.0
  %1849 = vmatprep.subr.mxu0 0.0
  %1850 = vmatpush1.msra.mxu0 0.0
  %1851 = vmatprep.subr.mxu0 0.0
  %1852 = vmatpush1.msra.mxu0 0.0
  %1853 = vmatprep.subr.mxu0 0.0
  %1854 = vmatpush1.msra.mxu0 0.0
  %1855 = vmatprep.subr.mxu0 0.0
  %1856 = vmatpush1.msra.mxu0 0.0
  %1857 = vmatprep.subr.mxu0 0.0
  %1858 = vmatpush1.msra.mxu0 0.0
  %1859 = vmatprep.subr.mxu0 0.0
  %1860 = vmatpush1.msra.mxu0 0.0
  %1861 = vmatprep.subr.mxu0 0.0
  %1862 = vmatpush1.msra.mxu0 0.0
  %1863 = vmatprep.subr.mxu0 0.0
  %1864 = vmatpush1.msra.mxu0 0.0
  %1865 = vmatprep.mubr.f32.mxu0 0.0
  %1866 = vmatmul.mubr.f32.gmra.mrb[0].mxu0 %v1799
  %v1867 = vpop.f32.mrb[0].mxu0
  %v1868 = vadd.f32 0.0, %v1867
  %v1869 = vpop.f32.mrb[0].mxu0
  %1870 = vdwg.mxu0
  %1872 = vrot.lane.b32.xlu0 %v1868, 32
  %v1873 = vpop.permute.xlu0 %1872
  %1875 = vst.msk [vmem:[#allocation2 + $0x8] sm:$0xff] %vm843, %v1873
  %1876 = vrot.lane.b32.xlu0 %v245, 80
  %v1877 = vpop.permute.xlu0 %1876
  %1878 = vrot.lane.b32.xlu0 %v247, 112
  %v1879 = vpop.permute.xlu0 %1878
  %v1880 = vsel %vm330, %v1877, 0
  %v1882 = vsel %vm330, %v1879, 0
  %1884 = vmatprep.subr.mxu0 0.0
  %1885 = vmatpush1.xpose.msra.mxu0 %v1882
  %1886 = vmatprep.subr.mxu0 0.0
  %1887 = vmatpush1.xpose.msra.mxu0 0.0
  %1888 = vmatprep.subr.mxu0 0.0
  %1889 = vmatpush1.xpose.msra.mxu0 0.0
  %1890 = vmatprep.subr.mxu0 0.0
  %1891 = vmatpush1.xpose.msra.mxu0 0.0
  %1892 = vmatprep.subr.mxu0 0.0
  %1893 = vmatpush1.xpose.msra.mxu0 0.0
  %1894 = vmatprep.subr.mxu0 0.0
  %1895 = vmatpush1.xpose.msra.mxu0 0.0
  %1896 = vmatprep.subr.mxu0 0.0
  %1897 = vmatpush1.xpose.msra.mxu0 0.0
  %1898 = vmatprep.subr.mxu0 0.0
  %1899 = vmatpush1.xpose.msra.mxu0 0.0
  %1900 = vmatprep.subr.mxu0 0.0
  %1901 = vmatpush1.xpose.msra.mxu0 0.0
  %1902 = vmatprep.subr.mxu0 0.0
  %1903 = vmatpush1.xpose.msra.mxu0 0.0
  %1904 = vmatprep.subr.mxu0 0.0
  %1905 = vmatpush1.xpose.msra.mxu0 0.0
  %1906 = vmatprep.subr.mxu0 0.0
  %1907 = vmatpush1.xpose.msra.mxu0 0.0
  %1908 = vmatprep.subr.mxu0 0.0
  %1909 = vmatpush1.xpose.msra.mxu0 0.0
  %1910 = vmatprep.subr.mxu0 0.0
  %1911 = vmatpush1.xpose.msra.mxu0 0.0
  %1912 = vmatprep.subr.mxu0 0.0
  %1913 = vmatpush1.xpose.msra.mxu0 0.0
  %1914 = vmatprep.subr.mxu0 0.0
  %1915 = vmatpush1.xpose.msra.mxu0 0.0
  %1916 = vmatprep.subr.mxu0 0.0
  %1917 = vmatpush1.xpose.msra.mxu0 0.0
  %1918 = vmatprep.subr.mxu0 0.0
  %1919 = vmatpush1.xpose.msra.mxu0 0.0
  %1920 = vmatprep.subr.mxu0 0.0
  %1921 = vmatpush1.xpose.msra.mxu0 0.0
  %1922 = vmatprep.subr.mxu0 0.0
  %1923 = vmatpush1.xpose.msra.mxu0 0.0
  %1924 = vmatprep.subr.mxu0 0.0
  %1925 = vmatpush1.xpose.msra.mxu0 0.0
  %1926 = vmatprep.subr.mxu0 0.0
  %1927 = vmatpush1.xpose.msra.mxu0 0.0
  %1928 = vmatprep.subr.mxu0 0.0
  %1929 = vmatpush1.xpose.msra.mxu0 0.0
  %1930 = vmatprep.subr.mxu0 0.0
  %1931 = vmatpush1.xpose.msra.mxu0 0.0
  %1932 = vmatprep.subr.mxu0 0.0
  %1933 = vmatpush1.xpose.msra.mxu0 0.0
  %1934 = vmatprep.subr.mxu0 0.0
  %1935 = vmatpush1.xpose.msra.mxu0 0.0
  %1936 = vmatprep.subr.mxu0 0.0
  %1937 = vmatpush1.xpose.msra.mxu0 0.0
  %1938 = vmatprep.subr.mxu0 0.0
  %1939 = vmatpush1.xpose.msra.mxu0 0.0
  %1940 = vmatprep.subr.mxu0 0.0
  %1941 = vmatpush1.xpose.msra.mxu0 0.0
  %1942 = vmatprep.subr.mxu0 0.0
  %1943 = vmatpush1.xpose.msra.mxu0 0.0
  %1944 = vmatprep.subr.mxu0 0.0
  %1945 = vmatpush1.xpose.msra.mxu0 0.0
  %1946 = vmatprep.subr.mxu0 0.0
  %1947 = vmatpush1.xpose.msra.mxu0 0.0
  %1948 = vmatprep.mubr.f32.mxu0 0.0
  %1949 = vmatmul.mubr.f32.gmra.mrb[0].mxu0 %v1880
  %v1950 = vpop.f32.mrb[0].mxu0
  %v1951 = vadd.f32 0.0, %v1950
  %v1952 = vpop.f32.mrb[0].mxu0
  %1953 = vdwg.mxu0
  %v1954 = vmul.f32 %v1951, 0.25
  %v1955 = vadd.f32 %v1954, %v1443
  %v1956 = vsel %vm411, %v1955, -inf
  %1957 = vmax.xlane.f32.xlu0 %v1956
  %v1958 = vpop.xlane.xlu0 %1957
  %v1959 = vsub.f32 %v1955, %v1958
  %v1960 = vmul.f32 %v1959, 1.442695
  %v1961 = vpow.pop %v1960
  %v1962 = vsel %vm411, %v1961, 0.0
  %1963 = vadd.xlane.f32.xlu0 %v1962
  %v1964 = vpop.xlane.xlu0 %1963
  %v1965 = vrcp.pop %v1964
  %v1966 = vmul.f32 %v1961, %v1965
  %1967 = vrot.lane.b32.xlu0 %v247, 16
  %v1968 = vpop.permute.xlu0 %1967
  %v1971 = vsel %vm411, %v1966, 0
  %1973 = vmatprep.subr.mxu0 0.0
  %1974 = vmatpush1.msra.mxu0 %v1968
  %1975 = vmatprep.subr.mxu0 0.0
  %1976 = vmatpush1.msra.mxu0 0.0
  %1977 = vmatprep.subr.mxu0 0.0
  %1978 = vmatpush1.msra.mxu0 0.0
  %1979 = vmatprep.subr.mxu0 0.0
  %1980 = vmatpush1.msra.mxu0 0.0
  %1981 = vmatprep.subr.mxu0 0.0
  %1982 = vmatpush1.msra.mxu0 0.0
  %1983 = vmatprep.subr.mxu0 0.0
  %1984 = vmatpush1.msra.mxu0 0.0
  %1985 = vmatprep.subr.mxu0 0.0
  %1986 = vmatpush1.msra.mxu0 0.0
  %1987 = vmatprep.subr.mxu0 0.0
  %1988 = vmatpush1.msra.mxu0 0.0
  %1989 = vmatprep.subr.mxu0 0.0
  %1990 = vmatpush1.msra.mxu0 0.0
  %1991 = vmatprep.subr.mxu0 0.0
  %1992 = vmatpush1.msra.mxu0 0.0
  %1993 = vmatprep.subr.mxu0 0.0
  %1994 = vmatpush1.msra.mxu0 0.0
  %1995 = vmatprep.subr.mxu0 0.0
  %1996 = vmatpush1.msra.mxu0 0.0
  %1997 = vmatprep.subr.mxu0 0.0
  %1998 = vmatpush1.msra.mxu0 0.0
  %1999 = vmatprep.subr.mxu0 0.0
  %2000 = vmatpush1.msra.mxu0 0.0
  %2001 = vmatprep.subr.mxu0 0.0
  %2002 = vmatpush1.msra.mxu0 0.0
  %2003 = vmatprep.subr.mxu0 0.0
  %2004 = vmatpush1.msra.mxu0 0.0
  %2005 = vmatprep.subr.mxu0 0.0
  %2006 = vmatpush1.msra.mxu0 0.0
  %2007 = vmatprep.subr.mxu0 0.0
  %2008 = vmatpush1.msra.mxu0 0.0
  %2009 = vmatprep.subr.mxu0 0.0
  %2010 = vmatpush1.msra.mxu0 0.0
  %2011 = vmatprep.subr.mxu0 0.0
  %2012 = vmatpush1.msra.mxu0 0.0
  %2013 = vmatprep.subr.mxu0 0.0
  %2014 = vmatpush1.msra.mxu0 0.0
  %2015 = vmatprep.subr.mxu0 0.0
  %2016 = vmatpush1.msra.mxu0 0.0
  %2017 = vmatprep.subr.mxu0 0.0
  %2018 = vmatpush1.msra.mxu0 0.0
  %2019 = vmatprep.subr.mxu0 0.0
  %2020 = vmatpush1.msra.mxu0 0.0
  %2021 = vmatprep.subr.mxu0 0.0
  %2022 = vmatpush1.msra.mxu0 0.0
  %2023 = vmatprep.subr.mxu0 0.0
  %2024 = vmatpush1.msra.mxu0 0.0
  %2025 = vmatprep.subr.mxu0 0.0
  %2026 = vmatpush1.msra.mxu0 0.0
  %2027 = vmatprep.subr.mxu0 0.0
  %2028 = vmatpush1.msra.mxu0 0.0
  %2029 = vmatprep.subr.mxu0 0.0
  %2030 = vmatpush1.msra.mxu0 0.0
  %2031 = vmatprep.subr.mxu0 0.0
  %2032 = vmatpush1.msra.mxu0 0.0
  %2033 = vmatprep.subr.mxu0 0.0
  %2034 = vmatpush1.msra.mxu0 0.0
  %2035 = vmatprep.subr.mxu0 0.0
  %2036 = vmatpush1.msra.mxu0 0.0
  %2037 = vmatprep.mubr.f32.mxu0 0.0
  %2038 = vmatmul.mubr.f32.gmra.mrb[0].mxu0 %v1971
  %v2039 = vpop.f32.mrb[0].mxu0
  %v2040 = vadd.f32 0.0, %v2039
  %v2041 = vpop.f32.mrb[0].mxu0
  %2042 = vdwg.mxu0
  %2044 = vrot.lane.b32.xlu0 %v2040, 48
  %v2045 = vpop.permute.xlu0 %2044
  %2047 = vst.msk [vmem:[#allocation2 + $0x8] sm:$0xff] %vm1016, %v2045
  %2048 = vrot.lane.b32.xlu0 %v245, 64
  %v2049 = vpop.permute.xlu0 %2048
  %2050 = vrot.lane.b32.xlu0 %v247, 96
  %v2051 = vpop.permute.xlu0 %2050
  %v2052 = vsel %vm330, %v2049, 0
  %v2054 = vsel %vm330, %v2051, 0
  %2056 = vmatprep.subr.mxu0 0.0
  %2057 = vmatpush1.xpose.msra.mxu0 %v2054
  %2058 = vmatprep.subr.mxu0 0.0
  %2059 = vmatpush1.xpose.msra.mxu0 0.0
  %2060 = vmatprep.subr.mxu0 0.0
  %2061 = vmatpush1.xpose.msra.mxu0 0.0
  %2062 = vmatprep.subr.mxu0 0.0
  %2063 = vmatpush1.xpose.msra.mxu0 0.0
  %2064 = vmatprep.subr.mxu0 0.0
  %2065 = vmatpush1.xpose.msra.mxu0 0.0
  %2066 = vmatprep.subr.mxu0 0.0
  %2067 = vmatpush1.xpose.msra.mxu0 0.0
  %2068 = vmatprep.subr.mxu0 0.0
  %2069 = vmatpush1.xpose.msra.mxu0 0.0
  %2070 = vmatprep.subr.mxu0 0.0
  %2071 = vmatpush1.xpose.msra.mxu0 0.0
  %2072 = vmatprep.subr.mxu0 0.0
  %2073 = vmatpush1.xpose.msra.mxu0 0.0
  %2074 = vmatprep.subr.mxu0 0.0
  %2075 = vmatpush1.xpose.msra.mxu0 0.0
  %2076 = vmatprep.subr.mxu0 0.0
  %2077 = vmatpush1.xpose.msra.mxu0 0.0
  %2078 = vmatprep.subr.mxu0 0.0
  %2079 = vmatpush1.xpose.msra.mxu0 0.0
  %2080 = vmatprep.subr.mxu0 0.0
  %2081 = vmatpush1.xpose.msra.mxu0 0.0
  %2082 = vmatprep.subr.mxu0 0.0
  %2083 = vmatpush1.xpose.msra.mxu0 0.0
  %2084 = vmatprep.subr.mxu0 0.0
  %2085 = vmatpush1.xpose.msra.mxu0 0.0
  %2086 = vmatprep.subr.mxu0 0.0
  %2087 = vmatpush1.xpose.msra.mxu0 0.0
  %2088 = vmatprep.subr.mxu0 0.0
  %2089 = vmatpush1.xpose.msra.mxu0 0.0
  %2090 = vmatprep.subr.mxu0 0.0
  %2091 = vmatpush1.xpose.msra.mxu0 0.0
  %2092 = vmatprep.subr.mxu0 0.0
  %2093 = vmatpush1.xpose.msra.mxu0 0.0
  %2094 = vmatprep.subr.mxu0 0.0
  %2095 = vmatpush1.xpose.msra.mxu0 0.0
  %2096 = vmatprep.subr.mxu0 0.0
  %2097 = vmatpush1.xpose.msra.mxu0 0.0
  %2098 = vmatprep.subr.mxu0 0.0
  %2099 = vmatpush1.xpose.msra.mxu0 0.0
  %2100 = vmatprep.subr.mxu0 0.0
  %2101 = vmatpush1.xpose.msra.mxu0 0.0
  %2102 = vmatprep.subr.mxu0 0.0
  %2103 = vmatpush1.xpose.msra.mxu0 0.0
  %2104 = vmatprep.subr.mxu0 0.0
  %2105 = vmatpush1.xpose.msra.mxu0 0.0
  %2106 = vmatprep.subr.mxu0 0.0
  %2107 = vmatpush1.xpose.msra.mxu0 0.0
  %2108 = vmatprep.subr.mxu0 0.0
  %2109 = vmatpush1.xpose.msra.mxu0 0.0
  %2110 = vmatprep.subr.mxu0 0.0
  %2111 = vmatpush1.xpose.msra.mxu0 0.0
  %2112 = vmatprep.subr.mxu0 0.0
  %2113 = vmatpush1.xpose.msra.mxu0 0.0
  %2114 = vmatprep.subr.mxu0 0.0
  %2115 = vmatpush1.xpose.msra.mxu0 0.0
  %2116 = vmatprep.subr.mxu0 0.0
  %2117 = vmatpush1.xpose.msra.mxu0 0.0
  %2118 = vmatprep.subr.mxu0 0.0
  %2119 = vmatpush1.xpose.msra.mxu0 0.0
  %2120 = vmatprep.mubr.f32.mxu0 0.0
  %2121 = vmatmul.mubr.f32.gmra.mrb[0].mxu0 %v2052
  %v2122 = vpop.f32.mrb[0].mxu0
  %v2123 = vadd.f32 0.0, %v2122
  %v2124 = vpop.f32.mrb[0].mxu0
  %2125 = vdwg.mxu0
  %v2126 = vmul.f32 %v2123, 0.25
  %v2127 = vadd.f32 %v2126, %v1443
  %v2128 = vsel %vm411, %v2127, -inf
  %2129 = vmax.xlane.f32.xlu0 %v2128
  %v2130 = vpop.xlane.xlu0 %2129
  %v2131 = vsub.f32 %v2127, %v2130
  %v2132 = vmul.f32 %v2131, 1.442695
  %v2133 = vpow.pop %v2132
  %v2134 = vsel %vm411, %v2133, 0.0
  %2135 = vadd.xlane.f32.xlu0 %v2134
  %v2136 = vpop.xlane.xlu0 %2135
  %v2137 = vrcp.pop %v2136
  %v2138 = vmul.f32 %v2133, %v2137
  %v2140 = vsel %vm411, %v2138, 0
  %2142 = vmatprep.subr.mxu0 0.0
  %2143 = vmatpush1.msra.mxu0 %v321
  %2144 = vmatprep.subr.mxu0 0.0
  %2145 = vmatpush1.msra.mxu0 0.0
  %2146 = vmatprep.subr.mxu0 0.0
  %2147 = vmatpush1.msra.mxu0 0.0
  %2148 = vmatprep.subr.mxu0 0.0
  %2149 = vmatpush1.msra.mxu0 0.0
  %2150 = vmatprep.subr.mxu0 0.0
  %2151 = vmatpush1.msra.mxu0 0.0
  %2152 = vmatprep.subr.mxu0 0.0
  %2153 = vmatpush1.msra.mxu0 0.0
  %2154 = vmatprep.subr.mxu0 0.0
  %2155 = vmatpush1.msra.mxu0 0.0
  %2156 = vmatprep.subr.mxu0 0.0
  %2157 = vmatpush1.msra.mxu0 0.0
  %2158 = vmatprep.subr.mxu0 0.0
  %2159 = vmatpush1.msra.mxu0 0.0
  %2160 = vmatprep.subr.mxu0 0.0
  %2161 = vmatpush1.msra.mxu0 0.0
  %2162 = vmatprep.subr.mxu0 0.0
  %2163 = vmatpush1.msra.mxu0 0.0
  %2164 = vmatprep.subr.mxu0 0.0
  %2165 = vmatpush1.msra.mxu0 0.0
  %2166 = vmatprep.subr.mxu0 0.0
  %2167 = vmatpush1.msra.mxu0 0.0
  %2168 = vmatprep.subr.mxu0 0.0
  %2169 = vmatpush1.msra.mxu0 0.0
  %2170 = vmatprep.subr.mxu0 0.0
  %2171 = vmatpush1.msra.mxu0 0.0
  %2172 = vmatprep.subr.mxu0 0.0
  %2173 = vmatpush1.msra.mxu0 0.0
  %2174 = vmatprep.subr.mxu0 0.0
  %2175 = vmatpush1.msra.mxu0 0.0
  %2176 = vmatprep.subr.mxu0 0.0
  %2177 = vmatpush1.msra.mxu0 0.0
  %2178 = vmatprep.subr.mxu0 0.0
  %2179 = vmatpush1.msra.mxu0 0.0
  %2180 = vmatprep.subr.mxu0 0.0
  %2181 = vmatpush1.msra.mxu0 0.0
  %2182 = vmatprep.subr.mxu0 0.0
  %2183 = vmatpush1.msra.mxu0 0.0
  %2184 = vmatprep.subr.mxu0 0.0
  %2185 = vmatpush1.msra.mxu0 0.0
  %2186 = vmatprep.subr.mxu0 0.0
  %2187 = vmatpush1.msra.mxu0 0.0
  %2188 = vmatprep.subr.mxu0 0.0
  %2189 = vmatpush1.msra.mxu0 0.0
  %2190 = vmatprep.subr.mxu0 0.0
  %2191 = vmatpush1.msra.mxu0 0.0
  %2192 = vmatprep.subr.mxu0 0.0
  %2193 = vmatpush1.msra.mxu0 0.0
  %2194 = vmatprep.subr.mxu0 0.0
  %2195 = vmatpush1.msra.mxu0 0.0
  %2196 = vmatprep.subr.mxu0 0.0
  %2197 = vmatpush1.msra.mxu0 0.0
  %2198 = vmatprep.subr.mxu0 0.0
  %2199 = vmatpush1.msra.mxu0 0.0
  %2200 = vmatprep.subr.mxu0 0.0
  %2201 = vmatpush1.msra.mxu0 0.0
  %2202 = vmatprep.subr.mxu0 0.0
  %2203 = vmatpush1.msra.mxu0 0.0
  %2204 = vmatprep.subr.mxu0 0.0
  %2205 = vmatpush1.msra.mxu0 0.0
  %2206 = vmatprep.mubr.f32.mxu0 0.0
  %2207 = vmatmul.mubr.f32.gmra.mrb[0].mxu0 %v2140
  %v2208 = vpop.f32.mrb[0].mxu0
  %v2209 = vadd.f32 0.0, %v2208
  %v2210 = vpop.f32.mrb[0].mxu0
  %2211 = vdwg.mxu0
  %2213 = vrot.lane.b32.xlu0 %v2209, 64
  %v2214 = vpop.permute.xlu0 %2213
  %2216 = vst.msk [vmem:[#allocation2 + $0x8] sm:$0xff] %vm1186, %v2214
  %2217 = vrot.lane.b32.xlu0 %v245, 48
  %v2218 = vpop.permute.xlu0 %2217
  %2219 = vrot.lane.b32.xlu0 %v247, 80
  %v2220 = vpop.permute.xlu0 %2219
  %v2221 = vsel %vm330, %v2218, 0
  %v2223 = vsel %vm330, %v2220, 0
  %2225 = vmatprep.subr.mxu0 0.0
  %2226 = vmatpush1.xpose.msra.mxu0 %v2223
  %2227 = vmatprep.subr.mxu0 0.0
  %2228 = vmatpush1.xpose.msra.mxu0 0.0
  %2229 = vmatprep.subr.mxu0 0.0
  %2230 = vmatpush1.xpose.msra.mxu0 0.0
  %2231 = vmatprep.subr.mxu0 0.0
  %2232 = vmatpush1.xpose.msra.mxu0 0.0
  %2233 = vmatprep.subr.mxu0 0.0
  %2234 = vmatpush1.xpose.msra.mxu0 0.0
  %2235 = vmatprep.subr.mxu0 0.0
  %2236 = vmatpush1.xpose.msra.mxu0 0.0
  %2237 = vmatprep.subr.mxu0 0.0
  %2238 = vmatpush1.xpose.msra.mxu0 0.0
  %2239 = vmatprep.subr.mxu0 0.0
  %2240 = vmatpush1.xpose.msra.mxu0 0.0
  %2241 = vmatprep.subr.mxu0 0.0
  %2242 = vmatpush1.xpose.msra.mxu0 0.0
  %2243 = vmatprep.subr.mxu0 0.0
  %2244 = vmatpush1.xpose.msra.mxu0 0.0
  %2245 = vmatprep.subr.mxu0 0.0
  %2246 = vmatpush1.xpose.msra.mxu0 0.0
  %2247 = vmatprep.subr.mxu0 0.0
  %2248 = vmatpush1.xpose.msra.mxu0 0.0
  %2249 = vmatprep.subr.mxu0 0.0
  %2250 = vmatpush1.xpose.msra.mxu0 0.0
  %2251 = vmatprep.subr.mxu0 0.0
  %2252 = vmatpush1.xpose.msra.mxu0 0.0
  %2253 = vmatprep.subr.mxu0 0.0
  %2254 = vmatpush1.xpose.msra.mxu0 0.0
  %2255 = vmatprep.subr.mxu0 0.0
  %2256 = vmatpush1.xpose.msra.mxu0 0.0
  %2257 = vmatprep.subr.mxu0 0.0
  %2258 = vmatpush1.xpose.msra.mxu0 0.0
  %2259 = vmatprep.subr.mxu0 0.0
  %2260 = vmatpush1.xpose.msra.mxu0 0.0
  %2261 = vmatprep.subr.mxu0 0.0
  %2262 = vmatpush1.xpose.msra.mxu0 0.0
  %2263 = vmatprep.subr.mxu0 0.0
  %2264 = vmatpush1.xpose.msra.mxu0 0.0
  %2265 = vmatprep.subr.mxu0 0.0
  %2266 = vmatpush1.xpose.msra.mxu0 0.0
  %2267 = vmatprep.subr.mxu0 0.0
  %2268 = vmatpush1.xpose.msra.mxu0 0.0
  %2269 = vmatprep.subr.mxu0 0.0
  %2270 = vmatpush1.xpose.msra.mxu0 0.0
  %2271 = vmatprep.subr.mxu0 0.0
  %2272 = vmatpush1.xpose.msra.mxu0 0.0
  %2273 = vmatprep.subr.mxu0 0.0
  %2274 = vmatpush1.xpose.msra.mxu0 0.0
  %2275 = vmatprep.subr.mxu0 0.0
  %2276 = vmatpush1.xpose.msra.mxu0 0.0
  %2277 = vmatprep.subr.mxu0 0.0
  %2278 = vmatpush1.xpose.msra.mxu0 0.0
  %2279 = vmatprep.subr.mxu0 0.0
  %2280 = vmatpush1.xpose.msra.mxu0 0.0
  %2281 = vmatprep.subr.mxu0 0.0
  %2282 = vmatpush1.xpose.msra.mxu0 0.0
  %2283 = vmatprep.subr.mxu0 0.0
  %2284 = vmatpush1.xpose.msra.mxu0 0.0
  %2285 = vmatprep.subr.mxu0 0.0
  %2286 = vmatpush1.xpose.msra.mxu0 0.0
  %2287 = vmatprep.subr.mxu0 0.0
  %2288 = vmatpush1.xpose.msra.mxu0 0.0
  %2289 = vmatprep.mubr.f32.mxu0 0.0
  %2290 = vmatmul.mubr.f32.gmra.mrb[0].mxu0 %v2221
  %v2291 = vpop.f32.mrb[0].mxu0
  %v2292 = vadd.f32 0.0, %v2291
  %v2293 = vpop.f32.mrb[0].mxu0
  %2294 = vdwg.mxu0
  %v2295 = vmul.f32 %v2292, 0.25
  %v2296 = vadd.f32 %v2295, %v1443
  %v2297 = vsel %vm411, %v2296, -inf
  %2298 = vmax.xlane.f32.xlu0 %v2297
  %v2299 = vpop.xlane.xlu0 %2298
  %v2300 = vsub.f32 %v2296, %v2299
  %v2301 = vmul.f32 %v2300, 1.442695
  %v2302 = vpow.pop %v2301
  %v2303 = vsel %vm411, %v2302, 0.0
  %2304 = vadd.xlane.f32.xlu0 %v2303
  %v2305 = vpop.xlane.xlu0 %2304
  %v2306 = vrcp.pop %v2305
  %v2307 = vmul.f32 %v2302, %v2306
  %2309 = vrot.lane.b32.xlu0 %v321, 112
  %v2310 = vpop.permute.xlu0 %2309
  %v2313 = vsel %vm411, %v2307, 0
  %2315 = vmatprep.subr.mxu0 0.0
  %2316 = vmatpush1.msra.mxu0 %v2310
  %2317 = vmatprep.subr.mxu0 0.0
  %2318 = vmatpush1.msra.mxu0 0.0
  %2319 = vmatprep.subr.mxu0 0.0
  %2320 = vmatpush1.msra.mxu0 0.0
  %2321 = vmatprep.subr.mxu0 0.0
  %2322 = vmatpush1.msra.mxu0 0.0
  %2323 = vmatprep.subr.mxu0 0.0
  %2324 = vmatpush1.msra.mxu0 0.0
  %2325 = vmatprep.subr.mxu0 0.0
  %2326 = vmatpush1.msra.mxu0 0.0
  %2327 = vmatprep.subr.mxu0 0.0
  %2328 = vmatpush1.msra.mxu0 0.0
  %2329 = vmatprep.subr.mxu0 0.0
  %2330 = vmatpush1.msra.mxu0 0.0
  %2331 = vmatprep.subr.mxu0 0.0
  %2332 = vmatpush1.msra.mxu0 0.0
  %2333 = vmatprep.subr.mxu0 0.0
  %2334 = vmatpush1.msra.mxu0 0.0
  %2335 = vmatprep.subr.mxu0 0.0
  %2336 = vmatpush1.msra.mxu0 0.0
  %2337 = vmatprep.subr.mxu0 0.0
  %2338 = vmatpush1.msra.mxu0 0.0
  %2339 = vmatprep.subr.mxu0 0.0
  %2340 = vmatpush1.msra.mxu0 0.0
  %2341 = vmatprep.subr.mxu0 0.0
  %2342 = vmatpush1.msra.mxu0 0.0
  %2343 = vmatprep.subr.mxu0 0.0
  %2344 = vmatpush1.msra.mxu0 0.0
  %2345 = vmatprep.subr.mxu0 0.0
  %2346 = vmatpush1.msra.mxu0 0.0
  %2347 = vmatprep.subr.mxu0 0.0
  %2348 = vmatpush1.msra.mxu0 0.0
  %2349 = vmatprep.subr.mxu0 0.0
  %2350 = vmatpush1.msra.mxu0 0.0
  %2351 = vmatprep.subr.mxu0 0.0
  %2352 = vmatpush1.msra.mxu0 0.0
  %2353 = vmatprep.subr.mxu0 0.0
  %2354 = vmatpush1.msra.mxu0 0.0
  %2355 = vmatprep.subr.mxu0 0.0
  %2356 = vmatpush1.msra.mxu0 0.0
  %2357 = vmatprep.subr.mxu0 0.0
  %2358 = vmatpush1.msra.mxu0 0.0
  %2359 = vmatprep.subr.mxu0 0.0
  %2360 = vmatpush1.msra.mxu0 0.0
  %2361 = vmatprep.subr.mxu0 0.0
  %2362 = vmatpush1.msra.mxu0 0.0
  %2363 = vmatprep.subr.mxu0 0.0
  %2364 = vmatpush1.msra.mxu0 0.0
  %2365 = vmatprep.subr.mxu0 0.0
  %2366 = vmatpush1.msra.mxu0 0.0
  %2367 = vmatprep.subr.mxu0 0.0
  %2368 = vmatpush1.msra.mxu0 0.0
  %2369 = vmatprep.subr.mxu0 0.0
  %2370 = vmatpush1.msra.mxu0 0.0
  %2371 = vmatprep.subr.mxu0 0.0
  %2372 = vmatpush1.msra.mxu0 0.0
  %2373 = vmatprep.subr.mxu0 0.0
  %2374 = vmatpush1.msra.mxu0 0.0
  %2375 = vmatprep.subr.mxu0 0.0
  %2376 = vmatpush1.msra.mxu0 0.0
  %2377 = vmatprep.subr.mxu0 0.0
  %2378 = vmatpush1.msra.mxu0 0.0
  %2379 = vmatprep.mubr.f32.mxu0 0.0
  %2380 = vmatmul.mubr.f32.gmra.mrb[0].mxu0 %v2313
  %v2381 = vpop.f32.mrb[0].mxu0
  %v2382 = vadd.f32 0.0, %v2381
  %v2383 = vpop.f32.mrb[0].mxu0
  %2384 = vdwg.mxu0
  %2386 = vrot.lane.b32.xlu0 %v2382, 80
  %v2387 = vpop.permute.xlu0 %2386
  %2389 = vst.msk [vmem:[#allocation2 + $0x8] sm:$0xff] %vm1360, %v2387
  %v2390 = vld [vmem:[#allocation2] sm:$0xff]
  %v2391 = vld [vmem:[#allocation2 + $0x8] sm:$0xff]
  %v2392 = vld [vmem:[%s4] sm:$0xff]
  %v2393 = vld [vmem:[%s4 + $0x8] sm:$0xff]
  %v2394 = vld [vmem:[%s4 + $0x10] sm:$0xff]
  %v2395 = vld [vmem:[%s4 + $0x18] sm:$0xff]
  %v2396 = vld [vmem:[%s4 + $0x20] sm:$0xff]
  %v2397 = vld [vmem:[%s4 + $0x28] sm:$0xff]
  %v2398 = vld [vmem:[%s4 + $0x30] sm:$0xff]
  %v2399 = vld [vmem:[%s4 + $0x38] sm:$0xff]
  %v2400 = vld [vmem:[%s4 + $0x40] sm:$0xff]
  %v2401 = vld [vmem:[%s4 + $0x48] sm:$0xff]
  %v2402 = vld [vmem:[%s4 + $0x50] sm:$0xff]
  %v2403 = vld [vmem:[%s4 + $0x58] sm:$0xff]
  %v2404 = vld [vmem:[%s5] sm:$0x1]
  %v2406 = vlaneseq
  %v2407 = vshrl.u32 %v2406, 7
  %v2408 = vsub.s32 0, %v2407
  %v2409 = vrot.slane %v2404, %v2408
  %v2412 = vsel %vm69, %v2390, 0
  %v2415 = vsel %vm69, %v2391, 0
  %2417 = vmatprep.subr.mxu0 0.0
  %2418 = vmatpush1.msra.mxu0 %v2392
  %2419 = vmatprep.subr.mxu0 0.0
  %2420 = vmatpush1.msra.mxu0 %v2393
  %2421 = vmatprep.subr.mxu0 0.0
  %2422 = vmatpush1.msra.mxu0 %v2394
  %2423 = vmatprep.subr.mxu0 0.0
  %2424 = vmatpush1.msra.mxu0 %v2395
  %2425 = vmatprep.subr.mxu0 0.0
  %2426 = vmatpush1.msra.mxu0 %v2396
  %2427 = vmatprep.subr.mxu0 0.0
  %2428 = vmatpush1.msra.mxu0 %v2397
  %2429 = vmatprep.subr.mxu0 0.0
  %2430 = vmatpush1.msra.mxu0 %v2398
  %2431 = vmatprep.subr.mxu0 0.0
  %2432 = vmatpush1.msra.mxu0 %v2399
  %2433 = vmatprep.subr.mxu0 0.0
  %2434 = vmatpush1.msra.mxu0 %v2400
  %2435 = vmatprep.subr.mxu0 0.0
  %2436 = vmatpush1.msra.mxu0 %v2401
  %2437 = vmatprep.subr.mxu0 0.0
  %2438 = vmatpush1.msra.mxu0 %v2402
  %2439 = vmatprep.subr.mxu0 0.0
  %2440 = vmatpush1.msra.mxu0 %v2403
  %2441 = vmatprep.subr.mxu0 0.0
  %2442 = vmatpush1.msra.mxu0 0.0
  %2443 = vmatprep.subr.mxu0 0.0
  %2444 = vmatpush1.msra.mxu0 0.0
  %2445 = vmatprep.subr.mxu0 0.0
  %2446 = vmatpush1.msra.mxu0 0.0
  %2447 = vmatprep.subr.mxu0 0.0
  %2448 = vmatpush1.msra.mxu0 0.0
  %2449 = vmatprep.subr.mxu0 0.0
  %2450 = vmatpush1.msra.mxu0 0.0
  %2451 = vmatprep.subr.mxu0 0.0
  %2452 = vmatpush1.msra.mxu0 0.0
  %2453 = vmatprep.subr.mxu0 0.0
  %2454 = vmatpush1.msra.mxu0 0.0
  %2455 = vmatprep.subr.mxu0 0.0
  %2456 = vmatpush1.msra.mxu0 0.0
  %2457 = vmatprep.subr.mxu0 0.0
  %2458 = vmatpush1.msra.mxu0 0.0
  %2459 = vmatprep.subr.mxu0 0.0
  %2460 = vmatpush1.msra.mxu0 0.0
  %2461 = vmatprep.subr.mxu0 0.0
  %2462 = vmatpush1.msra.mxu0 0.0
  %2463 = vmatprep.subr.mxu0 0.0
  %2464 = vmatpush1.msra.mxu0 0.0
  %2465 = vmatprep.subr.mxu0 0.0
  %2466 = vmatpush1.msra.mxu0 0.0
  %2467 = vmatprep.subr.mxu0 0.0
  %2468 = vmatpush1.msra.mxu0 0.0
  %2469 = vmatprep.subr.mxu0 0.0
  %2470 = vmatpush1.msra.mxu0 0.0
  %2471 = vmatprep.subr.mxu0 0.0
  %2472 = vmatpush1.msra.mxu0 0.0
  %2473 = vmatprep.subr.mxu0 0.0
  %2474 = vmatpush1.msra.mxu0 0.0
  %2475 = vmatprep.subr.mxu0 0.0
  %2476 = vmatpush1.msra.mxu0 0.0
  %2477 = vmatprep.subr.mxu0 0.0
  %2478 = vmatpush1.msra.mxu0 0.0
  %2479 = vmatprep.subr.mxu0 0.0
  %2480 = vmatpush1.msra.mxu0 0.0
  %2481 = vmatprep.mubr.f32.mxu0 0.0
  %2482 = vmatmul.mubr.f32.gmra.mrb[0].mxu0 %v2412
  %v2483 = vpop.f32.mrb[0].mxu0
  %v2484 = vadd.f32 %v2409, %v2483
  %v2485 = vpop.f32.mrb[0].mxu0
  %2486 = vmatprep.mubr.f32.mxu0 0.0
  %2487 = vmatmul.mubr.f32.gmra.mrb[0].mxu0 %v2415
  %v2488 = vpop.f32.mrb[0].mxu0
  %v2489 = vadd.f32 %v2409, %v2488
  %v2490 = vpop.f32.mrb[0].mxu0
  %2491 = vdwg.mxu0
  %v2492 = vadd.f32 %v2484, %v111
  %v2493 = vadd.f32 %v2489, %v112
  %v2494 = vld [vmem:[%s8] sm:$0x1]
  %v2495 = vld [vmem:[%s9] sm:$0x1]
  %v2496 = vsel %vm69, %v2492, 0.0
  %2497 = vadd.xlane.f32.xlu0 %v2496
  %v2498 = vpop.xlane.xlu0 %2497
  %v2499 = vsel %vm69, %v2493, 0.0
  %2500 = vadd.xlane.f32.xlu0 %v2499
  %v2501 = vpop.xlane.xlu0 %2500
  %v2502 = vmul.f32 %v2498, %v76
  %v2503 = vmul.f32 %v2501, %v76
  %v2504 = vsub.f32 %v2492, %v2502
  %v2505 = vsub.f32 %v2493, %v2503
  %v2506 = vmul.f32 %v2504, %v2504
  %v2507 = vmul.f32 %v2505, %v2505
  %v2508 = vsel %vm69, %v2506, 0.0
  %2509 = vadd.xlane.f32.xlu0 %v2508
  %v2510 = vpop.xlane.xlu0 %2509
  %v2511 = vsel %vm69, %v2507, 0.0
  %2512 = vadd.xlane.f32.xlu0 %v2511
  %v2513 = vpop.xlane.xlu0 %2512
  %v2514 = vmul.f32 %v2510, %v76
  %v2515 = vmul.f32 %v2513, %v76
  %v2516 = vadd.f32 %v2514, 1e-12
  %v2517 = vadd.f32 %v2515, 1e-12
  %v2518 = vrsqrt.pop %v2516
  %v2519 = vrsqrt.pop %v2517
  %v2520 = vmul.f32 %v2504, %v2518
  %v2521 = vmul.f32 %v2505, %v2519
  %v2523 = vlaneseq
  %v2524 = vshrl.u32 %v2523, 7
  %v2525 = vsub.s32 0, %v2524
  %v2526 = vrot.slane %v2494, %v2525
  %v2528 = vmul.f32 %v2520, %v2526
  %v2529 = vmul.f32 %v2521, %v2526
  %v2531 = vlaneseq
  %v2532 = vshrl.u32 %v2531, 7
  %v2533 = vsub.s32 0, %v2532
  %v2534 = vrot.slane %v2495, %v2533
  %v2536 = vadd.f32 %v2528, %v2534
  %v2537 = vadd.f32 %v2529, %v2534
  %v2538 = vld [vmem:[%s10] sm:$0xff]
  %v2539 = vld [vmem:[%s10 + $0x8] sm:$0xff]
  %v2540 = vld [vmem:[%s10 + $0x10] sm:$0xff]
  %v2541 = vld [vmem:[%s10 + $0x18] sm:$0xff]
  %v2542 = vld [vmem:[%s10 + $0x20] sm:$0xff]
  %v2543 = vld [vmem:[%s10 + $0x28] sm:$0xff]
  %v2544 = vld [vmem:[%s10 + $0x30] sm:$0xff]
  %v2545 = vld [vmem:[%s10 + $0x38] sm:$0xff]
  %v2546 = vld [vmem:[%s10 + $0x40] sm:$0xff]
  %v2547 = vld [vmem:[%s10 + $0x48] sm:$0xff]
  %v2548 = vld [vmem:[%s10 + $0x50] sm:$0xff]
  %v2549 = vld [vmem:[%s10 + $0x58] sm:$0xff]
  %v2550 = vld [vmem:[%s10 + $0x60] sm:$0xff]
  %v2551 = vld [vmem:[%s10 + $0x68] sm:$0xff]
  %v2552 = vld [vmem:[%s10 + $0x70] sm:$0xff]
  %v2553 = vld [vmem:[%s10 + $0x78] sm:$0xff]
  %v2554 = vld [vmem:[%s10 + $0x80] sm:$0xff]
  %v2555 = vld [vmem:[%s10 + $0x88] sm:$0xff]
  %v2556 = vld [vmem:[%s10 + $0x90] sm:$0xff]
  %v2557 = vld [vmem:[%s10 + $0x98] sm:$0xff]
  %v2558 = vld [vmem:[%s10 + $0xa0] sm:$0xff]
  %v2559 = vld [vmem:[%s10 + $0xa8] sm:$0xff]
  %v2560 = vld [vmem:[%s10 + $0xb0] sm:$0xff]
  %v2561 = vld [vmem:[%s10 + $0xb8] sm:$0xff]
  %v2562 = vld [vmem:[%s10 + $0xc0] sm:$0xff]
  %v2563 = vld [vmem:[%s10 + $0xc8] sm:$0xff]
  %v2564 = vld [vmem:[%s10 + $0xd0] sm:$0xff]
  %v2565 = vld [vmem:[%s10 + $0xd8] sm:$0xff]
  %v2566 = vld [vmem:[%s10 + $0xe0] sm:$0xff]
  %v2567 = vld [vmem:[%s10 + $0xe8] sm:$0xff]
  %v2568 = vld [vmem:[%s10 + $0xf0] sm:$0xff]
  %v2569 = vld [vmem:[%s10 + $0xf8] sm:$0xff]
  %v2570 = vld [vmem:[%s10 + $0x100] sm:$0xff]
  %v2571 = vld [vmem:[%s10 + $0x108] sm:$0xff]
  %v2572 = vld [vmem:[%s10 + $0x110] sm:$0xff]
  %v2573 = vld [vmem:[%s10 + $0x118] sm:$0xff]
  %v2574 = vld [vmem:[%s11] sm:$0x7]
  %v2576 = vlaneseq
  %v2577 = vshrl.u32 %v2576, 7
  %v2578 = vsub.s32 0, %v2577
  %v2579 = vrot.slane %v2574, %v2578
  %v2580 = vlaneseq
  %v2581 = vshrl.u32 %v2580, 7
  %v2582 = vsub.s32 1, %v2581
  %v2583 = vrot.slane %v2574, %v2582
  %v2584 = vlaneseq
  %v2585 = vshrl.u32 %v2584, 7
  %v2586 = vsub.s32 2, %v2585
  %v2587 = vrot.slane %v2574, %v2586
  %v2592 = vsel %vm69, %v2536, 0
  %v2595 = vsel %vm69, %v2537, 0
  %2597 = vmatprep.subr.mxu0 %v2539
  %2598 = vmatpush1.msra.mxu0 %v2538
  %2599 = vmatprep.subr.mxu0 %v2542
  %2600 = vmatpush1.msra.mxu0 %v2541
  %2601 = vmatprep.subr.mxu0 %v2545
  %2602 = vmatpush1.msra.mxu0 %v2544
  %2603 = vmatprep.subr.mxu0 %v2548
  %2604 = vmatpush1.msra.mxu0 %v2547
  %2605 = vmatprep.subr.mxu0 %v2551
  %2606 = vmatpush1.msra.mxu0 %v2550
  %2607 = vmatprep.subr.mxu0 %v2554
  %2608 = vmatpush1.msra.mxu0 %v2553
  %2609 = vmatprep.subr.mxu0 %v2557
  %2610 = vmatpush1.msra.mxu0 %v2556
  %2611 = vmatprep.subr.mxu0 %v2560
  %2612 = vmatpush1.msra.mxu0 %v2559
  %2613 = vmatprep.subr.mxu0 %v2563
  %2614 = vmatpush1.msra.mxu0 %v2562
  %2615 = vmatprep.subr.mxu0 %v2566
  %2616 = vmatpush1.msra.mxu0 %v2565
  %2617 = vmatprep.subr.mxu0 %v2569
  %2618 = vmatpush1.msra.mxu0 %v2568
  %2619 = vmatprep.subr.mxu0 %v2572
  %2620 = vmatpush1.msra.mxu0 %v2571
  %2621 = vmatprep.subr.mxu0 0.0
  %2622 = vmatpush1.msra.mxu0 0.0
  %2623 = vmatprep.subr.mxu0 0.0
  %2624 = vmatpush1.msra.mxu0 0.0
  %2625 = vmatprep.subr.mxu0 0.0
  %2626 = vmatpush1.msra.mxu0 0.0
  %2627 = vmatprep.subr.mxu0 0.0
  %2628 = vmatpush1.msra.mxu0 0.0
  %2629 = vmatprep.subr.mxu0 0.0
  %2630 = vmatpush1.msra.mxu0 0.0
  %2631 = vmatprep.subr.mxu0 0.0
  %2632 = vmatpush1.msra.mxu0 0.0
  %2633 = vmatprep.subr.mxu0 0.0
  %2634 = vmatpush1.msra.mxu0 0.0
  %2635 = vmatprep.subr.mxu0 0.0
  %2636 = vmatpush1.msra.mxu0 0.0
  %2637 = vmatprep.subr.mxu0 0.0
  %2638 = vmatpush1.msra.mxu0 0.0
  %2639 = vmatprep.subr.mxu0 0.0
  %2640 = vmatpush1.msra.mxu0 0.0
  %2641 = vmatprep.subr.mxu0 0.0
  %2642 = vmatpush1.msra.mxu0 0.0
  %2643 = vmatprep.subr.mxu0 0.0
  %2644 = vmatpush1.msra.mxu0 0.0
  %2645 = vmatprep.subr.mxu0 0.0
  %2646 = vmatpush1.msra.mxu0 0.0
  %2647 = vmatprep.subr.mxu0 0.0
  %2648 = vmatpush1.msra.mxu0 0.0
  %2649 = vmatprep.subr.mxu0 0.0
  %2650 = vmatpush1.msra.mxu0 0.0
  %2651 = vmatprep.subr.mxu0 0.0
  %2652 = vmatpush1.msra.mxu0 0.0
  %2653 = vmatprep.subr.mxu0 0.0
  %2654 = vmatpush1.msra.mxu0 0.0
  %2655 = vmatprep.subr.mxu0 0.0
  %2656 = vmatpush1.msra.mxu0 0.0
  %2657 = vmatprep.subr.mxu0 0.0
  %2658 = vmatpush1.msra.mxu0 0.0
  %2659 = vmatprep.subr.mxu0 0.0
  %2660 = vmatpush1.msra.mxu0 0.0
  %2661 = vmatprep.mubr.f32.mxu0 0.0
  %2662 = vmatmul.mubr.f32.gmra.mrb[0].mxu0 %v2592
  %v2663 = vpop.f32.mrb[0].mxu0
  %v2664 = vadd.f32 %v2579, %v2663
  %v2665 = vpop.f32.mrb[0].mxu0
  %v2666 = vadd.f32 %v2583, %v2665
  %2667 = vmatprep.mubr.f32.mxu0 0.0
  %2668 = vmatmul.mubr.f32.gmra.mrb[0].mxu0 %v2595
  %v2669 = vpop.f32.mrb[0].mxu0
  %v2670 = vadd.f32 %v2579, %v2669
  %v2671 = vpop.f32.mrb[0].mxu0
  %v2672 = vadd.f32 %v2583, %v2671
  %2673 = vdwg.mxu0
  %2674 = vmatprep.subr.mxu0 0.0
  %2675 = vmatpush1.msra.mxu0 %v2540
  %2676 = vmatprep.subr.mxu0 0.0
  %2677 = vmatpush1.msra.mxu0 %v2543
  %2678 = vmatprep.subr.mxu0 0.0
  %2679 = vmatpush1.msra.mxu0 %v2546
  %2680 = vmatprep.subr.mxu0 0.0
  %2681 = vmatpush1.msra.mxu0 %v2549
  %2682 = vmatprep.subr.mxu0 0.0
  %2683 = vmatpush1.msra.mxu0 %v2552
  %2684 = vmatprep.subr.mxu0 0.0
  %2685 = vmatpush1.msra.mxu0 %v2555
  %2686 = vmatprep.subr.mxu0 0.0
  %2687 = vmatpush1.msra.mxu0 %v2558
  %2688 = vmatprep.subr.mxu0 0.0
  %2689 = vmatpush1.msra.mxu0 %v2561
  %2690 = vmatprep.subr.mxu0 0.0
  %2691 = vmatpush1.msra.mxu0 %v2564
  %2692 = vmatprep.subr.mxu0 0.0
  %2693 = vmatpush1.msra.mxu0 %v2567
  %2694 = vmatprep.subr.mxu0 0.0
  %2695 = vmatpush1.msra.mxu0 %v2570
  %2696 = vmatprep.subr.mxu0 0.0
  %2697 = vmatpush1.msra.mxu0 %v2573
  %2698 = vmatprep.subr.mxu0 0.0
  %2699 = vmatpush1.msra.mxu0 0.0
  %2700 = vmatprep.subr.mxu0 0.0
  %2701 = vmatpush1.msra.mxu0 0.0
  %2702 = vmatprep.subr.mxu0 0.0
  %2703 = vmatpush1.msra.mxu0 0.0
  %2704 = vmatprep.subr.mxu0 0.0
  %2705 = vmatpush1.msra.mxu0 0.0
  %2706 = vmatprep.subr.mxu0 0.0
  %2707 = vmatpush1.msra.mxu0 0.0
  %2708 = vmatprep.subr.mxu0 0.0
  %2709 = vmatpush1.msra.mxu0 0.0
  %2710 = vmatprep.subr.mxu0 0.0
  %2711 = vmatpush1.msra.mxu0 0.0
  %2712 = vmatprep.subr.mxu0 0.0
  %2713 = vmatpush1.msra.mxu0 0.0
  %2714 = vmatprep.subr.mxu0 0.0
  %2715 = vmatpush1.msra.mxu0 0.0
  %2716 = vmatprep.subr.mxu0 0.0
  %2717 = vmatpush1.msra.mxu0 0.0
  %2718 = vmatprep.subr.mxu0 0.0
  %2719 = vmatpush1.msra.mxu0 0.0
  %2720 = vmatprep.subr.mxu0 0.0
  %2721 = vmatpush1.msra.mxu0 0.0
  %2722 = vmatprep.subr.mxu0 0.0
  %2723 = vmatpush1.msra.mxu0 0.0
  %2724 = vmatprep.subr.mxu0 0.0
  %2725 = vmatpush1.msra.mxu0 0.0
  %2726 = vmatprep.subr.mxu0 0.0
  %2727 = vmatpush1.msra.mxu0 0.0
  %2728 = vmatprep.subr.mxu0 0.0
  %2729 = vmatpush1.msra.mxu0 0.0
  %2730 = vmatprep.subr.mxu0 0.0
  %2731 = vmatpush1.msra.mxu0 0.0
  %2732 = vmatprep.subr.mxu0 0.0
  %2733 = vmatpush1.msra.mxu0 0.0
  %2734 = vmatprep.subr.mxu0 0.0
  %2735 = vmatpush1.msra.mxu0 0.0
  %2736 = vmatprep.subr.mxu0 0.0
  %2737 = vmatpush1.msra.mxu0 0.0
  %2738 = vmatprep.mubr.f32.mxu0 0.0
  %2739 = vmatmul.mubr.f32.gmra.mrb[0].mxu0 %v2592
  %v2740 = vpop.f32.mrb[0].mxu0
  %v2741 = vadd.f32 %v2587, %v2740
  %v2742 = vpop.f32.mrb[0].mxu0
  %2743 = vmatprep.mubr.f32.mxu0 0.0
  %2744 = vmatmul.mubr.f32.gmra.mrb[0].mxu0 %v2595
  %v2745 = vpop.f32.mrb[0].mxu0
  %v2746 = vadd.f32 %v2587, %v2745
  %v2747 = vpop.f32.mrb[0].mxu0
  %2748 = vdwg.mxu0
  %v2749 = vmul.f32 %v2664, 0.5
  %v2750 = vmul.f32 %v2666, 0.5
  %v2751 = vmul.f32 %v2741, 0.5
  %v2752 = vmul.f32 %v2670, 0.5
  %v2753 = vmul.f32 %v2672, 0.5
  %v2754 = vmul.f32 %v2746, 0.5
  %v2755 = vmul.f32 %v2664, 0.70710677
  %v2756 = vmul.f32 %v2666, 0.70710677
  %v2757 = vmul.f32 %v2741, 0.70710677
  %v2758 = vmul.f32 %v2670, 0.70710677
  %v2759 = vmul.f32 %v2672, 0.70710677
  %v2760 = vmul.f32 %v2746, 0.70710677
  %v2761 = verf.f32.pop %v2755
  %v2762 = verf.f32.pop %v2756
  %v2763 = verf.f32.pop %v2757
  %v2764 = verf.f32.pop %v2758
  %v2765 = verf.f32.pop %v2759
  %v2766 = verf.f32.pop %v2760
  %v2767 = vadd.f32 %v2761, 1.0
  %v2768 = vadd.f32 %v2762, 1.0
  %v2769 = vadd.f32 %v2763, 1.0
  %v2770 = vadd.f32 %v2764, 1.0
  %v2771 = vadd.f32 %v2765, 1.0
  %v2772 = vadd.f32 %v2766, 1.0
  %v2773 = vmul.f32 %v2749, %v2767
  %v2774 = vmul.f32 %v2750, %v2768
  %v2775 = vmul.f32 %v2751, %v2769
  %v2776 = vmul.f32 %v2752, %v2770
  %v2777 = vmul.f32 %v2753, %v2771
  %v2778 = vmul.f32 %v2754, %v2772
  %v2779 = vld [vmem:[%s12] sm:$0xff]
  %v2780 = vld [vmem:[%s12 + $0x8] sm:$0xff]
  %v2781 = vld [vmem:[%s12 + $0x10] sm:$0xff]
  %v2782 = vld [vmem:[%s12 + $0x18] sm:$0xff]
  %v2783 = vld [vmem:[%s12 + $0x20] sm:$0xff]
  %v2784 = vld [vmem:[%s12 + $0x28] sm:$0xff]
  %v2785 = vld [vmem:[%s12 + $0x30] sm:$0xff]
  %v2786 = vld [vmem:[%s12 + $0x38] sm:$0xff]
  %v2787 = vld [vmem:[%s12 + $0x40] sm:$0xff]
  %v2788 = vld [vmem:[%s12 + $0x48] sm:$0xff]
  %v2789 = vld [vmem:[%s12 + $0x50] sm:$0xff]
  %v2790 = vld [vmem:[%s12 + $0x58] sm:$0xff]
  %v2791 = vld [vmem:[%s12 + $0x60] sm:$0xff]
  %v2792 = vld [vmem:[%s12 + $0x68] sm:$0xff]
  %v2793 = vld [vmem:[%s12 + $0x70] sm:$0xff]
  %v2794 = vld [vmem:[%s12 + $0x78] sm:$0xff]
  %v2795 = vld [vmem:[%s12 + $0x80] sm:$0xff]
  %v2796 = vld [vmem:[%s12 + $0x88] sm:$0xff]
  %v2797 = vld [vmem:[%s12 + $0x90] sm:$0xff]
  %v2798 = vld [vmem:[%s12 + $0x98] sm:$0xff]
  %v2799 = vld [vmem:[%s12 + $0xa0] sm:$0xff]
  %v2800 = vld [vmem:[%s12 + $0xa8] sm:$0xff]
  %v2801 = vld [vmem:[%s12 + $0xb0] sm:$0xff]
  %v2802 = vld [vmem:[%s12 + $0xb8] sm:$0xff]
  %v2803 = vld [vmem:[%s12 + $0xc0] sm:$0xff]
  %v2804 = vld [vmem:[%s12 + $0xc8] sm:$0xff]
  %v2805 = vld [vmem:[%s12 + $0xd0] sm:$0xff]
  %v2806 = vld [vmem:[%s12 + $0xd8] sm:$0xff]
  %v2807 = vld [vmem:[%s12 + $0xe0] sm:$0xff]
  %v2808 = vld [vmem:[%s12 + $0xe8] sm:$0xff]
  %v2809 = vld [vmem:[%s12 + $0xf0] sm:$0xff]
  %v2810 = vld [vmem:[%s12 + $0xf8] sm:$0xff]
  %v2811 = vld [vmem:[%s12 + $0x100] sm:$0xff]
  %v2812 = vld [vmem:[%s12 + $0x108] sm:$0xff]
  %v2813 = vld [vmem:[%s12 + $0x110] sm:$0xff]
  %v2814 = vld [vmem:[%s12 + $0x118] sm:$0xff]
  %v2815 = vld [vmem:[%s12 + $0x120] sm:$0xff]
  %v2816 = vld [vmem:[%s12 + $0x128] sm:$0xff]
  %v2817 = vld [vmem:[%s12 + $0x130] sm:$0xff]
  %v2818 = vld [vmem:[%s12 + $0x138] sm:$0xff]
  %v2819 = vld [vmem:[%s12 + $0x140] sm:$0xff]
  %v2820 = vld [vmem:[%s12 + $0x148] sm:$0xff]
  %v2821 = vld [vmem:[%s12 + $0x150] sm:$0xff]
  %v2822 = vld [vmem:[%s12 + $0x158] sm:$0xff]
  %v2823 = vld [vmem:[%s12 + $0x160] sm:$0xff]
  %v2824 = vld [vmem:[%s12 + $0x168] sm:$0xff]
  %v2825 = vld [vmem:[%s12 + $0x170] sm:$0xff]
  %v2826 = vld [vmem:[%s12 + $0x178] sm:$0xff]
  %v2827 = vld [vmem:[%s13] sm:$0x1]
  %v2829 = vlaneseq
  %v2830 = vshrl.u32 %v2829, 7
  %v2831 = vsub.s32 0, %v2830
  %v2832 = vrot.slane %v2827, %v2831
  %2834 = vmatprep.subr.mxu0 0.0
  %2835 = vmatpush1.msra.mxu0 %v2779
  %2836 = vmatprep.subr.mxu0 0.0
  %2837 = vmatpush1.msra.mxu0 %v2780
  %2838 = vmatprep.subr.mxu0 0.0
  %2839 = vmatpush1.msra.mxu0 %v2781
  %2840 = vmatprep.subr.mxu0 0.0
  %2841 = vmatpush1.msra.mxu0 %v2782
  %2842 = vmatprep.subr.mxu0 0.0
  %2843 = vmatpush1.msra.mxu0 %v2783
  %2844 = vmatprep.subr.mxu0 0.0
  %2845 = vmatpush1.msra.mxu0 %v2784
  %2846 = vmatprep.subr.mxu0 0.0
  %2847 = vmatpush1.msra.mxu0 %v2785
  %2848 = vmatprep.subr.mxu0 0.0
  %2849 = vmatpush1.msra.mxu0 %v2786
  %2850 = vmatprep.subr.mxu0 0.0
  %2851 = vmatpush1.msra.mxu0 %v2787
  %2852 = vmatprep.subr.mxu0 0.0
  %2853 = vmatpush1.msra.mxu0 %v2788
  %2854 = vmatprep.subr.mxu0 0.0
  %2855 = vmatpush1.msra.mxu0 %v2789
  %2856 = vmatprep.subr.mxu0 0.0
  %2857 = vmatpush1.msra.mxu0 %v2790
  %2858 = vmatprep.subr.mxu0 0.0
  %2859 = vmatpush1.msra.mxu0 %v2791
  %2860 = vmatprep.subr.mxu0 0.0
  %2861 = vmatpush1.msra.mxu0 %v2792
  %2862 = vmatprep.subr.mxu0 0.0
  %2863 = vmatpush1.msra.mxu0 %v2793
  %2864 = vmatprep.subr.mxu0 0.0
  %2865 = vmatpush1.msra.mxu0 %v2794
  %2866 = vmatprep.subr.mxu0 0.0
  %2867 = vmatpush1.msra.mxu0 %v2795
  %2868 = vmatprep.subr.mxu0 0.0
  %2869 = vmatpush1.msra.mxu0 %v2796
  %2870 = vmatprep.subr.mxu0 0.0
  %2871 = vmatpush1.msra.mxu0 %v2797
  %2872 = vmatprep.subr.mxu0 0.0
  %2873 = vmatpush1.msra.mxu0 %v2798
  %2874 = vmatprep.subr.mxu0 0.0
  %2875 = vmatpush1.msra.mxu0 %v2799
  %2876 = vmatprep.subr.mxu0 0.0
  %2877 = vmatpush1.msra.mxu0 %v2800
  %2878 = vmatprep.subr.mxu0 0.0
  %2879 = vmatpush1.msra.mxu0 %v2801
  %2880 = vmatprep.subr.mxu0 0.0
  %2881 = vmatpush1.msra.mxu0 %v2802
  %2882 = vmatprep.subr.mxu0 0.0
  %2883 = vmatpush1.msra.mxu0 %v2803
  %2884 = vmatprep.subr.mxu0 0.0
  %2885 = vmatpush1.msra.mxu0 %v2804
  %2886 = vmatprep.subr.mxu0 0.0
  %2887 = vmatpush1.msra.mxu0 %v2805
  %2888 = vmatprep.subr.mxu0 0.0
  %2889 = vmatpush1.msra.mxu0 %v2806
  %2890 = vmatprep.subr.mxu0 0.0
  %2891 = vmatpush1.msra.mxu0 %v2807
  %2892 = vmatprep.subr.mxu0 0.0
  %2893 = vmatpush1.msra.mxu0 %v2808
  %2894 = vmatprep.subr.mxu0 0.0
  %2895 = vmatpush1.msra.mxu0 %v2809
  %2896 = vmatprep.subr.mxu0 0.0
  %2897 = vmatpush1.msra.mxu0 %v2810
  %2898 = vmatprep.mubr.f32.mxu0 %v2774
  %2899 = vmatmul.mubr.f32.gmra.mrb[0].mxu0 %v2773
  %v2900 = vpop.f32.mrb[0].mxu0
  %v2901 = vadd.f32 %v2832, %v2900
  %v2902 = vpop.f32.mrb[0].mxu0
  %2903 = vmatprep.mubr.f32.mxu0 %v2777
  %2904 = vmatmul.mubr.f32.gmra.mrb[0].mxu0 %v2776
  %v2905 = vpop.f32.mrb[0].mxu0
  %v2906 = vadd.f32 %v2832, %v2905
  %v2907 = vpop.f32.mrb[0].mxu0
  %2908 = vdwg.mxu0
  %2909 = vmatprep.subr.mxu0 0.0
  %2910 = vmatpush1.msra.mxu0 %v2811
  %2911 = vmatprep.subr.mxu0 0.0
  %2912 = vmatpush1.msra.mxu0 %v2812
  %2913 = vmatprep.subr.mxu0 0.0
  %2914 = vmatpush1.msra.mxu0 %v2813
  %2915 = vmatprep.subr.mxu0 0.0
  %2916 = vmatpush1.msra.mxu0 %v2814
  %2917 = vmatprep.subr.mxu0 0.0
  %2918 = vmatpush1.msra.mxu0 %v2815
  %2919 = vmatprep.subr.mxu0 0.0
  %2920 = vmatpush1.msra.mxu0 %v2816
  %2921 = vmatprep.subr.mxu0 0.0
  %2922 = vmatpush1.msra.mxu0 %v2817
  %2923 = vmatprep.subr.mxu0 0.0
  %2924 = vmatpush1.msra.mxu0 %v2818
  %2925 = vmatprep.subr.mxu0 0.0
  %2926 = vmatpush1.msra.mxu0 %v2819
  %2927 = vmatprep.subr.mxu0 0.0
  %2928 = vmatpush1.msra.mxu0 %v2820
  %2929 = vmatprep.subr.mxu0 0.0
  %2930 = vmatpush1.msra.mxu0 %v2821
  %2931 = vmatprep.subr.mxu0 0.0
  %2932 = vmatpush1.msra.mxu0 %v2822
  %2933 = vmatprep.subr.mxu0 0.0
  %2934 = vmatpush1.msra.mxu0 %v2823
  %2935 = vmatprep.subr.mxu0 0.0
  %2936 = vmatpush1.msra.mxu0 %v2824
  %2937 = vmatprep.subr.mxu0 0.0
  %2938 = vmatpush1.msra.mxu0 %v2825
  %2939 = vmatprep.subr.mxu0 0.0
  %2940 = vmatpush1.msra.mxu0 %v2826
  %2941 = vmatprep.subr.mxu0 0.0
  %2942 = vmatpush1.msra.mxu0 0.0
  %2943 = vmatprep.subr.mxu0 0.0
  %2944 = vmatpush1.msra.mxu0 0.0
  %2945 = vmatprep.subr.mxu0 0.0
  %2946 = vmatpush1.msra.mxu0 0.0
  %2947 = vmatprep.subr.mxu0 0.0
  %2948 = vmatpush1.msra.mxu0 0.0
  %2949 = vmatprep.subr.mxu0 0.0
  %2950 = vmatpush1.msra.mxu0 0.0
  %2951 = vmatprep.subr.mxu0 0.0
  %2952 = vmatpush1.msra.mxu0 0.0
  %2953 = vmatprep.subr.mxu0 0.0
  %2954 = vmatpush1.msra.mxu0 0.0
  %2955 = vmatprep.subr.mxu0 0.0
  %2956 = vmatpush1.msra.mxu0 0.0
  %2957 = vmatprep.subr.mxu0 0.0
  %2958 = vmatpush1.msra.mxu0 0.0
  %2959 = vmatprep.subr.mxu0 0.0
  %2960 = vmatpush1.msra.mxu0 0.0
  %2961 = vmatprep.subr.mxu0 0.0
  %2962 = vmatpush1.msra.mxu0 0.0
  %2963 = vmatprep.subr.mxu0 0.0
  %2964 = vmatpush1.msra.mxu0 0.0
  %2965 = vmatprep.subr.mxu0 0.0
  %2966 = vmatpush1.msra.mxu0 0.0
  %2967 = vmatprep.subr.mxu0 0.0
  %2968 = vmatpush1.msra.mxu0 0.0
  %2969 = vmatprep.subr.mxu0 0.0
  %2970 = vmatpush1.msra.mxu0 0.0
  %2971 = vmatprep.subr.mxu0 0.0
  %2972 = vmatpush1.msra.mxu0 0.0
  %2973 = vmatprep.mubr.f32.mxu0 0.0
  %2974 = vmatmul.mubr.f32.gmra.mrb[0].mxu0 %v2775
  %v2975 = vpop.f32.mrb[0].mxu0
  %v2976 = vadd.f32 %v2901, %v2975
  %v2977 = vpop.f32.mrb[0].mxu0
  %2978 = vmatprep.mubr.f32.mxu0 0.0
  %2979 = vmatmul.mubr.f32.gmra.mrb[0].mxu0 %v2778
  %v2980 = vpop.f32.mrb[0].mxu0
  %v2981 = vadd.f32 %v2906, %v2980
  %v2982 = vpop.f32.mrb[0].mxu0
  %2983 = vdwg.mxu0
  %v2984 = vadd.f32 %v2976, %v2536
  %v2985 = vadd.f32 %v2981, %v2537
  %v2986 = vld [vmem:[%s14] sm:$0x1]
  %v2987 = vld [vmem:[%s15] sm:$0x1]
  %v2988 = vsel %vm69, %v2984, 0.0
  %2989 = vadd.xlane.f32.xlu0 %v2988
  %v2990 = vpop.xlane.xlu0 %2989
  %v2991 = vsel %vm69, %v2985, 0.0
  %2992 = vadd.xlane.f32.xlu0 %v2991
  %v2993 = vpop.xlane.xlu0 %2992
  %v2994 = vmul.f32 %v2990, %v76
  %v2995 = vmul.f32 %v2993, %v76
  %v2996 = vsub.f32 %v2984, %v2994
  %v2997 = vsub.f32 %v2985, %v2995
  %v2998 = vmul.f32 %v2996, %v2996
  %v2999 = vmul.f32 %v2997, %v2997
  %v3000 = vsel %vm69, %v2998, 0.0
  %3001 = vadd.xlane.f32.xlu0 %v3000
  %v3002 = vpop.xlane.xlu0 %3001
  %v3003 = vsel %vm69, %v2999, 0.0
  %3004 = vadd.xlane.f32.xlu0 %v3003
  %v3005 = vpop.xlane.xlu0 %3004
  %v3006 = vmul.f32 %v3002, %v76
  %v3007 = vmul.f32 %v3005, %v76
  %v3008 = vadd.f32 %v3006, 1e-12
  %v3009 = vadd.f32 %v3007, 1e-12
  %v3010 = vrsqrt.pop %v3008
  %v3011 = vrsqrt.pop %v3009
  %v3012 = vmul.f32 %v2996, %v3010
  %v3013 = vmul.f32 %v2997, %v3011
  %v3015 = vlaneseq
  %v3016 = vshrl.u32 %v3015, 7
  %v3017 = vsub.s32 0, %v3016
  %v3018 = vrot.slane %v2986, %v3017
  %v3020 = vmul.f32 %v3012, %v3018
  %v3021 = vmul.f32 %v3013, %v3018
  %v3023 = vlaneseq
  %v3024 = vshrl.u32 %v3023, 7
  %v3025 = vsub.s32 0, %v3024
  %v3026 = vrot.slane %v2987, %v3025
  %v3028 = vadd.f32 %v3020, %v3026
  %v3029 = vadd.f32 %v3021, %v3026
  %v3030 = vld [vmem:[%s16] sm:$0xff]
  %v3031 = vld [vmem:[%s16 + $0x8] sm:$0xff]
  %v3032 = vld [vmem:[%s16 + $0x10] sm:$0xff]
  %v3033 = vld [vmem:[%s16 + $0x18] sm:$0xff]
  %v3034 = vld [vmem:[%s16 + $0x20] sm:$0xff]
  %v3035 = vld [vmem:[%s16 + $0x28] sm:$0xff]
  %v3036 = vld [vmem:[%s16 + $0x30] sm:$0xff]
  %v3037 = vld [vmem:[%s16 + $0x38] sm:$0xff]
  %v3038 = vld [vmem:[%s16 + $0x40] sm:$0xff]
  %v3039 = vld [vmem:[%s16 + $0x48] sm:$0xff]
  %v3040 = vld [vmem:[%s16 + $0x50] sm:$0xff]
  %v3041 = vld [vmem:[%s16 + $0x58] sm:$0xff]
  %v3042 = vld [vmem:[%s17] sm:$0x1]
  %v3044 = vlaneseq
  %v3045 = vshrl.u32 %v3044, 7
  %v3046 = vsub.s32 0, %v3045
  %v3047 = vrot.slane %v3042, %v3046
  %v3050 = vsel %vm69, %v3028, 0
  %v3053 = vsel %vm69, %v3029, 0
  %3055 = vmatprep.subr.mxu0 0.0
  %3056 = vmatpush1.msra.mxu0 %v3030
  %3057 = vmatprep.subr.mxu0 0.0
  %3058 = vmatpush1.msra.mxu0 %v3031
  %3059 = vmatprep.subr.mxu0 0.0
  %3060 = vmatpush1.msra.mxu0 %v3032
  %3061 = vmatprep.subr.mxu0 0.0
  %3062 = vmatpush1.msra.mxu0 %v3033
  %3063 = vmatprep.subr.mxu0 0.0
  %3064 = vmatpush1.msra.mxu0 %v3034
  %3065 = vmatprep.subr.mxu0 0.0
  %3066 = vmatpush1.msra.mxu0 %v3035
  %3067 = vmatprep.subr.mxu0 0.0
  %3068 = vmatpush1.msra.mxu0 %v3036
  %3069 = vmatprep.subr.mxu0 0.0
  %3070 = vmatpush1.msra.mxu0 %v3037
  %3071 = vmatprep.subr.mxu0 0.0
  %3072 = vmatpush1.msra.mxu0 %v3038
  %3073 = vmatprep.subr.mxu0 0.0
  %3074 = vmatpush1.msra.mxu0 %v3039
  %3075 = vmatprep.subr.mxu0 0.0
  %3076 = vmatpush1.msra.mxu0 %v3040
  %3077 = vmatprep.subr.mxu0 0.0
  %3078 = vmatpush1.msra.mxu0 %v3041
  %3079 = vmatprep.subr.mxu0 0.0
  %3080 = vmatpush1.msra.mxu0 0.0
  %3081 = vmatprep.subr.mxu0 0.0
  %3082 = vmatpush1.msra.mxu0 0.0
  %3083 = vmatprep.subr.mxu0 0.0
  %3084 = vmatpush1.msra.mxu0 0.0
  %3085 = vmatprep.subr.mxu0 0.0
  %3086 = vmatpush1.msra.mxu0 0.0
  %3087 = vmatprep.subr.mxu0 0.0
  %3088 = vmatpush1.msra.mxu0 0.0
  %3089 = vmatprep.subr.mxu0 0.0
  %3090 = vmatpush1.msra.mxu0 0.0
  %3091 = vmatprep.subr.mxu0 0.0
  %3092 = vmatpush1.msra.mxu0 0.0
  %3093 = vmatprep.subr.mxu0 0.0
  %3094 = vmatpush1.msra.mxu0 0.0
  %3095 = vmatprep.subr.mxu0 0.0
  %3096 = vmatpush1.msra.mxu0 0.0
  %3097 = vmatprep.subr.mxu0 0.0
  %3098 = vmatpush1.msra.mxu0 0.0
  %3099 = vmatprep.subr.mxu0 0.0
  %3100 = vmatpush1.msra.mxu0 0.0
  %3101 = vmatprep.subr.mxu0 0.0
  %3102 = vmatpush1.msra.mxu0 0.0
  %3103 = vmatprep.subr.mxu0 0.0
  %3104 = vmatpush1.msra.mxu0 0.0
  %3105 = vmatprep.subr.mxu0 0.0
  %3106 = vmatpush1.msra.mxu0 0.0
  %3107 = vmatprep.subr.mxu0 0.0
  %3108 = vmatpush1.msra.mxu0 0.0
  %3109 = vmatprep.subr.mxu0 0.0
  %3110 = vmatpush1.msra.mxu0 0.0
  %3111 = vmatprep.subr.mxu0 0.0
  %3112 = vmatpush1.msra.mxu0 0.0
  %3113 = vmatprep.subr.mxu0 0.0
  %3114 = vmatpush1.msra.mxu0 0.0
  %3115 = vmatprep.subr.mxu0 0.0
  %3116 = vmatpush1.msra.mxu0 0.0
  %3117 = vmatprep.subr.mxu0 0.0
  %3118 = vmatpush1.msra.mxu0 0.0
  %3119 = vmatprep.mubr.f32.mxu0 0.0
  %3120 = vmatmul.mubr.f32.gmra.mrb[0].mxu0 %v3050
  %v3121 = vpop.f32.mrb[0].mxu0
  %v3122 = vadd.f32 %v3047, %v3121
  %v3123 = vpop.f32.mrb[0].mxu0
  %3124 = vmatprep.mubr.f32.mxu0 0.0
  %3125 = vmatmul.mubr.f32.gmra.mrb[0].mxu0 %v3053
  %v3126 = vpop.f32.mrb[0].mxu0
  %v3127 = vadd.f32 %v3047, %v3126
  %v3128 = vpop.f32.mrb[0].mxu0
  %3129 = vdwg.mxu0
  %v3130 = vtanh.pop %v3122
  %v3131 = vtanh.pop %v3127
  %v3132 = vld [vmem:[%s18] sm:$0xff]
  %v3133 = vld [vmem:[%s18 + $0x8] sm:$0xff]
  %v3134 = vld [vmem:[%s18 + $0x10] sm:$0xff]
  %v3135 = vld [vmem:[%s18 + $0x18] sm:$0xff]
  %v3136 = vld [vmem:[%s18 + $0x20] sm:$0xff]
  %v3137 = vld [vmem:[%s18 + $0x28] sm:$0xff]
  %v3138 = vld [vmem:[%s18 + $0x30] sm:$0xff]
  %v3139 = vld [vmem:[%s18 + $0x38] sm:$0xff]
  %v3140 = vld [vmem:[%s18 + $0x40] sm:$0xff]
  %v3141 = vld [vmem:[%s18 + $0x48] sm:$0xff]
  %v3142 = vld [vmem:[%s18 + $0x50] sm:$0xff]
  %v3143 = vld [vmem:[%s18 + $0x58] sm:$0xff]
  %v3144 = vld [vmem:[%s19] sm:$0x1]
  %v3146 = vlaneseq
  %v3147 = vshrl.u32 %v3146, 7
  %v3148 = vsub.s32 0, %v3147
  %v3149 = vrot.slane %v3144, %v3148
  %v3152 = vsel %vm69, %v3130, 0
  %v3155 = vsel %vm69, %v3131, 0
  %3157 = vmatprep.subr.mxu0 0.0
  %3158 = vmatpush1.msra.mxu0 %v3132
  %3159 = vmatprep.subr.mxu0 0.0
  %3160 = vmatpush1.msra.mxu0 %v3133
  %3161 = vmatprep.subr.mxu0 0.0
  %3162 = vmatpush1.msra.mxu0 %v3134
  %3163 = vmatprep.subr.mxu0 0.0
  %3164 = vmatpush1.msra.mxu0 %v3135
  %3165 = vmatprep.subr.mxu0 0.0
  %3166 = vmatpush1.msra.mxu0 %v3136
  %3167 = vmatprep.subr.mxu0 0.0
  %3168 = vmatpush1.msra.mxu0 %v3137
  %3169 = vmatprep.subr.mxu0 0.0
  %3170 = vmatpush1.msra.mxu0 %v3138
  %3171 = vmatprep.subr.mxu0 0.0
  %3172 = vmatpush1.msra.mxu0 %v3139
  %3173 = vmatprep.subr.mxu0 0.0
  %3174 = vmatpush1.msra.mxu0 %v3140
  %3175 = vmatprep.subr.mxu0 0.0
  %3176 = vmatpush1.msra.mxu0 %v3141
  %3177 = vmatprep.subr.mxu0 0.0
  %3178 = vmatpush1.msra.mxu0 %v3142
  %3179 = vmatprep.subr.mxu0 0.0
  %3180 = vmatpush1.msra.mxu0 %v3143
  %3181 = vmatprep.subr.mxu0 0.0
  %3182 = vmatpush1.msra.mxu0 0.0
  %3183 = vmatprep.subr.mxu0 0.0
  %3184 = vmatpush1.msra.mxu0 0.0
  %3185 = vmatprep.subr.mxu0 0.0
  %3186 = vmatpush1.msra.mxu0 0.0
  %3187 = vmatprep.subr.mxu0 0.0
  %3188 = vmatpush1.msra.mxu0 0.0
  %3189 = vmatprep.subr.mxu0 0.0
  %3190 = vmatpush1.msra.mxu0 0.0
  %3191 = vmatprep.subr.mxu0 0.0
  %3192 = vmatpush1.msra.mxu0 0.0
  %3193 = vmatprep.subr.mxu0 0.0
  %3194 = vmatpush1.msra.mxu0 0.0
  %3195 = vmatprep.subr.mxu0 0.0
  %3196 = vmatpush1.msra.mxu0 0.0
  %3197 = vmatprep.subr.mxu0 0.0
  %3198 = vmatpush1.msra.mxu0 0.0
  %3199 = vmatprep.subr.mxu0 0.0
  %3200 = vmatpush1.msra.mxu0 0.0
  %3201 = vmatprep.subr.mxu0 0.0
  %3202 = vmatpush1.msra.mxu0 0.0
  %3203 = vmatprep.subr.mxu0 0.0
  %3204 = vmatpush1.msra.mxu0 0.0
  %3205 = vmatprep.subr.mxu0 0.0
  %3206 = vmatpush1.msra.mxu0 0.0
  %3207 = vmatprep.subr.mxu0 0.0
  %3208 = vmatpush1.msra.mxu0 0.0
  %3209 = vmatprep.subr.mxu0 0.0
  %3210 = vmatpush1.msra.mxu0 0.0
  %3211 = vmatprep.subr.mxu0 0.0
  %3212 = vmatpush1.msra.mxu0 0.0
  %3213 = vmatprep.subr.mxu0 0.0
  %3214 = vmatpush1.msra.mxu0 0.0
  %3215 = vmatprep.subr.mxu0 0.0
  %3216 = vmatpush1.msra.mxu0 0.0
  %3217 = vmatprep.subr.mxu0 0.0
  %3218 = vmatpush1.msra.mxu0 0.0
  %3219 = vmatprep.subr.mxu0 0.0
  %3220 = vmatpush1.msra.mxu0 0.0
  %3221 = vmatprep.mubr.f32.mxu0 0.0
  %3222 = vmatmul.mubr.f32.gmra.mrb[0].mxu0 %v3152
  %v3223 = vpop.f32.mrb[0].mxu0
  %v3224 = vadd.f32 %v3149, %v3223
  %v3225 = vpop.f32.mrb[0].mxu0
  %3226 = vmatprep.mubr.f32.mxu0 0.0
  %3227 = vmatmul.mubr.f32.gmra.mrb[0].mxu0 %v3155
  %v3228 = vpop.f32.mrb[0].mxu0
  %v3229 = vadd.f32 %v3149, %v3228
  %v3230 = vpop.f32.mrb[0].mxu0
  %3231 = vdwg.mxu0
  %3232 = vst [vmem:[%s20] sm:$0xff] %v3224
  %3233 = vst [vmem:[%s20 + $0x8] sm:$0xff] %v3229
  // Predicated region
  $region82: #{vuln_classifier_light_forward.1} parent=0 // pred_check
    _
  $region83: #{vuln_classifier_light_forward.1} parent=0 // pred_check_branch
    %3235 = sbr.rel (0) target = $region85
  $region84: #{vuln_classifier_light_forward.1} parent=0 // pred_region
    _
  $region85: #{vuln_classifier_light_forward.1} parent=0 // pred_fallthru
    _
  // Predicated region
  $region86: #{vuln_classifier_light_forward.1} parent=0 // pred_check
    _
  $region87: #{vuln_classifier_light_forward.1} parent=0 // pred_check_branch
    %3237 = sbr.rel (0) target = $region89
  $region88: #{vuln_classifier_light_forward.1} parent=0 // pred_region
    _
  $region89: #{vuln_classifier_light_forward.1} parent=0 // pred_fallthru
    _

</llo_original>
